<compile_context>
chip_gen: v6e
topology: v6e:2x2x1
jax: 0.10.0
libtpu: 0.0.40
codegen_flags: <defaults>
</compile_context>

<pallas_src>
import functools

import jax
import jax.numpy as jnp
import numpy as np
from jax.experimental import pallas as pl
from jax.experimental.pallas import tpu as pltpu

EPS = 1e-5  # nn.BatchNorm2d default eps


# ------------------------------ Pallas kernel ------------------------------- #

def _conv3x3(src_ref, w_ref, *, Wp, fpad, rows_p):
    """3x3 'same' conv on the spatially zero-padded flat layout.

    src_ref : (Cp, fpad + rows_p + fpad)  activation, pixels on the lane axis
    w_ref   : (Cp, 9*Cp)                  tap-major weights, [cout, k*Cp + cin]

    Returns (Cp, rows_p) f32.  Implemented as 9 accumulating MXU matmuls on
    static shifted slices -- no (9*Cin, rows) patch matrix is materialized.
    """
    cp = w_ref.shape[0]
    acc = None
    k = 0
    for dh in (-1, 0, 1):
        for dw in (-1, 0, 1):
            start = fpad + dh * Wp + dw                       # static offset
            tap = src_ref[:, start:start + rows_p]            # (Cp, rows_p)
            wk = w_ref[:, k * cp:(k + 1) * cp]                # (Cp, Cp)
            part = jnp.dot(wk, tap, preferred_element_type=jnp.float32)
            acc = part if acc is None else acc + part
            k += 1
    return acc


def _batchnorm(h, mask, g_ref, be_ref, inv_count):
    """Training-mode BatchNorm over valid pixels (two-pass mean / variance)."""
    mean = jnp.sum(h * mask, axis=1, keepdims=True) * inv_count    # (Cp, 1)
    c = h - mean
    var = jnp.sum((c * c) * mask, axis=1, keepdims=True) * inv_count
    scale = g_ref[...] * jax.lax.rsqrt(var + EPS)
    return c * scale + be_ref[...]


def _fused_residual_kernel(x_ref, mask_ref, w1_ref, g1_ref, be1_ref,
                           w2_ref, g2_ref, be2_ref, o_ref,
                           xpad_ref, ypad_ref, *, N, H, W, fpad):
    Hp, Wp = H + 2, W + 2
    rows = N * H * W
    rows_p = N * Hp * Wp
    cin = x_ref.shape[0]          # true channel count
    cp = o_ref.shape[0]           # sublane-padded channel count
    inv_count = 1.0 / rows

    # ---- All padding folded into the kernel: build the channel-padded,
    # ---- spatially zero-padded input in VMEM from the unpadded input. -------
    xpad_ref[...] = jnp.zeros_like(xpad_ref)   # halo rows/cols + pad channels
    for n in range(N):
        for h in range(H):
            src = n * H * W + h * W
            dst = fpad + n * Hp * Wp + (h + 1) * Wp + 1
            xpad_ref[:cin, dst:dst + W] = x_ref[:, src:src + W]
    # TODO(synk): for production N*H these per-row copies should become a
    # strided DMA / row-tiled grid instead of N*H small masked stores.

    mask = mask_ref[...]                                      # (1, rows_p)

    # conv1 -> bn1 -> relu  (conv bias dropped: cancelled by BN mean subtract)
    h1 = _conv3x3(xpad_ref, w1_ref, Wp=Wp, fpad=fpad, rows_p=rows_p)
    y = jnp.maximum(_batchnorm(h1, mask, g1_ref, be1_ref, inv_count), 0.0) * mask

    # Intermediate stays in VMEM: zero ONLY its flat halo, write the interior.
    ypad_ref[:, :fpad] = jnp.zeros((cp, fpad), jnp.float32)
    ypad_ref[:, fpad + rows_p:] = jnp.zeros((cp, fpad), jnp.float32)
    ypad_ref[:, fpad:fpad + rows_p] = y

    # conv2 -> bn2 -> residual add -> relu
    h2 = _conv3x3(ypad_ref, w2_ref, Wp=Wp, fpad=fpad, rows_p=rows_p)
    z = _batchnorm(h2, mask, g2_ref, be2_ref, inv_count)
    x_resid = xpad_ref[:, fpad:fpad + rows_p]
    o_ref[...] = jnp.maximum(x_resid + z, 0.0)


# ------------------------------- JAX wrapper -------------------------------- #

@jax.jit
def residual_block(x_nchw, params):
    x = x_nchw.astype(jnp.float32)
    N, C, H, W = x.shape
    Hp, Wp = H + 2, W + 2
    rows = N * H * W
    rows_p = N * Hp * Wp
    cp = ((C + 7) // 8) * 8                       # sublane-aligned channels
    fpad = ((Wp + 1 + 127) // 128) * 128          # lane-aligned flat halo

    # Only layout change outside the kernel: channels-major flat view.
    x2d = jnp.transpose(x, (1, 0, 2, 3)).reshape(C, rows)

    # Interior mask of the spatially padded layout (1.0 at real pixels).
    m = np.zeros((N, Hp, Wp), np.float32)
    m[:, 1:H + 1, 1:W + 1] = 1.0
    mask = jnp.asarray(m.reshape(1, rows_p))

    def prep_w(w):   # (3,3,C,C) -> (Cp, 9*Cp) tap-major, zero-padded channels
        wpad = jnp.pad(w.astype(jnp.float32),
                       ((0, 0), (0, 0), (0, cp - C), (0, cp - C)))
        return jnp.transpose(wpad, (3, 0, 1, 2)).reshape(cp, 9 * cp)

    def prep_v(v):   # (C,) -> (Cp, 1) column (zero for padded channels)
        return jnp.pad(v.astype(jnp.float32), (0, cp - C)).reshape(cp, 1)

    flops = 2 * (2 * rows_p * 9 * cp * cp)                    # two convs
    bytes_accessed = 4 * (x2d.size + mask.size + 2 * (cp * 9 * cp) + 4 * cp
                          + cp * rows_p)

    kernel = functools.partial(_fused_residual_kernel, N=N, H=H, W=W, fpad=fpad)
    vmem = pl.BlockSpec(memory_space=pltpu.MemorySpace.VMEM)
    out_p = pl.pallas_call(
        kernel,
        out_shape=jax.ShapeDtypeStruct((cp, rows_p), jnp.float32),
        in_specs=[vmem] * 8,
        out_specs=vmem,
        scratch_shapes=[pltpu.VMEM((cp, rows_p + 2 * fpad), jnp.float32),  # xpad
                        pltpu.VMEM((cp, rows_p + 2 * fpad), jnp.float32)], # ypad
        cost_estimate=pl.CostEstimate(flops=flops, transcendentals=2 * cp,
                                      bytes_accessed=bytes_accessed),
    )(x2d, mask,
      prep_w(params["w1"]), prep_v(params["g1"]), prep_v(params["be1"]),
      prep_w(params["w2"]), prep_v(params["g2"]), prep_v(params["be2"]))
    # TODO(synk): for large N*H*W this single-program kernel should become a
    # row-tiled grid (per-tile conv, cross-tile BN sum/sumsq accumulation plus
    # a normalize pass, 'parallel' row axis for v7x megacore, tiles sized for
    # v7x's 64 MiB VMEM); at the tested shape everything fits in VMEM and the
    # fully-fused single pass minimizes HBM traffic.

    out = out_p.reshape(cp, N, Hp, Wp)[:C, :, 1:H + 1, 1:W + 1]
    return jnp.transpose(out, (1, 0, 2, 3))                  # back to NCHW


# --------------------------- deterministic params --------------------------- #

def init_params(key, channels):
    k1, k2, kb1, kb2 = jax.random.split(key, 4)
    std = 1.0 / np.sqrt(channels * 9)
    return dict(
        # b1/b2 exist for reference fidelity only; the Pallas kernel drops them
        # (exactly cancelled by training-mode BatchNorm mean subtraction).
        w1=jax.random.normal(k1, (3, 3, channels, channels), jnp.float32) * std,
        b1=jax.random.normal(kb1, (channels,), jnp.float32) * std,
        g1=jnp.ones((channels,), jnp.float32),
        be1=jnp.zeros((channels,), jnp.float32),
        w2=jax.random.normal(k2, (3, 3, channels, channels), jnp.float32) * std,
        b2=jax.random.normal(kb2, (channels,), jnp.float32) * std,
        g2=jnp.ones((channels,), jnp.float32),
        be2=jnp.zeros((channels,), jnp.float32),
    )
    # TODO(synk): BatchNorm running-stat updates (a training-time side effect)
    # are not modeled; they do not affect the training-mode forward output.


# ----------------------------- pure-JAX reference --------------------------- #

def reference(x_nchw, params):
    def conv(x, w, b):  # x: NCHW, w: (3,3,Cin,Cout)
        y = jax.lax.conv_general_dilated(
            x, w, window_strides=(1, 1), padding="SAME",
            dimension_numbers=("NCHW", "HWIO", "NCHW"),
            precision=jax.lax.Precision.HIGHEST)
        return y + b[None, :, None, None]

    def bn(y, g, be):
        mean = jnp.mean(y, axis=(0, 2, 3), keepdims=True)
        var = jnp.mean((y - mean) ** 2, axis=(0, 2, 3), keepdims=True)
        yn = (y - mean) * jax.lax.rsqrt(var + EPS)
        return yn * g[None, :, None, None] + be[None, :, None, None]

    h = jax.nn.relu(bn(conv(x_nchw, params["w1"], params["b1"]),
                       params["g1"], params["be1"]))
    h = bn(conv(h, params["w2"], params["b2"]), params["g2"], params["be2"])
    return jax.nn.relu(x_nchw + h)


if __name__ == "__main__":
    key = jax.random.PRNGKey(0)
    kx, kp = jax.random.split(key)
    N, C, H, W = 2, 4, 16, 16
    x = jax.random.normal(kx, (N, C, H, W), jnp.float32)
    params = init_params(kp, C)

    out = residual_block(x, params)
    out = jax.block_until_ready(out)

    ref = reference(x, params)
    np.testing.assert_allclose(np.asarray(out), np.asarray(ref),
                               rtol=1e-3, atol=1e-3)
    print("KERNEL_OK")
</pallas_src>

<mosaic_0001>
module attributes {stable_mosaic.version = 11 : i64} {
  func.func @_fused_residual_kernel(%arg0: memref<4x512xf32, #tpu.memory_space<vmem>>, %arg1: memref<1x648xf32, #tpu.memory_space<vmem>>, %arg2: memref<8x72xf32, #tpu.memory_space<vmem>>, %arg3: memref<8x1xf32, #tpu.memory_space<vmem>>, %arg4: memref<8x1xf32, #tpu.memory_space<vmem>>, %arg5: memref<8x72xf32, #tpu.memory_space<vmem>>, %arg6: memref<8x1xf32, #tpu.memory_space<vmem>>, %arg7: memref<8x1xf32, #tpu.memory_space<vmem>>, %arg8: memref<8x648xf32, #tpu.memory_space<vmem>>, %arg9: memref<8x904xf32, #tpu.memory_space<vmem>>, %arg10: memref<8x904xf32, #tpu.memory_space<vmem>>) attributes {dimension_semantics = [], scalar_prefetch = 0 : i64, scratch_operands = 2 : i64, tpu.core_type = #tpu.core_type<tc>} {
    %cst = arith.constant 0.000000e+00 : f32
    %0 = vector.broadcast %cst : f32 to vector<8x904xf32>
    %c0 = arith.constant 0 : index
    %c0_0 = arith.constant 0 : index
    %1 = vector.load %arg9[%c0, %c0_0] : memref<8x904xf32, #tpu.memory_space<vmem>>, vector<8x904xf32>
    tpu.vector_store %arg9[%c0, %c0_0], %0 {strides = array<i32>} : memref<8x904xf32, #tpu.memory_space<vmem>>, vector<8x904xf32>,
    %c0_1 = arith.constant 0 : index
    %c0_2 = arith.constant 0 : index
    %2 = vector.load %arg0[%c0_1, %c0_2] : memref<4x512xf32, #tpu.memory_space<vmem>>, vector<4x16xf32>
    %c0_3 = arith.constant 0 : index
    %c147 = arith.constant 147 : index
    %3 = vector.load %arg9[%c0_3, %c147] : memref<8x904xf32, #tpu.memory_space<vmem>>, vector<4x16xf32>
    tpu.vector_store %arg9[%c0_3, %c147], %2 {strides = array<i32>} : memref<8x904xf32, #tpu.memory_space<vmem>>, vector<4x16xf32>,
    %c0_4 = arith.constant 0 : index
    %c16 = arith.constant 16 : index
    %4 = vector.load %arg0[%c0_4, %c16] : memref<4x512xf32, #tpu.memory_space<vmem>>, vector<4x16xf32>
    %c0_5 = arith.constant 0 : index
    %c165 = arith.constant 165 : index
    %5 = vector.load %arg9[%c0_5, %c165] : memref<8x904xf32, #tpu.memory_space<vmem>>, vector<4x16xf32>
    tpu.vector_store %arg9[%c0_5, %c165], %4 {strides = array<i32>} : memref<8x904xf32, #tpu.memory_space<vmem>>, vector<4x16xf32>,
    %c0_6 = arith.constant 0 : index
    %c32 = arith.constant 32 : index
    %6 = vector.load %arg0[%c0_6, %c32] : memref<4x512xf32, #tpu.memory_space<vmem>>, vector<4x16xf32>
    %c0_7 = arith.constant 0 : index
    %c183 = arith.constant 183 : index
    %7 = vector.load %arg9[%c0_7, %c183] : memref<8x904xf32, #tpu.memory_space<vmem>>, vector<4x16xf32>
    tpu.vector_store %arg9[%c0_7, %c183], %6 {strides = array<i32>} : memref<8x904xf32, #tpu.memory_space<vmem>>, vector<4x16xf32>,
    %c0_8 = arith.constant 0 : index
    %c48 = arith.constant 48 : index
    %8 = vector.load %arg0[%c0_8, %c48] : memref<4x512xf32, #tpu.memory_space<vmem>>, vector<4x16xf32>
    %c0_9 = arith.constant 0 : index
    %c201 = arith.constant 201 : index
    %9 = vector.load %arg9[%c0_9, %c201] : memref<8x904xf32, #tpu.memory_space<vmem>>, vector<4x16xf32>
    tpu.vector_store %arg9[%c0_9, %c201], %8 {strides = array<i32>} : memref<8x904xf32, #tpu.memory_space<vmem>>, vector<4x16xf32>,
    %c0_10 = arith.constant 0 : index
    %c64 = arith.constant 64 : index
    %10 = vector.load %arg0[%c0_10, %c64] : memref<4x512xf32, #tpu.memory_space<vmem>>, vector<4x16xf32>
    %c0_11 = arith.constant 0 : index
    %c219 = arith.constant 219 : index
    %11 = vector.load %arg9[%c0_11, %c219] : memref<8x904xf32, #tpu.memory_space<vmem>>, vector<4x16xf32>
    tpu.vector_store %arg9[%c0_11, %c219], %10 {strides = array<i32>} : memref<8x904xf32, #tpu.memory_space<vmem>>, vector<4x16xf32>,
    %c0_12 = arith.constant 0 : index
    %c80 = arith.constant 80 : index
    %12 = vector.load %arg0[%c0_12, %c80] : memref<4x512xf32, #tpu.memory_space<vmem>>, vector<4x16xf32>
    %c0_13 = arith.constant 0 : index
    %c237 = arith.constant 237 : index
    %13 = vector.load %arg9[%c0_13, %c237] : memref<8x904xf32, #tpu.memory_space<vmem>>, vector<4x16xf32>
    tpu.vector_store %arg9[%c0_13, %c237], %12 {strides = array<i32>} : memref<8x904xf32, #tpu.memory_space<vmem>>, vector<4x16xf32>,
    %c0_14 = arith.constant 0 : index
    %c96 = arith.constant 96 : index
    %14 = vector.load %arg0[%c0_14, %c96] : memref<4x512xf32, #tpu.memory_space<vmem>>, vector<4x16xf32>
    %c0_15 = arith.constant 0 : index
    %c255 = arith.constant 255 : index
    %15 = vector.load %arg9[%c0_15, %c255] : memref<8x904xf32, #tpu.memory_space<vmem>>, vector<4x16xf32>
    tpu.vector_store %arg9[%c0_15, %c255], %14 {strides = array<i32>} : memref<8x904xf32, #tpu.memory_space<vmem>>, vector<4x16xf32>,
    %c0_16 = arith.constant 0 : index
    %c112 = arith.constant 112 : index
    %16 = vector.load %arg0[%c0_16, %c112] : memref<4x512xf32, #tpu.memory_space<vmem>>, vector<4x16xf32>
    %c0_17 = arith.constant 0 : index
    %c273 = arith.constant 273 : index
    %17 = vector.load %arg9[%c0_17, %c273] : memref<8x904xf32, #tpu.memory_space<vmem>>, vector<4x16xf32>
    tpu.vector_store %arg9[%c0_17, %c273], %16 {strides = array<i32>} : memref<8x904xf32, #tpu.memory_space<vmem>>, vector<4x16xf32>,
    %c0_18 = arith.constant 0 : index
    %c128 = arith.constant 128 : index
    %18 = vector.load %arg0[%c0_18, %c128] : memref<4x512xf32, #tpu.memory_space<vmem>>, vector<4x16xf32>
    %c0_19 = arith.constant 0 : index
    %c291 = arith.constant 291 : index
    %19 = vector.load %arg9[%c0_19, %c291] : memref<8x904xf32, #tpu.memory_space<vmem>>, vector<4x16xf32>
    tpu.vector_store %arg9[%c0_19, %c291], %18 {strides = array<i32>} : memref<8x904xf32, #tpu.memory_space<vmem>>, vector<4x16xf32>,
    %c0_20 = arith.constant 0 : index
    %c144 = arith.constant 144 : index
    %20 = vector.load %arg0[%c0_20, %c144] : memref<4x512xf32, #tpu.memory_space<vmem>>, vector<4x16xf32>
    %c0_21 = arith.constant 0 : index
    %c309 = arith.constant 309 : index
    %21 = vector.load %arg9[%c0_21, %c309] : memref<8x904xf32, #tpu.memory_space<vmem>>, vector<4x16xf32>
    tpu.vector_store %arg9[%c0_21, %c309], %20 {strides = array<i32>} : memref<8x904xf32, #tpu.memory_space<vmem>>, vector<4x16xf32>,
    %c0_22 = arith.constant 0 : index
    %c160 = arith.constant 160 : index
    %22 = vector.load %arg0[%c0_22, %c160] : memref<4x512xf32, #tpu.memory_space<vmem>>, vector<4x16xf32>
    %c0_23 = arith.constant 0 : index
    %c327 = arith.constant 327 : index
    %23 = vector.load %arg9[%c0_23, %c327] : memref<8x904xf32, #tpu.memory_space<vmem>>, vector<4x16xf32>
    tpu.vector_store %arg9[%c0_23, %c327], %22 {strides = array<i32>} : memref<8x904xf32, #tpu.memory_space<vmem>>, vector<4x16xf32>,
    %c0_24 = arith.constant 0 : index
    %c176 = arith.constant 176 : index
    %24 = vector.load %arg0[%c0_24, %c176] : memref<4x512xf32, #tpu.memory_space<vmem>>, vector<4x16xf32>
    %c0_25 = arith.constant 0 : index
    %c345 = arith.constant 345 : index
    %25 = vector.load %arg9[%c0_25, %c345] : memref<8x904xf32, #tpu.memory_space<vmem>>, vector<4x16xf32>
    tpu.vector_store %arg9[%c0_25, %c345], %24 {strides = array<i32>} : memref<8x904xf32, #tpu.memory_space<vmem>>, vector<4x16xf32>,
    %c0_26 = arith.constant 0 : index
    %c192 = arith.constant 192 : index
    %26 = vector.load %arg0[%c0_26, %c192] : memref<4x512xf32, #tpu.memory_space<vmem>>, vector<4x16xf32>
    %c0_27 = arith.constant 0 : index
    %c363 = arith.constant 363 : index
    %27 = vector.load %arg9[%c0_27, %c363] : memref<8x904xf32, #tpu.memory_space<vmem>>, vector<4x16xf32>
    tpu.vector_store %arg9[%c0_27, %c363], %26 {strides = array<i32>} : memref<8x904xf32, #tpu.memory_space<vmem>>, vector<4x16xf32>,
    %c0_28 = arith.constant 0 : index
    %c208 = arith.constant 208 : index
    %28 = vector.load %arg0[%c0_28, %c208] : memref<4x512xf32, #tpu.memory_space<vmem>>, vector<4x16xf32>
    %c0_29 = arith.constant 0 : index
    %c381 = arith.constant 381 : index
    %29 = vector.load %arg9[%c0_29, %c381] : memref<8x904xf32, #tpu.memory_space<vmem>>, vector<4x16xf32>
    tpu.vector_store %arg9[%c0_29, %c381], %28 {strides = array<i32>} : memref<8x904xf32, #tpu.memory_space<vmem>>, vector<4x16xf32>,
    %c0_30 = arith.constant 0 : index
    %c224 = arith.constant 224 : index
    %30 = vector.load %arg0[%c0_30, %c224] : memref<4x512xf32, #tpu.memory_space<vmem>>, vector<4x16xf32>
    %c0_31 = arith.constant 0 : index
    %c399 = arith.constant 399 : index
    %31 = vector.load %arg9[%c0_31, %c399] : memref<8x904xf32, #tpu.memory_space<vmem>>, vector<4x16xf32>
    tpu.vector_store %arg9[%c0_31, %c399], %30 {strides = array<i32>} : memref<8x904xf32, #tpu.memory_space<vmem>>, vector<4x16xf32>,
    %c0_32 = arith.constant 0 : index
    %c240 = arith.constant 240 : index
    %32 = vector.load %arg0[%c0_32, %c240] : memref<4x512xf32, #tpu.memory_space<vmem>>, vector<4x16xf32>
    %c0_33 = arith.constant 0 : index
    %c417 = arith.constant 417 : index
    %33 = vector.load %arg9[%c0_33, %c417] : memref<8x904xf32, #tpu.memory_space<vmem>>, vector<4x16xf32>
    tpu.vector_store %arg9[%c0_33, %c417], %32 {strides = array<i32>} : memref<8x904xf32, #tpu.memory_space<vmem>>, vector<4x16xf32>,
    %c0_34 = arith.constant 0 : index
    %c256 = arith.constant 256 : index
    %34 = vector.load %arg0[%c0_34, %c256] : memref<4x512xf32, #tpu.memory_space<vmem>>, vector<4x16xf32>
    %c0_35 = arith.constant 0 : index
    %c471 = arith.constant 471 : index
    %35 = vector.load %arg9[%c0_35, %c471] : memref<8x904xf32, #tpu.memory_space<vmem>>, vector<4x16xf32>
    tpu.vector_store %arg9[%c0_35, %c471], %34 {strides = array<i32>} : memref<8x904xf32, #tpu.memory_space<vmem>>, vector<4x16xf32>,
    %c0_36 = arith.constant 0 : index
    %c272 = arith.constant 272 : index
    %36 = vector.load %arg0[%c0_36, %c272] : memref<4x512xf32, #tpu.memory_space<vmem>>, vector<4x16xf32>
    %c0_37 = arith.constant 0 : index
    %c489 = arith.constant 489 : index
    %37 = vector.load %arg9[%c0_37, %c489] : memref<8x904xf32, #tpu.memory_space<vmem>>, vector<4x16xf32>
    tpu.vector_store %arg9[%c0_37, %c489], %36 {strides = array<i32>} : memref<8x904xf32, #tpu.memory_space<vmem>>, vector<4x16xf32>,
    %c0_38 = arith.constant 0 : index
    %c288 = arith.constant 288 : index
    %38 = vector.load %arg0[%c0_38, %c288] : memref<4x512xf32, #tpu.memory_space<vmem>>, vector<4x16xf32>
    %c0_39 = arith.constant 0 : index
    %c507 = arith.constant 507 : index
    %39 = vector.load %arg9[%c0_39, %c507] : memref<8x904xf32, #tpu.memory_space<vmem>>, vector<4x16xf32>
    tpu.vector_store %arg9[%c0_39, %c507], %38 {strides = array<i32>} : memref<8x904xf32, #tpu.memory_space<vmem>>, vector<4x16xf32>,
    %c0_40 = arith.constant 0 : index
    %c304 = arith.constant 304 : index
    %40 = vector.load %arg0[%c0_40, %c304] : memref<4x512xf32, #tpu.memory_space<vmem>>, vector<4x16xf32>
    %c0_41 = arith.constant 0 : index
    %c525 = arith.constant 525 : index
    %41 = vector.load %arg9[%c0_41, %c525] : memref<8x904xf32, #tpu.memory_space<vmem>>, vector<4x16xf32>
    tpu.vector_store %arg9[%c0_41, %c525], %40 {strides = array<i32>} : memref<8x904xf32, #tpu.memory_space<vmem>>, vector<4x16xf32>,
    %c0_42 = arith.constant 0 : index
    %c320 = arith.constant 320 : index
    %42 = vector.load %arg0[%c0_42, %c320] : memref<4x512xf32, #tpu.memory_space<vmem>>, vector<4x16xf32>
    %c0_43 = arith.constant 0 : index
    %c543 = arith.constant 543 : index
    %43 = vector.load %arg9[%c0_43, %c543] : memref<8x904xf32, #tpu.memory_space<vmem>>, vector<4x16xf32>
    tpu.vector_store %arg9[%c0_43, %c543], %42 {strides = array<i32>} : memref<8x904xf32, #tpu.memory_space<vmem>>, vector<4x16xf32>,
    %c0_44 = arith.constant 0 : index
    %c336 = arith.constant 336 : index
    %44 = vector.load %arg0[%c0_44, %c336] : memref<4x512xf32, #tpu.memory_space<vmem>>, vector<4x16xf32>
    %c0_45 = arith.constant 0 : index
    %c561 = arith.constant 561 : index
    %45 = vector.load %arg9[%c0_45, %c561] : memref<8x904xf32, #tpu.memory_space<vmem>>, vector<4x16xf32>
    tpu.vector_store %arg9[%c0_45, %c561], %44 {strides = array<i32>} : memref<8x904xf32, #tpu.memory_space<vmem>>, vector<4x16xf32>,
    %c0_46 = arith.constant 0 : index
    %c352 = arith.constant 352 : index
    %46 = vector.load %arg0[%c0_46, %c352] : memref<4x512xf32, #tpu.memory_space<vmem>>, vector<4x16xf32>
    %c0_47 = arith.constant 0 : index
    %c579 = arith.constant 579 : index
    %47 = vector.load %arg9[%c0_47, %c579] : memref<8x904xf32, #tpu.memory_space<vmem>>, vector<4x16xf32>
    tpu.vector_store %arg9[%c0_47, %c579], %46 {strides = array<i32>} : memref<8x904xf32, #tpu.memory_space<vmem>>, vector<4x16xf32>,
    %c0_48 = arith.constant 0 : index
    %c368 = arith.constant 368 : index
    %48 = vector.load %arg0[%c0_48, %c368] : memref<4x512xf32, #tpu.memory_space<vmem>>, vector<4x16xf32>
    %c0_49 = arith.constant 0 : index
    %c597 = arith.constant 597 : index
    %49 = vector.load %arg9[%c0_49, %c597] : memref<8x904xf32, #tpu.memory_space<vmem>>, vector<4x16xf32>
    tpu.vector_store %arg9[%c0_49, %c597], %48 {strides = array<i32>} : memref<8x904xf32, #tpu.memory_space<vmem>>, vector<4x16xf32>,
    %c0_50 = arith.constant 0 : index
    %c384 = arith.constant 384 : index
    %50 = vector.load %arg0[%c0_50, %c384] : memref<4x512xf32, #tpu.memory_space<vmem>>, vector<4x16xf32>
    %c0_51 = arith.constant 0 : index
    %c615 = arith.constant 615 : index
    %51 = vector.load %arg9[%c0_51, %c615] : memref<8x904xf32, #tpu.memory_space<vmem>>, vector<4x16xf32>
    tpu.vector_store %arg9[%c0_51, %c615], %50 {strides = array<i32>} : memref<8x904xf32, #tpu.memory_space<vmem>>, vector<4x16xf32>,
    %c0_52 = arith.constant 0 : index
    %c400 = arith.constant 400 : index
    %52 = vector.load %arg0[%c0_52, %c400] : memref<4x512xf32, #tpu.memory_space<vmem>>, vector<4x16xf32>
    %c0_53 = arith.constant 0 : index
    %c633 = arith.constant 633 : index
    %53 = vector.load %arg9[%c0_53, %c633] : memref<8x904xf32, #tpu.memory_space<vmem>>, vector<4x16xf32>
    tpu.vector_store %arg9[%c0_53, %c633], %52 {strides = array<i32>} : memref<8x904xf32, #tpu.memory_space<vmem>>, vector<4x16xf32>,
    %c0_54 = arith.constant 0 : index
    %c416 = arith.constant 416 : index
    %54 = vector.load %arg0[%c0_54, %c416] : memref<4x512xf32, #tpu.memory_space<vmem>>, vector<4x16xf32>
    %c0_55 = arith.constant 0 : index
    %c651 = arith.constant 651 : index
    %55 = vector.load %arg9[%c0_55, %c651] : memref<8x904xf32, #tpu.memory_space<vmem>>, vector<4x16xf32>
    tpu.vector_store %arg9[%c0_55, %c651], %54 {strides = array<i32>} : memref<8x904xf32, #tpu.memory_space<vmem>>, vector<4x16xf32>,
    %c0_56 = arith.constant 0 : index
    %c432 = arith.constant 432 : index
    %56 = vector.load %arg0[%c0_56, %c432] : memref<4x512xf32, #tpu.memory_space<vmem>>, vector<4x16xf32>
    %c0_57 = arith.constant 0 : index
    %c669 = arith.constant 669 : index
    %57 = vector.load %arg9[%c0_57, %c669] : memref<8x904xf32, #tpu.memory_space<vmem>>, vector<4x16xf32>
    tpu.vector_store %arg9[%c0_57, %c669], %56 {strides = array<i32>} : memref<8x904xf32, #tpu.memory_space<vmem>>, vector<4x16xf32>,
    %c0_58 = arith.constant 0 : index
    %c448 = arith.constant 448 : index
    %58 = vector.load %arg0[%c0_58, %c448] : memref<4x512xf32, #tpu.memory_space<vmem>>, vector<4x16xf32>
    %c0_59 = arith.constant 0 : index
    %c687 = arith.constant 687 : index
    %59 = vector.load %arg9[%c0_59, %c687] : memref<8x904xf32, #tpu.memory_space<vmem>>, vector<4x16xf32>
    tpu.vector_store %arg9[%c0_59, %c687], %58 {strides = array<i32>} : memref<8x904xf32, #tpu.memory_space<vmem>>, vector<4x16xf32>,
    %c0_60 = arith.constant 0 : index
    %c464 = arith.constant 464 : index
    %60 = vector.load %arg0[%c0_60, %c464] : memref<4x512xf32, #tpu.memory_space<vmem>>, vector<4x16xf32>
    %c0_61 = arith.constant 0 : index
    %c705 = arith.constant 705 : index
    %61 = vector.load %arg9[%c0_61, %c705] : memref<8x904xf32, #tpu.memory_space<vmem>>, vector<4x16xf32>
    tpu.vector_store %arg9[%c0_61, %c705], %60 {strides = array<i32>} : memref<8x904xf32, #tpu.memory_space<vmem>>, vector<4x16xf32>,
    %c0_62 = arith.constant 0 : index
    %c480 = arith.constant 480 : index
    %62 = vector.load %arg0[%c0_62, %c480] : memref<4x512xf32, #tpu.memory_space<vmem>>, vector<4x16xf32>
    %c0_63 = arith.constant 0 : index
    %c723 = arith.constant 723 : index
    %63 = vector.load %arg9[%c0_63, %c723] : memref<8x904xf32, #tpu.memory_space<vmem>>, vector<4x16xf32>
    tpu.vector_store %arg9[%c0_63, %c723], %62 {strides = array<i32>} : memref<8x904xf32, #tpu.memory_space<vmem>>, vector<4x16xf32>,
    %c0_64 = arith.constant 0 : index
    %c496 = arith.constant 496 : index
    %64 = vector.load %arg0[%c0_64, %c496] : memref<4x512xf32, #tpu.memory_space<vmem>>, vector<4x16xf32>
    %c0_65 = arith.constant 0 : index
    %c741 = arith.constant 741 : index
    %65 = vector.load %arg9[%c0_65, %c741] : memref<8x904xf32, #tpu.memory_space<vmem>>, vector<4x16xf32>
    tpu.vector_store %arg9[%c0_65, %c741], %64 {strides = array<i32>} : memref<8x904xf32, #tpu.memory_space<vmem>>, vector<4x16xf32>,
    %c0_66 = arith.constant 0 : index
    %c0_67 = arith.constant 0 : index
    %66 = vector.load %arg1[%c0_66, %c0_67] : memref<1x648xf32, #tpu.memory_space<vmem>>, vector<1x648xf32>
    %c0_68 = arith.constant 0 : index
    %c109 = arith.constant 109 : index
    %67 = vector.load %arg9[%c0_68, %c109] : memref<8x904xf32, #tpu.memory_space<vmem>>, vector<8x648xf32>
    %c0_69 = arith.constant 0 : index
    %c0_70 = arith.constant 0 : index
    %68 = vector.load %arg2[%c0_69, %c0_70] : memref<8x72xf32, #tpu.memory_space<vmem>>, vector<8x8xf32>
    %cst_71 = arith.constant dense<0.000000e+00> : vector<8x648xf32>
    %69 = tpu.matmul %68, %67, %cst_71 {dimension_numbers = #tpu.dot_dimension_numbers<[1], [0], [0], [1], [0, 0, 1, 1], [], []>} : vector<8x8xf32>, vector<8x648xf32>, vector<8x648xf32> -> vector<8x648xf32>
    %c0_72 = arith.constant 0 : index
    %c110 = arith.constant 110 : index
    %70 = vector.load %arg9[%c0_72, %c110] : memref<8x904xf32, #tpu.memory_space<vmem>>, vector<8x648xf32>
    %c0_73 = arith.constant 0 : index
    %c8 = arith.constant 8 : index
    %71 = vector.load %arg2[%c0_73, %c8] : memref<8x72xf32, #tpu.memory_space<vmem>>, vector<8x8xf32>
    %cst_74 = arith.constant dense<0.000000e+00> : vector<8x648xf32>
    %72 = tpu.matmul %71, %70, %cst_74 {dimension_numbers = #tpu.dot_dimension_numbers<[1], [0], [0], [1], [0, 0, 1, 1], [], []>} : vector<8x8xf32>, vector<8x648xf32>, vector<8x648xf32> -> vector<8x648xf32>
    %73 = arith.addf %69, %72 : vector<8x648xf32>
    %c0_75 = arith.constant 0 : index
    %c111 = arith.constant 111 : index
    %74 = vector.load %arg9[%c0_75, %c111] : memref<8x904xf32, #tpu.memory_space<vmem>>, vector<8x648xf32>
    %c0_76 = arith.constant 0 : index
    %c16_77 = arith.constant 16 : index
    %75 = vector.load %arg2[%c0_76, %c16_77] : memref<8x72xf32, #tpu.memory_space<vmem>>, vector<8x8xf32>
    %cst_78 = arith.constant dense<0.000000e+00> : vector<8x648xf32>
    %76 = tpu.matmul %75, %74, %cst_78 {dimension_numbers = #tpu.dot_dimension_numbers<[1], [0], [0], [1], [0, 0, 1, 1], [], []>} : vector<8x8xf32>, vector<8x648xf32>, vector<8x648xf32> -> vector<8x648xf32>
    %77 = arith.addf %73, %76 : vector<8x648xf32>
    %c0_79 = arith.constant 0 : index
    %c127 = arith.constant 127 : index
    %78 = vector.load %arg9[%c0_79, %c127] : memref<8x904xf32, #tpu.memory_space<vmem>>, vector<8x648xf32>
    %c0_80 = arith.constant 0 : index
    %c24 = arith.constant 24 : index
    %79 = vector.load %arg2[%c0_80, %c24] : memref<8x72xf32, #tpu.memory_space<vmem>>, vector<8x8xf32>
    %cst_81 = arith.constant dense<0.000000e+00> : vector<8x648xf32>
    %80 = tpu.matmul %79, %78, %cst_81 {dimension_numbers = #tpu.dot_dimension_numbers<[1], [0], [0], [1], [0, 0, 1, 1], [], []>} : vector<8x8xf32>, vector<8x648xf32>, vector<8x648xf32> -> vector<8x648xf32>
    %81 = arith.addf %77, %80 : vector<8x648xf32>
    %c0_82 = arith.constant 0 : index
    %c128_83 = arith.constant 128 : index
    %82 = vector.load %arg9[%c0_82, %c128_83] : memref<8x904xf32, #tpu.memory_space<vmem>>, vector<8x648xf32>
    %c0_84 = arith.constant 0 : index
    %c32_85 = arith.constant 32 : index
    %83 = vector.load %arg2[%c0_84, %c32_85] : memref<8x72xf32, #tpu.memory_space<vmem>>, vector<8x8xf32>
    %cst_86 = arith.constant dense<0.000000e+00> : vector<8x648xf32>
    %84 = tpu.matmul %83, %82, %cst_86 {dimension_numbers = #tpu.dot_dimension_numbers<[1], [0], [0], [1], [0, 0, 1, 1], [], []>} : vector<8x8xf32>, vector<8x648xf32>, vector<8x648xf32> -> vector<8x648xf32>
    %85 = arith.addf %81, %84 : vector<8x648xf32>
    %c0_87 = arith.constant 0 : index
    %c129 = arith.constant 129 : index
    %86 = vector.load %arg9[%c0_87, %c129] : memref<8x904xf32, #tpu.memory_space<vmem>>, vector<8x648xf32>
    %c0_88 = arith.constant 0 : index
    %c40 = arith.constant 40 : index
    %87 = vector.load %arg2[%c0_88, %c40] : memref<8x72xf32, #tpu.memory_space<vmem>>, vector<8x8xf32>
    %cst_89 = arith.constant dense<0.000000e+00> : vector<8x648xf32>
    %88 = tpu.matmul %87, %86, %cst_89 {dimension_numbers = #tpu.dot_dimension_numbers<[1], [0], [0], [1], [0, 0, 1, 1], [], []>} : vector<8x8xf32>, vector<8x648xf32>, vector<8x648xf32> -> vector<8x648xf32>
    %89 = arith.addf %85, %88 : vector<8x648xf32>
    %c0_90 = arith.constant 0 : index
    %c145 = arith.constant 145 : index
    %90 = vector.load %arg9[%c0_90, %c145] : memref<8x904xf32, #tpu.memory_space<vmem>>, vector<8x648xf32>
    %c0_91 = arith.constant 0 : index
    %c48_92 = arith.constant 48 : index
    %91 = vector.load %arg2[%c0_91, %c48_92] : memref<8x72xf32, #tpu.memory_space<vmem>>, vector<8x8xf32>
    %cst_93 = arith.constant dense<0.000000e+00> : vector<8x648xf32>
    %92 = tpu.matmul %91, %90, %cst_93 {dimension_numbers = #tpu.dot_dimension_numbers<[1], [0], [0], [1], [0, 0, 1, 1], [], []>} : vector<8x8xf32>, vector<8x648xf32>, vector<8x648xf32> -> vector<8x648xf32>
    %93 = arith.addf %89, %92 : vector<8x648xf32>
    %c0_94 = arith.constant 0 : index
    %c146 = arith.constant 146 : index
    %94 = vector.load %arg9[%c0_94, %c146] : memref<8x904xf32, #tpu.memory_space<vmem>>, vector<8x648xf32>
    %c0_95 = arith.constant 0 : index
    %c56 = arith.constant 56 : index
    %95 = vector.load %arg2[%c0_95, %c56] : memref<8x72xf32, #tpu.memory_space<vmem>>, vector<8x8xf32>
    %cst_96 = arith.constant dense<0.000000e+00> : vector<8x648xf32>
    %96 = tpu.matmul %95, %94, %cst_96 {dimension_numbers = #tpu.dot_dimension_numbers<[1], [0], [0], [1], [0, 0, 1, 1], [], []>} : vector<8x8xf32>, vector<8x648xf32>, vector<8x648xf32> -> vector<8x648xf32>
    %97 = arith.addf %93, %96 : vector<8x648xf32>
    %c0_97 = arith.constant 0 : index
    %c147_98 = arith.constant 147 : index
    %98 = vector.load %arg9[%c0_97, %c147_98] : memref<8x904xf32, #tpu.memory_space<vmem>>, vector<8x648xf32>
    %c0_99 = arith.constant 0 : index
    %c64_100 = arith.constant 64 : index
    %99 = vector.load %arg2[%c0_99, %c64_100] : memref<8x72xf32, #tpu.memory_space<vmem>>, vector<8x8xf32>
    %cst_101 = arith.constant dense<0.000000e+00> : vector<8x648xf32>
    %100 = tpu.matmul %99, %98, %cst_101 {dimension_numbers = #tpu.dot_dimension_numbers<[1], [0], [0], [1], [0, 0, 1, 1], [], []>} : vector<8x8xf32>, vector<8x648xf32>, vector<8x648xf32> -> vector<8x648xf32>
    %101 = arith.addf %97, %100 : vector<8x648xf32>
    %102 = vector.broadcast %66 : vector<1x648xf32> to vector<8x648xf32>
    %103 = arith.mulf %101, %102 : vector<8x648xf32>
    %cst_102 = arith.constant dense<0.000000e+00> : vector<8xf32>
    %104 = vector.multi_reduction <add>, %103, %cst_102 [1] : vector<8x648xf32> to vector<8xf32>
    %105 = vector.shape_cast %104 : vector<8xf32> to vector<8x1xf32>
    %cst_103 = arith.constant 0.001953125 : f32
    %106 = vector.broadcast %cst_103 : f32 to vector<8x1xf32>
    %107 = arith.mulf %105, %106 : vector<8x1xf32>
    %108 = vector.broadcast %107 : vector<8x1xf32> to vector<8x648xf32>
    %109 = arith.subf %101, %108 : vector<8x648xf32>
    %110 = arith.mulf %109, %109 : vector<8x648xf32>
    %111 = vector.broadcast %66 : vector<1x648xf32> to vector<8x648xf32>
    %112 = arith.mulf %110, %111 : vector<8x648xf32>
    %cst_104 = arith.constant dense<0.000000e+00> : vector<8xf32>
    %113 = vector.multi_reduction <add>, %112, %cst_104 [1] : vector<8x648xf32> to vector<8xf32>
    %114 = vector.shape_cast %113 : vector<8xf32> to vector<8x1xf32>
    %cst_105 = arith.constant 0.001953125 : f32
    %115 = vector.broadcast %cst_105 : f32 to vector<8x1xf32>
    %116 = arith.mulf %114, %115 : vector<8x1xf32>
    %c0_106 = arith.constant 0 : index
    %c0_107 = arith.constant 0 : index
    %117 = vector.load %arg3[%c0_106, %c0_107] : memref<8x1xf32, #tpu.memory_space<vmem>>, vector<8x1xf32>
    %cst_108 = arith.constant 9.99999974E-6 : f32
    %118 = vector.broadcast %cst_108 : f32 to vector<8x1xf32>
    %119 = arith.addf %116, %118 : vector<8x1xf32>
    %120 = math.rsqrt %119 : vector<8x1xf32>
    %121 = arith.mulf %117, %120 : vector<8x1xf32>
    %122 = vector.broadcast %121 : vector<8x1xf32> to vector<8x648xf32>
    %123 = arith.mulf %109, %122 : vector<8x648xf32>
    %c0_109 = arith.constant 0 : index
    %c0_110 = arith.constant 0 : index
    %124 = vector.load %arg4[%c0_109, %c0_110] : memref<8x1xf32, #tpu.memory_space<vmem>>, vector<8x1xf32>
    %125 = vector.broadcast %124 : vector<8x1xf32> to vector<8x648xf32>
    %126 = arith.addf %123, %125 : vector<8x648xf32>
    %cst_111 = arith.constant 0.000000e+00 : f32
    %127 = vector.broadcast %cst_111 : f32 to vector<8x648xf32>
    %128 = arith.maximumf %126, %127 : vector<8x648xf32>
    %129 = vector.broadcast %66 : vector<1x648xf32> to vector<8x648xf32>
    %130 = arith.mulf %128, %129 : vector<8x648xf32>
    %cst_112 = arith.constant 0.000000e+00 : f32
    %131 = vector.broadcast %cst_112 : f32 to vector<8x128xf32>
    %c0_113 = arith.constant 0 : index
    %c0_114 = arith.constant 0 : index
    %132 = vector.load %arg10[%c0_113, %c0_114] : memref<8x904xf32, #tpu.memory_space<vmem>>, vector<8x128xf32>
    tpu.vector_store %arg10[%c0_113, %c0_114], %131 {strides = array<i32>} : memref<8x904xf32, #tpu.memory_space<vmem>>, vector<8x128xf32>,
    %cst_115 = arith.constant 0.000000e+00 : f32
    %133 = vector.broadcast %cst_115 : f32 to vector<8x128xf32>
    %c0_116 = arith.constant 0 : index
    %c776 = arith.constant 776 : index
    %134 = vector.load %arg10[%c0_116, %c776] : memref<8x904xf32, #tpu.memory_space<vmem>>, vector<8x128xf32>
    tpu.vector_store %arg10[%c0_116, %c776], %133 {strides = array<i32>} : memref<8x904xf32, #tpu.memory_space<vmem>>, vector<8x128xf32>,
    %c0_117 = arith.constant 0 : index
    %c128_118 = arith.constant 128 : index
    %135 = vector.load %arg10[%c0_117, %c128_118] : memref<8x904xf32, #tpu.memory_space<vmem>>, vector<8x648xf32>
    tpu.vector_store %arg10[%c0_117, %c128_118], %130 {strides = array<i32>} : memref<8x904xf32, #tpu.memory_space<vmem>>, vector<8x648xf32>,
    %c0_119 = arith.constant 0 : index
    %c109_120 = arith.constant 109 : index
    %136 = vector.load %arg10[%c0_119, %c109_120] : memref<8x904xf32, #tpu.memory_space<vmem>>, vector<8x648xf32>
    %c0_121 = arith.constant 0 : index
    %c0_122 = arith.constant 0 : index
    %137 = vector.load %arg5[%c0_121, %c0_122] : memref<8x72xf32, #tpu.memory_space<vmem>>, vector<8x8xf32>
    %cst_123 = arith.constant dense<0.000000e+00> : vector<8x648xf32>
    %138 = tpu.matmul %137, %136, %cst_123 {dimension_numbers = #tpu.dot_dimension_numbers<[1], [0], [0], [1], [0, 0, 1, 1], [], []>} : vector<8x8xf32>, vector<8x648xf32>, vector<8x648xf32> -> vector<8x648xf32>
    %c0_124 = arith.constant 0 : index
    %c110_125 = arith.constant 110 : index
    %139 = vector.load %arg10[%c0_124, %c110_125] : memref<8x904xf32, #tpu.memory_space<vmem>>, vector<8x648xf32>
    %c0_126 = arith.constant 0 : index
    %c8_127 = arith.constant 8 : index
    %140 = vector.load %arg5[%c0_126, %c8_127] : memref<8x72xf32, #tpu.memory_space<vmem>>, vector<8x8xf32>
    %cst_128 = arith.constant dense<0.000000e+00> : vector<8x648xf32>
    %141 = tpu.matmul %140, %139, %cst_128 {dimension_numbers = #tpu.dot_dimension_numbers<[1], [0], [0], [1], [0, 0, 1, 1], [], []>} : vector<8x8xf32>, vector<8x648xf32>, vector<8x648xf32> -> vector<8x648xf32>
    %142 = arith.addf %138, %141 : vector<8x648xf32>
    %c0_129 = arith.constant 0 : index
    %c111_130 = arith.constant 111 : index
    %143 = vector.load %arg10[%c0_129, %c111_130] : memref<8x904xf32, #tpu.memory_space<vmem>>, vector<8x648xf32>
    %c0_131 = arith.constant 0 : index
    %c16_132 = arith.constant 16 : index
    %144 = vector.load %arg5[%c0_131, %c16_132] : memref<8x72xf32, #tpu.memory_space<vmem>>, vector<8x8xf32>
    %cst_133 = arith.constant dense<0.000000e+00> : vector<8x648xf32>
    %145 = tpu.matmul %144, %143, %cst_133 {dimension_numbers = #tpu.dot_dimension_numbers<[1], [0], [0], [1], [0, 0, 1, 1], [], []>} : vector<8x8xf32>, vector<8x648xf32>, vector<8x648xf32> -> vector<8x648xf32>
    %146 = arith.addf %142, %145 : vector<8x648xf32>
    %c0_134 = arith.constant 0 : index
    %c127_135 = arith.constant 127 : index
    %147 = vector.load %arg10[%c0_134, %c127_135] : memref<8x904xf32, #tpu.memory_space<vmem>>, vector<8x648xf32>
    %c0_136 = arith.constant 0 : index
    %c24_137 = arith.constant 24 : index
    %148 = vector.load %arg5[%c0_136, %c24_137] : memref<8x72xf32, #tpu.memory_space<vmem>>, vector<8x8xf32>
    %cst_138 = arith.constant dense<0.000000e+00> : vector<8x648xf32>
    %149 = tpu.matmul %148, %147, %cst_138 {dimension_numbers = #tpu.dot_dimension_numbers<[1], [0], [0], [1], [0, 0, 1, 1], [], []>} : vector<8x8xf32>, vector<8x648xf32>, vector<8x648xf32> -> vector<8x648xf32>
    %150 = arith.addf %146, %149 : vector<8x648xf32>
    %c0_139 = arith.constant 0 : index
    %c128_140 = arith.constant 128 : index
    %151 = vector.load %arg10[%c0_139, %c128_140] : memref<8x904xf32, #tpu.memory_space<vmem>>, vector<8x648xf32>
    %c0_141 = arith.constant 0 : index
    %c32_142 = arith.constant 32 : index
    %152 = vector.load %arg5[%c0_141, %c32_142] : memref<8x72xf32, #tpu.memory_space<vmem>>, vector<8x8xf32>
    %cst_143 = arith.constant dense<0.000000e+00> : vector<8x648xf32>
    %153 = tpu.matmul %152, %151, %cst_143 {dimension_numbers = #tpu.dot_dimension_numbers<[1], [0], [0], [1], [0, 0, 1, 1], [], []>} : vector<8x8xf32>, vector<8x648xf32>, vector<8x648xf32> -> vector<8x648xf32>
    %154 = arith.addf %150, %153 : vector<8x648xf32>
    %c0_144 = arith.constant 0 : index
    %c129_145 = arith.constant 129 : index
    %155 = vector.load %arg10[%c0_144, %c129_145] : memref<8x904xf32, #tpu.memory_space<vmem>>, vector<8x648xf32>
    %c0_146 = arith.constant 0 : index
    %c40_147 = arith.constant 40 : index
    %156 = vector.load %arg5[%c0_146, %c40_147] : memref<8x72xf32, #tpu.memory_space<vmem>>, vector<8x8xf32>
    %cst_148 = arith.constant dense<0.000000e+00> : vector<8x648xf32>
    %157 = tpu.matmul %156, %155, %cst_148 {dimension_numbers = #tpu.dot_dimension_numbers<[1], [0], [0], [1], [0, 0, 1, 1], [], []>} : vector<8x8xf32>, vector<8x648xf32>, vector<8x648xf32> -> vector<8x648xf32>
    %158 = arith.addf %154, %157 : vector<8x648xf32>
    %c0_149 = arith.constant 0 : index
    %c145_150 = arith.constant 145 : index
    %159 = vector.load %arg10[%c0_149, %c145_150] : memref<8x904xf32, #tpu.memory_space<vmem>>, vector<8x648xf32>
    %c0_151 = arith.constant 0 : index
    %c48_152 = arith.constant 48 : index
    %160 = vector.load %arg5[%c0_151, %c48_152] : memref<8x72xf32, #tpu.memory_space<vmem>>, vector<8x8xf32>
    %cst_153 = arith.constant dense<0.000000e+00> : vector<8x648xf32>
    %161 = tpu.matmul %160, %159, %cst_153 {dimension_numbers = #tpu.dot_dimension_numbers<[1], [0], [0], [1], [0, 0, 1, 1], [], []>} : vector<8x8xf32>, vector<8x648xf32>, vector<8x648xf32> -> vector<8x648xf32>
    %162 = arith.addf %158, %161 : vector<8x648xf32>
    %c0_154 = arith.constant 0 : index
    %c146_155 = arith.constant 146 : index
    %163 = vector.load %arg10[%c0_154, %c146_155] : memref<8x904xf32, #tpu.memory_space<vmem>>, vector<8x648xf32>
    %c0_156 = arith.constant 0 : index
    %c56_157 = arith.constant 56 : index
    %164 = vector.load %arg5[%c0_156, %c56_157] : memref<8x72xf32, #tpu.memory_space<vmem>>, vector<8x8xf32>
    %cst_158 = arith.constant dense<0.000000e+00> : vector<8x648xf32>
    %165 = tpu.matmul %164, %163, %cst_158 {dimension_numbers = #tpu.dot_dimension_numbers<[1], [0], [0], [1], [0, 0, 1, 1], [], []>} : vector<8x8xf32>, vector<8x648xf32>, vector<8x648xf32> -> vector<8x648xf32>
    %166 = arith.addf %162, %165 : vector<8x648xf32>
    %c0_159 = arith.constant 0 : index
    %c147_160 = arith.constant 147 : index
    %167 = vector.load %arg10[%c0_159, %c147_160] : memref<8x904xf32, #tpu.memory_space<vmem>>, vector<8x648xf32>
    %c0_161 = arith.constant 0 : index
    %c64_162 = arith.constant 64 : index
    %168 = vector.load %arg5[%c0_161, %c64_162] : memref<8x72xf32, #tpu.memory_space<vmem>>, vector<8x8xf32>
    %cst_163 = arith.constant dense<0.000000e+00> : vector<8x648xf32>
    %169 = tpu.matmul %168, %167, %cst_163 {dimension_numbers = #tpu.dot_dimension_numbers<[1], [0], [0], [1], [0, 0, 1, 1], [], []>} : vector<8x8xf32>, vector<8x648xf32>, vector<8x648xf32> -> vector<8x648xf32>
    %170 = arith.addf %166, %169 : vector<8x648xf32>
    %171 = vector.broadcast %66 : vector<1x648xf32> to vector<8x648xf32>
    %172 = arith.mulf %170, %171 : vector<8x648xf32>
    %cst_164 = arith.constant dense<0.000000e+00> : vector<8xf32>
    %173 = vector.multi_reduction <add>, %172, %cst_164 [1] : vector<8x648xf32> to vector<8xf32>
    %174 = vector.shape_cast %173 : vector<8xf32> to vector<8x1xf32>
    %cst_165 = arith.constant 0.001953125 : f32
    %175 = vector.broadcast %cst_165 : f32 to vector<8x1xf32>
    %176 = arith.mulf %174, %175 : vector<8x1xf32>
    %177 = vector.broadcast %176 : vector<8x1xf32> to vector<8x648xf32>
    %178 = arith.subf %170, %177 : vector<8x648xf32>
    %179 = arith.mulf %178, %178 : vector<8x648xf32>
    %180 = vector.broadcast %66 : vector<1x648xf32> to vector<8x648xf32>
    %181 = arith.mulf %179, %180 : vector<8x648xf32>
    %cst_166 = arith.constant dense<0.000000e+00> : vector<8xf32>
    %182 = vector.multi_reduction <add>, %181, %cst_166 [1] : vector<8x648xf32> to vector<8xf32>
    %183 = vector.shape_cast %182 : vector<8xf32> to vector<8x1xf32>
    %cst_167 = arith.constant 0.001953125 : f32
    %184 = vector.broadcast %cst_167 : f32 to vector<8x1xf32>
    %185 = arith.mulf %183, %184 : vector<8x1xf32>
    %c0_168 = arith.constant 0 : index
    %c0_169 = arith.constant 0 : index
    %186 = vector.load %arg6[%c0_168, %c0_169] : memref<8x1xf32, #tpu.memory_space<vmem>>, vector<8x1xf32>
    %cst_170 = arith.constant 9.99999974E-6 : f32
    %187 = vector.broadcast %cst_170 : f32 to vector<8x1xf32>
    %188 = arith.addf %185, %187 : vector<8x1xf32>
    %189 = math.rsqrt %188 : vector<8x1xf32>
    %190 = arith.mulf %186, %189 : vector<8x1xf32>
    %191 = vector.broadcast %190 : vector<8x1xf32> to vector<8x648xf32>
    %192 = arith.mulf %178, %191 : vector<8x648xf32>
    %c0_171 = arith.constant 0 : index
    %c0_172 = arith.constant 0 : index
    %193 = vector.load %arg7[%c0_171, %c0_172] : memref<8x1xf32, #tpu.memory_space<vmem>>, vector<8x1xf32>
    %194 = vector.broadcast %193 : vector<8x1xf32> to vector<8x648xf32>
    %195 = arith.addf %192, %194 : vector<8x648xf32>
    %c0_173 = arith.constant 0 : index
    %c128_174 = arith.constant 128 : index
    %196 = vector.load %arg9[%c0_173, %c128_174] : memref<8x904xf32, #tpu.memory_space<vmem>>, vector<8x648xf32>
    %197 = arith.addf %196, %195 : vector<8x648xf32>
    %cst_175 = arith.constant 0.000000e+00 : f32
    %198 = vector.broadcast %cst_175 : f32 to vector<8x648xf32>
    %199 = arith.maximumf %197, %198 : vector<8x648xf32>
    %c0_176 = arith.constant 0 : index
    %c0_177 = arith.constant 0 : index
    %200 = vector.load %arg8[%c0_176, %c0_177] : memref<8x648xf32, #tpu.memory_space<vmem>>, vector<8x648xf32>
    tpu.vector_store %arg8[%c0_176, %c0_177], %199 {strides = array<i32>} : memref<8x648xf32, #tpu.memory_space<vmem>>, vector<8x648xf32>,
    return
  }
}

</mosaic_0001>

<llo_original>
// kernel: residual_block.1
$region0: #{residual_block.1}
  #allocation0 [shape = 'u32[]', space=smem, size = 0x4, offset = 0x4, fixed_abs, tag = 'smem constant byte address 0x4 - core index']
  #allocation1 [shape = 'u32[144,128]{1,0:T(1,128)}', space=vmem, size = 0x12000, scoped, tag = 'internal scratch']
  #allocation2 [shape = 'f32[8,904]{1,0:T(8,128)}', space=vmem, size = 0x8000, scoped, tag = 'scratch operand']
  #allocation3 [shape = 'f32[8,904]{1,0:T(8,128)}', space=vmem, size = 0x8000, scoped, tag = 'scratch operand']
  %s0 = inlined_call_operand.vmem [shape: f32[4,512], index: 0, kind: input, shape index: {}]
  %s1 = inlined_call_operand.vmem [shape: f32[1,648], index: 1, kind: input, shape index: {}]
  %s2 = inlined_call_operand.vmem [shape: f32[8,72], index: 2, kind: input, shape index: {}]
  %s3 = inlined_call_operand.vmem [shape: f32[8,1], index: 3, kind: input, shape index: {}]
  %s4 = inlined_call_operand.vmem [shape: f32[8,1], index: 4, kind: input, shape index: {}]
  %s5 = inlined_call_operand.vmem [shape: f32[8,72], index: 5, kind: input, shape index: {}]
  %s6 = inlined_call_operand.vmem [shape: f32[8,1], index: 6, kind: input, shape index: {}]
  %s7 = inlined_call_operand.vmem [shape: f32[8,1], index: 7, kind: input, shape index: {}]
  %s8 = inlined_call_operand.vmem [shape: f32[8,648], index: 8, kind: output, shape index: {}]
  %s9 = sld [smem:[#allocation0]]
  $region42: #{residual_block.1} parent=0
    _
  %s11 = ssub.s32 1, %s9
  %s12 = scalar_select 0, %s11, %s9
  // Predicated region
  $region2: #{residual_block.1} parent=0 // pred_check
    _
  $region3: #{residual_block.1} parent=0 // pred_check_branch
    %14 = sbr.rel (0) target = $region5
  $region4: #{residual_block.1} parent=0 // pred_region
    _
  $region5: #{residual_block.1} parent=0 // pred_fallthru
    _
  // Predicated region
  $region6: #{residual_block.1} parent=0 // pred_check
    _
  $region7: #{residual_block.1} parent=0 // pred_check_branch
    %16 = sbr.rel (0) target = $region9
  $region8: #{residual_block.1} parent=0 // pred_region
    _
  $region9: #{residual_block.1} parent=0 // pred_fallthru
    _
  // Predicated region
  $region10: #{residual_block.1} parent=0 // pred_check
    _
  $region11: #{residual_block.1} parent=0 // pred_check_branch
    %18 = sbr.rel (0) target = $region13
  $region12: #{residual_block.1} parent=0 // pred_region
    _
  $region13: #{residual_block.1} parent=0 // pred_fallthru
    _
  // Predicated region
  $region14: #{residual_block.1} parent=0 // pred_check
    _
  $region15: #{residual_block.1} parent=0 // pred_check_branch
    %20 = sbr.rel (0) target = $region17
  $region16: #{residual_block.1} parent=0 // pred_region
    _
  $region17: #{residual_block.1} parent=0 // pred_fallthru
    _
  // Predicated region
  $region18: #{residual_block.1} parent=0 // pred_check
    _
  $region19: #{residual_block.1} parent=0 // pred_check_branch
    %22 = sbr.rel (0) target = $region21
  $region20: #{residual_block.1} parent=0 // pred_region
    _
  $region21: #{residual_block.1} parent=0 // pred_fallthru
    _
  // Predicated region
  $region22: #{residual_block.1} parent=0 // pred_check
    _
  $region23: #{residual_block.1} parent=0 // pred_check_branch
    %24 = sbr.rel (0) target = $region25
  $region24: #{residual_block.1} parent=0 // pred_region
    _
  $region25: #{residual_block.1} parent=0 // pred_fallthru
    _
  // Predicated region
  $region26: #{residual_block.1} parent=0 // pred_check
    _
  $region27: #{residual_block.1} parent=0 // pred_check_branch
    %26 = sbr.rel (0) target = $region29
  $region28: #{residual_block.1} parent=0 // pred_region
    _
  $region29: #{residual_block.1} parent=0 // pred_fallthru
    _
  // Predicated region
  $region30: #{residual_block.1} parent=0 // pred_check
    _
  $region31: #{residual_block.1} parent=0 // pred_check_branch
    %28 = sbr.rel (0) target = $region33
  $region32: #{residual_block.1} parent=0 // pred_region
    _
  $region33: #{residual_block.1} parent=0 // pred_fallthru
    _
  %29 = vst [vmem:[#allocation2] sm:$0xff] 0.0
  %30 = vst [vmem:[#allocation2 + $0x8] sm:$0xff] 0.0
  %31 = vst [vmem:[#allocation2 + $0x10] sm:$0xff] 0.0
  %32 = vst [vmem:[#allocation2 + $0x18] sm:$0xff] 0.0
  %33 = vst [vmem:[#allocation2 + $0x20] sm:$0xff] 0.0
  %34 = vst [vmem:[#allocation2 + $0x28] sm:$0xff] 0.0
  %35 = vst [vmem:[#allocation2 + $0x30] sm:$0xff] 0.0
  %vm36 = vcmask 64512
  %37 = vst.msk [vmem:[#allocation2 + $0x38] sm:$0xff] %vm36, 0.0
  %v38 = vld [vmem:[%s0] sm:$0xf]
  %40 = vrot.lane.b32.xlu0 %v38, 19
  %v41 = vpop.permute.xlu0 %40
  %vm43 = vcmask 281752
  %44 = vst.msk [vmem:[#allocation2 + $0x8] sm:$0xf] %vm43, %v41
  %v45 = vld [vmem:[%s0] sm:$0xf]
  %47 = vrot.lane.b32.xlu0 %v45, 21
  %v48 = vpop.permute.xlu0 %47
  %vm50 = vcmask 429352
  %51 = vst.msk [vmem:[#allocation2 + $0x8] sm:$0xf] %vm50, %v48
  %v52 = vld [vmem:[%s0] sm:$0xf]
  %54 = vrot.lane.b32.xlu0 %v52, 23
  %v55 = vpop.permute.xlu0 %54
  %vm57 = vcmask 576952
  %58 = vst.msk [vmem:[#allocation2 + $0x8] sm:$0xf] %vm57, %v55
  %v59 = vld [vmem:[%s0] sm:$0xf]
  %61 = vrot.lane.b32.xlu0 %v59, 25
  %v62 = vpop.permute.xlu0 %61
  %vm64 = vcmask 724552
  %65 = vst.msk [vmem:[#allocation2 + $0x8] sm:$0xf] %vm64, %v62
  %v66 = vld [vmem:[%s0] sm:$0xf]
  %68 = vrot.lane.b32.xlu0 %v66, 27
  %v69 = vpop.permute.xlu0 %68
  %vm71 = vcmask 872152
  %72 = vst.msk [vmem:[#allocation2 + $0x8] sm:$0xf] %vm71, %v69
  %v73 = vld [vmem:[%s0] sm:$0xf]
  %75 = vrot.lane.b32.xlu0 %v73, 29
  %v76 = vpop.permute.xlu0 %75
  %vm78 = vcmask 1019752
  %79 = vst.msk [vmem:[#allocation2 + $0x8] sm:$0xf] %vm78, %v76
  %v80 = vld [vmem:[%s0] sm:$0xf]
  %82 = vrot.lane.b32.xlu0 %v80, 31
  %v83 = vpop.permute.xlu0 %82
  %vm85 = vcmask 1044472
  %86 = vst.msk [vmem:[#allocation2 + $0x8] sm:$0xf] %vm85, %v83
  %vm87 = vcmask 117760
  %88 = vst.msk [vmem:[#allocation2 + $0x10] sm:$0xf] %vm87, %v83
  %v89 = vld [vmem:[%s0] sm:$0xf]
  %91 = vrot.lane.b32.xlu0 %v89, 33
  %v92 = vpop.permute.xlu0 %91
  %vm94 = vcmask 265352
  %95 = vst.msk [vmem:[#allocation2 + $0x10] sm:$0xf] %vm94, %v92
  %v96 = vld [vmem:[%s0 + $0x4] sm:$0xf]
  %98 = vrot.lane.b32.xlu0 %v96, 35
  %v99 = vpop.permute.xlu0 %98
  %vm101 = vcmask 412952
  %102 = vst.msk [vmem:[#allocation2 + $0x10] sm:$0xf] %vm101, %v99
  %v103 = vld [vmem:[%s0 + $0x4] sm:$0xf]
  %105 = vrot.lane.b32.xlu0 %v103, 37
  %v106 = vpop.permute.xlu0 %105
  %vm108 = vcmask 560552
  %109 = vst.msk [vmem:[#allocation2 + $0x10] sm:$0xf] %vm108, %v106
  %v110 = vld [vmem:[%s0 + $0x4] sm:$0xf]
  %112 = vrot.lane.b32.xlu0 %v110, 39
  %v113 = vpop.permute.xlu0 %112
  %vm115 = vcmask 708152
  %116 = vst.msk [vmem:[#allocation2 + $0x10] sm:$0xf] %vm115, %v113
  %v117 = vld [vmem:[%s0 + $0x4] sm:$0xf]
  %119 = vrot.lane.b32.xlu0 %v117, 41
  %v120 = vpop.permute.xlu0 %119
  %vm122 = vcmask 855752
  %123 = vst.msk [vmem:[#allocation2 + $0x10] sm:$0xf] %vm122, %v120
  %v124 = vld [vmem:[%s0 + $0x4] sm:$0xf]
  %126 = vrot.lane.b32.xlu0 %v124, 43
  %v127 = vpop.permute.xlu0 %126
  %vm129 = vcmask 1003352
  %130 = vst.msk [vmem:[#allocation2 + $0x10] sm:$0xf] %vm129, %v127
  %v131 = vld [vmem:[%s0 + $0x4] sm:$0xf]
  %133 = vrot.lane.b32.xlu0 %v131, 45
  %v134 = vpop.permute.xlu0 %133
  %vm136 = vcmask 1044456
  %137 = vst.msk [vmem:[#allocation2 + $0x10] sm:$0xf] %vm136, %v134
  %vm138 = vcmask 101376
  %139 = vst.msk [vmem:[#allocation2 + $0x18] sm:$0xf] %vm138, %v134
  %v140 = vld [vmem:[%s0 + $0x4] sm:$0xf]
  %142 = vrot.lane.b32.xlu0 %v140, 47
  %v143 = vpop.permute.xlu0 %142
  %vm145 = vcmask 248952
  %146 = vst.msk [vmem:[#allocation2 + $0x18] sm:$0xf] %vm145, %v143
  %v147 = vld [vmem:[%s0 + $0x4] sm:$0xf]
  %149 = vrot.lane.b32.xlu0 %v147, 49
  %v150 = vpop.permute.xlu0 %149
  %vm152 = vcmask 396552
  %153 = vst.msk [vmem:[#allocation2 + $0x18] sm:$0xf] %vm152, %v150
  %v154 = vld [vmem:[%s0 + $0x8] sm:$0xf]
  %156 = vrot.lane.b32.xlu0 %v154, 87
  %v157 = vpop.permute.xlu0 %156
  %vm159 = vcmask 839352
  %160 = vst.msk [vmem:[#allocation2 + $0x18] sm:$0xf] %vm159, %v157
  %v161 = vld [vmem:[%s0 + $0x8] sm:$0xf]
  %163 = vrot.lane.b32.xlu0 %v161, 89
  %v164 = vpop.permute.xlu0 %163
  %vm166 = vcmask 986952
  %167 = vst.msk [vmem:[#allocation2 + $0x18] sm:$0xf] %vm166, %v164
  %v168 = vld [vmem:[%s0 + $0x8] sm:$0xf]
  %170 = vrot.lane.b32.xlu0 %v168, 91
  %v171 = vpop.permute.xlu0 %170
  %vm173 = vcmask 1044440
  %174 = vst.msk [vmem:[#allocation2 + $0x18] sm:$0xf] %vm173, %v171
  %vm175 = vcmask 84992
  %176 = vst.msk [vmem:[#allocation2 + $0x20] sm:$0xf] %vm175, %v171
  %v177 = vld [vmem:[%s0 + $0x8] sm:$0xf]
  %179 = vrot.lane.b32.xlu0 %v177, 93
  %v180 = vpop.permute.xlu0 %179
  %vm182 = vcmask 232552
  %183 = vst.msk [vmem:[#allocation2 + $0x20] sm:$0xf] %vm182, %v180
  %v184 = vld [vmem:[%s0 + $0x8] sm:$0xf]
  %186 = vrot.lane.b32.xlu0 %v184, 95
  %v187 = vpop.permute.xlu0 %186
  %vm189 = vcmask 380152
  %190 = vst.msk [vmem:[#allocation2 + $0x20] sm:$0xf] %vm189, %v187
  %v191 = vld [vmem:[%s0 + $0x8] sm:$0xf]
  %193 = vrot.lane.b32.xlu0 %v191, 97
  %v194 = vpop.permute.xlu0 %193
  %vm196 = vcmask 527752
  %197 = vst.msk [vmem:[#allocation2 + $0x20] sm:$0xf] %vm196, %v194
  %v198 = vld [vmem:[%s0 + $0x8] sm:$0xf]
  %200 = vrot.lane.b32.xlu0 %v198, 99
  %v201 = vpop.permute.xlu0 %200
  %vm203 = vcmask 675352
  %204 = vst.msk [vmem:[#allocation2 + $0x20] sm:$0xf] %vm203, %v201
  %v205 = vld [vmem:[%s0 + $0x8] sm:$0xf]
  %207 = vrot.lane.b32.xlu0 %v205, 101
  %v208 = vpop.permute.xlu0 %207
  %vm210 = vcmask 822952
  %211 = vst.msk [vmem:[#allocation2 + $0x20] sm:$0xf] %vm210, %v208
  %v212 = vld [vmem:[%s0 + $0xc] sm:$0xf]
  %214 = vrot.lane.b32.xlu0 %v212, 103
  %v215 = vpop.permute.xlu0 %214
  %vm217 = vcmask 970552
  %218 = vst.msk [vmem:[#allocation2 + $0x20] sm:$0xf] %vm217, %v215
  %v219 = vld [vmem:[%s0 + $0xc] sm:$0xf]
  %221 = vrot.lane.b32.xlu0 %v219, 105
  %v222 = vpop.permute.xlu0 %221
  %vm224 = vcmask 1044424
  %225 = vst.msk [vmem:[#allocation2 + $0x20] sm:$0xf] %vm224, %v222
  %vm226 = vcmask 68608
  %227 = vst.msk [vmem:[#allocation2 + $0x28] sm:$0xf] %vm226, %v222
  %v228 = vld [vmem:[%s0 + $0xc] sm:$0xf]
  %230 = vrot.lane.b32.xlu0 %v228, 107
  %v231 = vpop.permute.xlu0 %230
  %vm233 = vcmask 216152
  %234 = vst.msk [vmem:[#allocation2 + $0x28] sm:$0xf] %vm233, %v231
  %v235 = vld [vmem:[%s0 + $0xc] sm:$0xf]
  %237 = vrot.lane.b32.xlu0 %v235, 109
  %v238 = vpop.permute.xlu0 %237
  %vm240 = vcmask 363752
  %241 = vst.msk [vmem:[#allocation2 + $0x28] sm:$0xf] %vm240, %v238
  %v242 = vld [vmem:[%s0 + $0xc] sm:$0xf]
  %244 = vrot.lane.b32.xlu0 %v242, 111
  %v245 = vpop.permute.xlu0 %244
  %vm247 = vcmask 511352
  %248 = vst.msk [vmem:[#allocation2 + $0x28] sm:$0xf] %vm247, %v245
  %v249 = vld [vmem:[%s0 + $0xc] sm:$0xf]
  %251 = vrot.lane.b32.xlu0 %v249, 113
  %v252 = vpop.permute.xlu0 %251
  %vm254 = vcmask 658952
  %255 = vst.msk [vmem:[#allocation2 + $0x28] sm:$0xf] %vm254, %v252
  %v256 = vld [vmem:[%s0 + $0xc] sm:$0xf]
  %258 = vrot.lane.b32.xlu0 %v256, 115
  %v259 = vpop.permute.xlu0 %258
  %vm261 = vcmask 806552
  %262 = vst.msk [vmem:[#allocation2 + $0x28] sm:$0xf] %vm261, %v259
  %v263 = vld [vmem:[%s0 + $0xc] sm:$0xf]
  %265 = vrot.lane.b32.xlu0 %v263, 117
  %v266 = vpop.permute.xlu0 %265
  %vm268 = vcmask 954152
  %269 = vst.msk [vmem:[#allocation2 + $0x28] sm:$0xf] %vm268, %v266
  %v270 = vld [vmem:[%s1] sm:$0x3f]
  %v271 = vld [vmem:[#allocation2] sm:$0xff]
  %v272 = vld [vmem:[#allocation2 + $0x8] sm:$0xff]
  %v273 = vld [vmem:[#allocation2 + $0x10] sm:$0xff]
  %v274 = vld [vmem:[#allocation2 + $0x18] sm:$0xff]
  %v275 = vld [vmem:[#allocation2 + $0x20] sm:$0xff]
  %v276 = vld [vmem:[#allocation2 + $0x28] sm:$0xff]
  %v277 = vld [vmem:[%s2] sm:$0xff]
  %279 = vrot.lane.b32.xlu0 %v277, 120
  %v280 = vpop.permute.xlu0 %279
  %287 = vrot.lane.b32.xlu0 %v271, 18
  %v288 = vpop.permute.xlu0 %287
  %289 = vrot.lane.b32.xlu0 %v272, 18
  %v290 = vpop.permute.xlu0 %289
  %291 = vrot.lane.b32.xlu0 %v273, 18
  %v292 = vpop.permute.xlu0 %291
  %293 = vrot.lane.b32.xlu0 %v274, 18
  %v294 = vpop.permute.xlu0 %293
  %295 = vrot.lane.b32.xlu0 %v275, 18
  %v296 = vpop.permute.xlu0 %295
  %297 = vrot.lane.b32.xlu0 %v276, 18
  %v298 = vpop.permute.xlu0 %297
  %vm299 = vcmask 146432
  %v300 = vsel %vm299, %v288, %v290
  %v301 = vsel %vm299, %v290, %v292
  %v302 = vsel %vm299, %v292, %v294
  %v303 = vsel %vm299, %v294, %v296
  %v304 = vsel %vm299, %v296, %v298
  %v311 = vsel %vm36, %v280, 0
  %313 = vmatprep.subr.mxu0 0.0
  %314 = vmatpush1.msra.mxu0 0.0
  %315 = vmatprep.subr.mxu0 0.0
  %316 = vmatpush1.msra.mxu0 0.0
  %317 = vmatprep.subr.mxu0 0.0
  %318 = vmatpush1.msra.mxu0 0.0
  %319 = vmatprep.subr.mxu0 0.0
  %320 = vmatpush1.msra.mxu0 0.0
  %321 = vmatprep.subr.mxu0 0.0
  %322 = vmatpush1.msra.mxu0 0.0
  %323 = vmatprep.subr.mxu0 0.0
  %324 = vmatpush1.msra.mxu0 0.0
  %325 = vmatprep.subr.mxu0 0.0
  %326 = vmatpush1.msra.mxu0 0.0
  %327 = vmatprep.subr.mxu0 0.0
  %328 = vmatpush1.msra.mxu0 0.0
  %329 = vmatprep.subr.mxu0 0.0
  %330 = vmatpush1.msra.mxu0 0.0
  %331 = vmatprep.subr.mxu0 0.0
  %332 = vmatpush1.msra.mxu0 0.0
  %333 = vmatprep.subr.mxu0 0.0
  %334 = vmatpush1.msra.mxu0 0.0
  %335 = vmatprep.subr.mxu0 0.0
  %336 = vmatpush1.msra.mxu0 0.0
  %337 = vmatprep.subr.mxu0 0.0
  %338 = vmatpush1.msra.mxu0 0.0
  %339 = vmatprep.subr.mxu0 0.0
  %340 = vmatpush1.msra.mxu0 0.0
  %341 = vmatprep.subr.mxu0 0.0
  %342 = vmatpush1.msra.mxu0 0.0
  %343 = vmatprep.subr.mxu0 %v301
  %344 = vmatpush1.msra.mxu0 %v300
  %345 = vmatprep.subr.mxu0 0.0
  %346 = vmatpush2.msra.mxu0 0.0
  %347 = vmatprep.subr.mxu0 0.0
  %348 = vmatpush2.msra.mxu0 0.0
  %349 = vmatprep.subr.mxu0 0.0
  %350 = vmatpush2.msra.mxu0 0.0
  %351 = vmatprep.subr.mxu0 0.0
  %352 = vmatpush2.msra.mxu0 0.0
  %353 = vmatprep.subr.mxu0 0.0
  %354 = vmatpush2.msra.mxu0 0.0
  %355 = vmatprep.subr.mxu0 0.0
  %356 = vmatpush2.msra.mxu0 0.0
  %357 = vmatprep.subr.mxu0 0.0
  %358 = vmatpush2.msra.mxu0 0.0
  %359 = vmatprep.subr.mxu0 0.0
  %360 = vmatpush2.msra.mxu0 0.0
  %361 = vmatprep.subr.mxu0 0.0
  %362 = vmatpush2.msra.mxu0 0.0
  %363 = vmatprep.subr.mxu0 0.0
  %364 = vmatpush2.msra.mxu0 0.0
  %365 = vmatprep.subr.mxu0 0.0
  %366 = vmatpush2.msra.mxu0 0.0
  %367 = vmatprep.subr.mxu0 0.0
  %368 = vmatpush2.msra.mxu0 0.0
  %369 = vmatprep.subr.mxu0 0.0
  %370 = vmatpush2.msra.mxu0 0.0
  %371 = vmatprep.subr.mxu0 0.0
  %372 = vmatpush2.msra.mxu0 0.0
  %373 = vmatprep.subr.mxu0 0.0
  %374 = vmatpush2.msra.mxu0 0.0
  %375 = vmatprep.subr.mxu0 0.0
  %376 = vmatpush2.msra.mxu0 0.0
  %377 = vmatprep.mubr.f32.mxu0 0.0
  %378 = vmatmul.mubr.f32.gmra.mxu0 %v311
  %v379 = vpop.f32.mrf.mxu0
  %v380 = vadd.f32 0.0, %v379
  %v381 = vpop.f32.mrf.mxu0
  %v382 = vadd.f32 0.0, %v381
  %383 = vdwg.mxu0
  %384 = vmatprep.subr.mxu0 0.0
  %385 = vmatpush1.msra.mxu0 0.0
  %386 = vmatprep.subr.mxu0 0.0
  %387 = vmatpush1.msra.mxu0 0.0
  %388 = vmatprep.subr.mxu0 0.0
  %389 = vmatpush1.msra.mxu0 0.0
  %390 = vmatprep.subr.mxu0 0.0
  %391 = vmatpush1.msra.mxu0 0.0
  %392 = vmatprep.subr.mxu0 0.0
  %393 = vmatpush1.msra.mxu0 0.0
  %394 = vmatprep.subr.mxu0 0.0
  %395 = vmatpush1.msra.mxu0 0.0
  %396 = vmatprep.subr.mxu0 0.0
  %397 = vmatpush1.msra.mxu0 0.0
  %398 = vmatprep.subr.mxu0 0.0
  %399 = vmatpush1.msra.mxu0 0.0
  %400 = vmatprep.subr.mxu0 0.0
  %401 = vmatpush1.msra.mxu0 0.0
  %402 = vmatprep.subr.mxu0 0.0
  %403 = vmatpush1.msra.mxu0 0.0
  %404 = vmatprep.subr.mxu0 0.0
  %405 = vmatpush1.msra.mxu0 0.0
  %406 = vmatprep.subr.mxu0 0.0
  %407 = vmatpush1.msra.mxu0 0.0
  %408 = vmatprep.subr.mxu0 0.0
  %409 = vmatpush1.msra.mxu0 0.0
  %410 = vmatprep.subr.mxu0 0.0
  %411 = vmatpush1.msra.mxu0 0.0
  %412 = vmatprep.subr.mxu0 0.0
  %413 = vmatpush1.msra.mxu0 0.0
  %414 = vmatprep.subr.mxu0 %v303
  %415 = vmatpush1.msra.mxu0 %v302
  %416 = vmatprep.subr.mxu0 0.0
  %417 = vmatpush2.msra.mxu0 0.0
  %418 = vmatprep.subr.mxu0 0.0
  %419 = vmatpush2.msra.mxu0 0.0
  %420 = vmatprep.subr.mxu0 0.0
  %421 = vmatpush2.msra.mxu0 0.0
  %422 = vmatprep.subr.mxu0 0.0
  %423 = vmatpush2.msra.mxu0 0.0
  %424 = vmatprep.subr.mxu0 0.0
  %425 = vmatpush2.msra.mxu0 0.0
  %426 = vmatprep.subr.mxu0 0.0
  %427 = vmatpush2.msra.mxu0 0.0
  %428 = vmatprep.subr.mxu0 0.0
  %429 = vmatpush2.msra.mxu0 0.0
  %430 = vmatprep.subr.mxu0 0.0
  %431 = vmatpush2.msra.mxu0 0.0
  %432 = vmatprep.subr.mxu0 0.0
  %433 = vmatpush2.msra.mxu0 0.0
  %434 = vmatprep.subr.mxu0 0.0
  %435 = vmatpush2.msra.mxu0 0.0
  %436 = vmatprep.subr.mxu0 0.0
  %437 = vmatpush2.msra.mxu0 0.0
  %438 = vmatprep.subr.mxu0 0.0
  %439 = vmatpush2.msra.mxu0 0.0
  %440 = vmatprep.subr.mxu0 0.0
  %441 = vmatpush2.msra.mxu0 0.0
  %442 = vmatprep.subr.mxu0 0.0
  %443 = vmatpush2.msra.mxu0 0.0
  %444 = vmatprep.subr.mxu0 0.0
  %445 = vmatpush2.msra.mxu0 0.0
  %446 = vmatprep.subr.mxu0 0.0
  %447 = vmatpush2.msra.mxu0 0.0
  %448 = vmatprep.mubr.f32.mxu0 0.0
  %449 = vmatmul.mubr.f32.gmra.mxu0 %v311
  %v450 = vpop.f32.mrf.mxu0
  %v451 = vadd.f32 0.0, %v450
  %v452 = vpop.f32.mrf.mxu0
  %v453 = vadd.f32 0.0, %v452
  %454 = vdwg.mxu0
  %455 = vmatprep.subr.mxu0 0.0
  %456 = vmatpush1.msra.mxu0 0.0
  %457 = vmatprep.subr.mxu0 0.0
  %458 = vmatpush1.msra.mxu0 0.0
  %459 = vmatprep.subr.mxu0 0.0
  %460 = vmatpush1.msra.mxu0 0.0
  %461 = vmatprep.subr.mxu0 0.0
  %462 = vmatpush1.msra.mxu0 0.0
  %463 = vmatprep.subr.mxu0 0.0
  %464 = vmatpush1.msra.mxu0 0.0
  %465 = vmatprep.subr.mxu0 0.0
  %466 = vmatpush1.msra.mxu0 0.0
  %467 = vmatprep.subr.mxu0 0.0
  %468 = vmatpush1.msra.mxu0 0.0
  %469 = vmatprep.subr.mxu0 0.0
  %470 = vmatpush1.msra.mxu0 0.0
  %471 = vmatprep.subr.mxu0 0.0
  %472 = vmatpush1.msra.mxu0 0.0
  %473 = vmatprep.subr.mxu0 0.0
  %474 = vmatpush1.msra.mxu0 0.0
  %475 = vmatprep.subr.mxu0 0.0
  %476 = vmatpush1.msra.mxu0 0.0
  %477 = vmatprep.subr.mxu0 0.0
  %478 = vmatpush1.msra.mxu0 0.0
  %479 = vmatprep.subr.mxu0 0.0
  %480 = vmatpush1.msra.mxu0 0.0
  %481 = vmatprep.subr.mxu0 0.0
  %482 = vmatpush1.msra.mxu0 0.0
  %483 = vmatprep.subr.mxu0 0.0
  %484 = vmatpush1.msra.mxu0 0.0
  %485 = vmatprep.subr.mxu0 %v298
  %486 = vmatpush1.msra.mxu0 %v304
  %487 = vmatprep.subr.mxu0 0.0
  %488 = vmatpush2.msra.mxu0 0.0
  %489 = vmatprep.subr.mxu0 0.0
  %490 = vmatpush2.msra.mxu0 0.0
  %491 = vmatprep.subr.mxu0 0.0
  %492 = vmatpush2.msra.mxu0 0.0
  %493 = vmatprep.subr.mxu0 0.0
  %494 = vmatpush2.msra.mxu0 0.0
  %495 = vmatprep.subr.mxu0 0.0
  %496 = vmatpush2.msra.mxu0 0.0
  %497 = vmatprep.subr.mxu0 0.0
  %498 = vmatpush2.msra.mxu0 0.0
  %499 = vmatprep.subr.mxu0 0.0
  %500 = vmatpush2.msra.mxu0 0.0
  %501 = vmatprep.subr.mxu0 0.0
  %502 = vmatpush2.msra.mxu0 0.0
  %503 = vmatprep.subr.mxu0 0.0
  %504 = vmatpush2.msra.mxu0 0.0
  %505 = vmatprep.subr.mxu0 0.0
  %506 = vmatpush2.msra.mxu0 0.0
  %507 = vmatprep.subr.mxu0 0.0
  %508 = vmatpush2.msra.mxu0 0.0
  %509 = vmatprep.subr.mxu0 0.0
  %510 = vmatpush2.msra.mxu0 0.0
  %511 = vmatprep.subr.mxu0 0.0
  %512 = vmatpush2.msra.mxu0 0.0
  %513 = vmatprep.subr.mxu0 0.0
  %514 = vmatpush2.msra.mxu0 0.0
  %515 = vmatprep.subr.mxu0 0.0
  %516 = vmatpush2.msra.mxu0 0.0
  %517 = vmatprep.subr.mxu0 0.0
  %518 = vmatpush2.msra.mxu0 0.0
  %519 = vmatprep.mubr.f32.mxu0 0.0
  %520 = vmatmul.mubr.f32.gmra.mxu0 %v311
  %v521 = vpop.f32.mrf.mxu0
  %v522 = vadd.f32 0.0, %v521
  %v523 = vpop.f32.mrf.mxu0
  %v524 = vadd.f32 0.0, %v523
  %525 = vdwg.mxu0
  %526 = vrot.lane.b32.xlu0 %v271, 19
  %v527 = vpop.permute.xlu0 %526
  %528 = vrot.lane.b32.xlu0 %v272, 19
  %v529 = vpop.permute.xlu0 %528
  %530 = vrot.lane.b32.xlu0 %v273, 19
  %v531 = vpop.permute.xlu0 %530
  %532 = vrot.lane.b32.xlu0 %v274, 19
  %v533 = vpop.permute.xlu0 %532
  %534 = vrot.lane.b32.xlu0 %v275, 19
  %v535 = vpop.permute.xlu0 %534
  %536 = vrot.lane.b32.xlu0 %v276, 19
  %v537 = vpop.permute.xlu0 %536
  %vm538 = vcmask 154624
  %v539 = vsel %vm538, %v527, %v529
  %v540 = vsel %vm538, %v529, %v531
  %v541 = vsel %vm538, %v531, %v533
  %v542 = vsel %vm538, %v533, %v535
  %v543 = vsel %vm538, %v535, %v537
  %v550 = vsel %vm36, %v277, 0
  %552 = vmatprep.subr.mxu0 0.0
  %553 = vmatpush1.msra.mxu0 0.0
  %554 = vmatprep.subr.mxu0 0.0
  %555 = vmatpush1.msra.mxu0 0.0
  %556 = vmatprep.subr.mxu0 0.0
  %557 = vmatpush1.msra.mxu0 0.0
  %558 = vmatprep.subr.mxu0 0.0
  %559 = vmatpush1.msra.mxu0 0.0
  %560 = vmatprep.subr.mxu0 0.0
  %561 = vmatpush1.msra.mxu0 0.0
  %562 = vmatprep.subr.mxu0 0.0
  %563 = vmatpush1.msra.mxu0 0.0
  %564 = vmatprep.subr.mxu0 0.0
  %565 = vmatpush1.msra.mxu0 0.0
  %566 = vmatprep.subr.mxu0 0.0
  %567 = vmatpush1.msra.mxu0 0.0
  %568 = vmatprep.subr.mxu0 0.0
  %569 = vmatpush1.msra.mxu0 0.0
  %570 = vmatprep.subr.mxu0 0.0
  %571 = vmatpush1.msra.mxu0 0.0
  %572 = vmatprep.subr.mxu0 0.0
  %573 = vmatpush1.msra.mxu0 0.0
  %574 = vmatprep.subr.mxu0 0.0
  %575 = vmatpush1.msra.mxu0 0.0
  %576 = vmatprep.subr.mxu0 0.0
  %577 = vmatpush1.msra.mxu0 0.0
  %578 = vmatprep.subr.mxu0 0.0
  %579 = vmatpush1.msra.mxu0 0.0
  %580 = vmatprep.subr.mxu0 0.0
  %581 = vmatpush1.msra.mxu0 0.0
  %582 = vmatprep.subr.mxu0 %v540
  %583 = vmatpush1.msra.mxu0 %v539
  %584 = vmatprep.subr.mxu0 0.0
  %585 = vmatpush2.msra.mxu0 0.0
  %586 = vmatprep.subr.mxu0 0.0
  %587 = vmatpush2.msra.mxu0 0.0
  %588 = vmatprep.subr.mxu0 0.0
  %589 = vmatpush2.msra.mxu0 0.0
  %590 = vmatprep.subr.mxu0 0.0
  %591 = vmatpush2.msra.mxu0 0.0
  %592 = vmatprep.subr.mxu0 0.0
  %593 = vmatpush2.msra.mxu0 0.0
  %594 = vmatprep.subr.mxu0 0.0
  %595 = vmatpush2.msra.mxu0 0.0
  %596 = vmatprep.subr.mxu0 0.0
  %597 = vmatpush2.msra.mxu0 0.0
  %598 = vmatprep.subr.mxu0 0.0
  %599 = vmatpush2.msra.mxu0 0.0
  %600 = vmatprep.subr.mxu0 0.0
  %601 = vmatpush2.msra.mxu0 0.0
  %602 = vmatprep.subr.mxu0 0.0
  %603 = vmatpush2.msra.mxu0 0.0
  %604 = vmatprep.subr.mxu0 0.0
  %605 = vmatpush2.msra.mxu0 0.0
  %606 = vmatprep.subr.mxu0 0.0
  %607 = vmatpush2.msra.mxu0 0.0
  %608 = vmatprep.subr.mxu0 0.0
  %609 = vmatpush2.msra.mxu0 0.0
  %610 = vmatprep.subr.mxu0 0.0
  %611 = vmatpush2.msra.mxu0 0.0
  %612 = vmatprep.subr.mxu0 0.0
  %613 = vmatpush2.msra.mxu0 0.0
  %614 = vmatprep.subr.mxu0 0.0
  %615 = vmatpush2.msra.mxu0 0.0
  %616 = vmatprep.mubr.f32.mxu0 0.0
  %617 = vmatmul.mubr.f32.gmra.mxu0 %v550
  %v618 = vpop.f32.mrf.mxu0
  %v619 = vadd.f32 %v380, %v618
  %v620 = vpop.f32.mrf.mxu0
  %v621 = vadd.f32 %v382, %v620
  %622 = vdwg.mxu0
  %623 = vmatprep.subr.mxu0 0.0
  %624 = vmatpush1.msra.mxu0 0.0
  %625 = vmatprep.subr.mxu0 0.0
  %626 = vmatpush1.msra.mxu0 0.0
  %627 = vmatprep.subr.mxu0 0.0
  %628 = vmatpush1.msra.mxu0 0.0
  %629 = vmatprep.subr.mxu0 0.0
  %630 = vmatpush1.msra.mxu0 0.0
  %631 = vmatprep.subr.mxu0 0.0
  %632 = vmatpush1.msra.mxu0 0.0
  %633 = vmatprep.subr.mxu0 0.0
  %634 = vmatpush1.msra.mxu0 0.0
  %635 = vmatprep.subr.mxu0 0.0
  %636 = vmatpush1.msra.mxu0 0.0
  %637 = vmatprep.subr.mxu0 0.0
  %638 = vmatpush1.msra.mxu0 0.0
  %639 = vmatprep.subr.mxu0 0.0
  %640 = vmatpush1.msra.mxu0 0.0
  %641 = vmatprep.subr.mxu0 0.0
  %642 = vmatpush1.msra.mxu0 0.0
  %643 = vmatprep.subr.mxu0 0.0
  %644 = vmatpush1.msra.mxu0 0.0
  %645 = vmatprep.subr.mxu0 0.0
  %646 = vmatpush1.msra.mxu0 0.0
  %647 = vmatprep.subr.mxu0 0.0
  %648 = vmatpush1.msra.mxu0 0.0
  %649 = vmatprep.subr.mxu0 0.0
  %650 = vmatpush1.msra.mxu0 0.0
  %651 = vmatprep.subr.mxu0 0.0
  %652 = vmatpush1.msra.mxu0 0.0
  %653 = vmatprep.subr.mxu0 %v542
  %654 = vmatpush1.msra.mxu0 %v541
  %655 = vmatprep.subr.mxu0 0.0
  %656 = vmatpush2.msra.mxu0 0.0
  %657 = vmatprep.subr.mxu0 0.0
  %658 = vmatpush2.msra.mxu0 0.0
  %659 = vmatprep.subr.mxu0 0.0
  %660 = vmatpush2.msra.mxu0 0.0
  %661 = vmatprep.subr.mxu0 0.0
  %662 = vmatpush2.msra.mxu0 0.0
  %663 = vmatprep.subr.mxu0 0.0
  %664 = vmatpush2.msra.mxu0 0.0
  %665 = vmatprep.subr.mxu0 0.0
  %666 = vmatpush2.msra.mxu0 0.0
  %667 = vmatprep.subr.mxu0 0.0
  %668 = vmatpush2.msra.mxu0 0.0
  %669 = vmatprep.subr.mxu0 0.0
  %670 = vmatpush2.msra.mxu0 0.0
  %671 = vmatprep.subr.mxu0 0.0
  %672 = vmatpush2.msra.mxu0 0.0
  %673 = vmatprep.subr.mxu0 0.0
  %674 = vmatpush2.msra.mxu0 0.0
  %675 = vmatprep.subr.mxu0 0.0
  %676 = vmatpush2.msra.mxu0 0.0
  %677 = vmatprep.subr.mxu0 0.0
  %678 = vmatpush2.msra.mxu0 0.0
  %679 = vmatprep.subr.mxu0 0.0
  %680 = vmatpush2.msra.mxu0 0.0
  %681 = vmatprep.subr.mxu0 0.0
  %682 = vmatpush2.msra.mxu0 0.0
  %683 = vmatprep.subr.mxu0 0.0
  %684 = vmatpush2.msra.mxu0 0.0
  %685 = vmatprep.subr.mxu0 0.0
  %686 = vmatpush2.msra.mxu0 0.0
  %687 = vmatprep.mubr.f32.mxu0 0.0
  %688 = vmatmul.mubr.f32.gmra.mxu0 %v550
  %v689 = vpop.f32.mrf.mxu0
  %v690 = vadd.f32 %v451, %v689
  %v691 = vpop.f32.mrf.mxu0
  %v692 = vadd.f32 %v453, %v691
  %693 = vdwg.mxu0
  %694 = vmatprep.subr.mxu0 0.0
  %695 = vmatpush1.msra.mxu0 0.0
  %696 = vmatprep.subr.mxu0 0.0
  %697 = vmatpush1.msra.mxu0 0.0
  %698 = vmatprep.subr.mxu0 0.0
  %699 = vmatpush1.msra.mxu0 0.0
  %700 = vmatprep.subr.mxu0 0.0
  %701 = vmatpush1.msra.mxu0 0.0
  %702 = vmatprep.subr.mxu0 0.0
  %703 = vmatpush1.msra.mxu0 0.0
  %704 = vmatprep.subr.mxu0 0.0
  %705 = vmatpush1.msra.mxu0 0.0
  %706 = vmatprep.subr.mxu0 0.0
  %707 = vmatpush1.msra.mxu0 0.0
  %708 = vmatprep.subr.mxu0 0.0
  %709 = vmatpush1.msra.mxu0 0.0
  %710 = vmatprep.subr.mxu0 0.0
  %711 = vmatpush1.msra.mxu0 0.0
  %712 = vmatprep.subr.mxu0 0.0
  %713 = vmatpush1.msra.mxu0 0.0
  %714 = vmatprep.subr.mxu0 0.0
  %715 = vmatpush1.msra.mxu0 0.0
  %716 = vmatprep.subr.mxu0 0.0
  %717 = vmatpush1.msra.mxu0 0.0
  %718 = vmatprep.subr.mxu0 0.0
  %719 = vmatpush1.msra.mxu0 0.0
  %720 = vmatprep.subr.mxu0 0.0
  %721 = vmatpush1.msra.mxu0 0.0
  %722 = vmatprep.subr.mxu0 0.0
  %723 = vmatpush1.msra.mxu0 0.0
  %724 = vmatprep.subr.mxu0 %v537
  %725 = vmatpush1.msra.mxu0 %v543
  %726 = vmatprep.subr.mxu0 0.0
  %727 = vmatpush2.msra.mxu0 0.0
  %728 = vmatprep.subr.mxu0 0.0
  %729 = vmatpush2.msra.mxu0 0.0
  %730 = vmatprep.subr.mxu0 0.0
  %731 = vmatpush2.msra.mxu0 0.0
  %732 = vmatprep.subr.mxu0 0.0
  %733 = vmatpush2.msra.mxu0 0.0
  %734 = vmatprep.subr.mxu0 0.0
  %735 = vmatpush2.msra.mxu0 0.0
  %736 = vmatprep.subr.mxu0 0.0
  %737 = vmatpush2.msra.mxu0 0.0
  %738 = vmatprep.subr.mxu0 0.0
  %739 = vmatpush2.msra.mxu0 0.0
  %740 = vmatprep.subr.mxu0 0.0
  %741 = vmatpush2.msra.mxu0 0.0
  %742 = vmatprep.subr.mxu0 0.0
  %743 = vmatpush2.msra.mxu0 0.0
  %744 = vmatprep.subr.mxu0 0.0
  %745 = vmatpush2.msra.mxu0 0.0
  %746 = vmatprep.subr.mxu0 0.0
  %747 = vmatpush2.msra.mxu0 0.0
  %748 = vmatprep.subr.mxu0 0.0
  %749 = vmatpush2.msra.mxu0 0.0
  %750 = vmatprep.subr.mxu0 0.0
  %751 = vmatpush2.msra.mxu0 0.0
  %752 = vmatprep.subr.mxu0 0.0
  %753 = vmatpush2.msra.mxu0 0.0
  %754 = vmatprep.subr.mxu0 0.0
  %755 = vmatpush2.msra.mxu0 0.0
  %756 = vmatprep.subr.mxu0 0.0
  %757 = vmatpush2.msra.mxu0 0.0
  %758 = vmatprep.mubr.f32.mxu0 0.0
  %759 = vmatmul.mubr.f32.gmra.mxu0 %v550
  %v760 = vpop.f32.mrf.mxu0
  %v761 = vadd.f32 %v522, %v760
  %v762 = vpop.f32.mrf.mxu0
  %v763 = vadd.f32 %v524, %v762
  %764 = vdwg.mxu0
  %765 = vrot.lane.b32.xlu0 %v277, 112
  %v766 = vpop.permute.xlu0 %765
  %767 = vrot.lane.b32.xlu0 %v271, 17
  %v768 = vpop.permute.xlu0 %767
  %769 = vrot.lane.b32.xlu0 %v272, 17
  %v770 = vpop.permute.xlu0 %769
  %771 = vrot.lane.b32.xlu0 %v273, 17
  %v772 = vpop.permute.xlu0 %771
  %773 = vrot.lane.b32.xlu0 %v274, 17
  %v774 = vpop.permute.xlu0 %773
  %775 = vrot.lane.b32.xlu0 %v275, 17
  %v776 = vpop.permute.xlu0 %775
  %777 = vrot.lane.b32.xlu0 %v276, 17
  %v778 = vpop.permute.xlu0 %777
  %vm779 = vcmask 138240
  %v780 = vsel %vm779, %v768, %v770
  %v781 = vsel %vm779, %v770, %v772
  %v782 = vsel %vm779, %v772, %v774
  %v783 = vsel %vm779, %v774, %v776
  %v784 = vsel %vm779, %v776, %v778
  %v791 = vsel %vm36, %v766, 0
  %793 = vmatprep.subr.mxu0 0.0
  %794 = vmatpush1.msra.mxu0 0.0
  %795 = vmatprep.subr.mxu0 0.0
  %796 = vmatpush1.msra.mxu0 0.0
  %797 = vmatprep.subr.mxu0 0.0
  %798 = vmatpush1.msra.mxu0 0.0
  %799 = vmatprep.subr.mxu0 0.0
  %800 = vmatpush1.msra.mxu0 0.0
  %801 = vmatprep.subr.mxu0 0.0
  %802 = vmatpush1.msra.mxu0 0.0
  %803 = vmatprep.subr.mxu0 0.0
  %804 = vmatpush1.msra.mxu0 0.0
  %805 = vmatprep.subr.mxu0 0.0
  %806 = vmatpush1.msra.mxu0 0.0
  %807 = vmatprep.subr.mxu0 0.0
  %808 = vmatpush1.msra.mxu0 0.0
  %809 = vmatprep.subr.mxu0 0.0
  %810 = vmatpush1.msra.mxu0 0.0
  %811 = vmatprep.subr.mxu0 0.0
  %812 = vmatpush1.msra.mxu0 0.0
  %813 = vmatprep.subr.mxu0 0.0
  %814 = vmatpush1.msra.mxu0 0.0
  %815 = vmatprep.subr.mxu0 0.0
  %816 = vmatpush1.msra.mxu0 0.0
  %817 = vmatprep.subr.mxu0 0.0
  %818 = vmatpush1.msra.mxu0 0.0
  %819 = vmatprep.subr.mxu0 0.0
  %820 = vmatpush1.msra.mxu0 0.0
  %821 = vmatprep.subr.mxu0 0.0
  %822 = vmatpush1.msra.mxu0 0.0
  %823 = vmatprep.subr.mxu0 %v781
  %824 = vmatpush1.msra.mxu0 %v780
  %825 = vmatprep.subr.mxu0 0.0
  %826 = vmatpush2.msra.mxu0 0.0
  %827 = vmatprep.subr.mxu0 0.0
  %828 = vmatpush2.msra.mxu0 0.0
  %829 = vmatprep.subr.mxu0 0.0
  %830 = vmatpush2.msra.mxu0 0.0
  %831 = vmatprep.subr.mxu0 0.0
  %832 = vmatpush2.msra.mxu0 0.0
  %833 = vmatprep.subr.mxu0 0.0
  %834 = vmatpush2.msra.mxu0 0.0
  %835 = vmatprep.subr.mxu0 0.0
  %836 = vmatpush2.msra.mxu0 0.0
  %837 = vmatprep.subr.mxu0 0.0
  %838 = vmatpush2.msra.mxu0 0.0
  %839 = vmatprep.subr.mxu0 0.0
  %840 = vmatpush2.msra.mxu0 0.0
  %841 = vmatprep.subr.mxu0 0.0
  %842 = vmatpush2.msra.mxu0 0.0
  %843 = vmatprep.subr.mxu0 0.0
  %844 = vmatpush2.msra.mxu0 0.0
  %845 = vmatprep.subr.mxu0 0.0
  %846 = vmatpush2.msra.mxu0 0.0
  %847 = vmatprep.subr.mxu0 0.0
  %848 = vmatpush2.msra.mxu0 0.0
  %849 = vmatprep.subr.mxu0 0.0
  %850 = vmatpush2.msra.mxu0 0.0
  %851 = vmatprep.subr.mxu0 0.0
  %852 = vmatpush2.msra.mxu0 0.0
  %853 = vmatprep.subr.mxu0 0.0
  %854 = vmatpush2.msra.mxu0 0.0
  %855 = vmatprep.subr.mxu0 0.0
  %856 = vmatpush2.msra.mxu0 0.0
  %857 = vmatprep.mubr.f32.mxu0 0.0
  %858 = vmatmul.mubr.f32.gmra.mxu0 %v791
  %v859 = vpop.f32.mrf.mxu0
  %v860 = vadd.f32 0.0, %v859
  %v861 = vpop.f32.mrf.mxu0
  %v862 = vadd.f32 0.0, %v861
  %863 = vdwg.mxu0
  %864 = vmatprep.subr.mxu0 0.0
  %865 = vmatpush1.msra.mxu0 0.0
  %866 = vmatprep.subr.mxu0 0.0
  %867 = vmatpush1.msra.mxu0 0.0
  %868 = vmatprep.subr.mxu0 0.0
  %869 = vmatpush1.msra.mxu0 0.0
  %870 = vmatprep.subr.mxu0 0.0
  %871 = vmatpush1.msra.mxu0 0.0
  %872 = vmatprep.subr.mxu0 0.0
  %873 = vmatpush1.msra.mxu0 0.0
  %874 = vmatprep.subr.mxu0 0.0
  %875 = vmatpush1.msra.mxu0 0.0
  %876 = vmatprep.subr.mxu0 0.0
  %877 = vmatpush1.msra.mxu0 0.0
  %878 = vmatprep.subr.mxu0 0.0
  %879 = vmatpush1.msra.mxu0 0.0
  %880 = vmatprep.subr.mxu0 0.0
  %881 = vmatpush1.msra.mxu0 0.0
  %882 = vmatprep.subr.mxu0 0.0
  %883 = vmatpush1.msra.mxu0 0.0
  %884 = vmatprep.subr.mxu0 0.0
  %885 = vmatpush1.msra.mxu0 0.0
  %886 = vmatprep.subr.mxu0 0.0
  %887 = vmatpush1.msra.mxu0 0.0
  %888 = vmatprep.subr.mxu0 0.0
  %889 = vmatpush1.msra.mxu0 0.0
  %890 = vmatprep.subr.mxu0 0.0
  %891 = vmatpush1.msra.mxu0 0.0
  %892 = vmatprep.subr.mxu0 0.0
  %893 = vmatpush1.msra.mxu0 0.0
  %894 = vmatprep.subr.mxu0 %v783
  %895 = vmatpush1.msra.mxu0 %v782
  %896 = vmatprep.subr.mxu0 0.0
  %897 = vmatpush2.msra.mxu0 0.0
  %898 = vmatprep.subr.mxu0 0.0
  %899 = vmatpush2.msra.mxu0 0.0
  %900 = vmatprep.subr.mxu0 0.0
  %901 = vmatpush2.msra.mxu0 0.0
  %902 = vmatprep.subr.mxu0 0.0
  %903 = vmatpush2.msra.mxu0 0.0
  %904 = vmatprep.subr.mxu0 0.0
  %905 = vmatpush2.msra.mxu0 0.0
  %906 = vmatprep.subr.mxu0 0.0
  %907 = vmatpush2.msra.mxu0 0.0
  %908 = vmatprep.subr.mxu0 0.0
  %909 = vmatpush2.msra.mxu0 0.0
  %910 = vmatprep.subr.mxu0 0.0
  %911 = vmatpush2.msra.mxu0 0.0
  %912 = vmatprep.subr.mxu0 0.0
  %913 = vmatpush2.msra.mxu0 0.0
  %914 = vmatprep.subr.mxu0 0.0
  %915 = vmatpush2.msra.mxu0 0.0
  %916 = vmatprep.subr.mxu0 0.0
  %917 = vmatpush2.msra.mxu0 0.0
  %918 = vmatprep.subr.mxu0 0.0
  %919 = vmatpush2.msra.mxu0 0.0
  %920 = vmatprep.subr.mxu0 0.0
  %921 = vmatpush2.msra.mxu0 0.0
  %922 = vmatprep.subr.mxu0 0.0
  %923 = vmatpush2.msra.mxu0 0.0
  %924 = vmatprep.subr.mxu0 0.0
  %925 = vmatpush2.msra.mxu0 0.0
  %926 = vmatprep.subr.mxu0 0.0
  %927 = vmatpush2.msra.mxu0 0.0
  %928 = vmatprep.mubr.f32.mxu0 0.0
  %929 = vmatmul.mubr.f32.gmra.mxu0 %v791
  %v930 = vpop.f32.mrf.mxu0
  %v931 = vadd.f32 0.0, %v930
  %v932 = vpop.f32.mrf.mxu0
  %v933 = vadd.f32 0.0, %v932
  %934 = vdwg.mxu0
  %935 = vmatprep.subr.mxu0 0.0
  %936 = vmatpush1.msra.mxu0 0.0
  %937 = vmatprep.subr.mxu0 0.0
  %938 = vmatpush1.msra.mxu0 0.0
  %939 = vmatprep.subr.mxu0 0.0
  %940 = vmatpush1.msra.mxu0 0.0
  %941 = vmatprep.subr.mxu0 0.0
  %942 = vmatpush1.msra.mxu0 0.0
  %943 = vmatprep.subr.mxu0 0.0
  %944 = vmatpush1.msra.mxu0 0.0
  %945 = vmatprep.subr.mxu0 0.0
  %946 = vmatpush1.msra.mxu0 0.0
  %947 = vmatprep.subr.mxu0 0.0
  %948 = vmatpush1.msra.mxu0 0.0
  %949 = vmatprep.subr.mxu0 0.0
  %950 = vmatpush1.msra.mxu0 0.0
  %951 = vmatprep.subr.mxu0 0.0
  %952 = vmatpush1.msra.mxu0 0.0
  %953 = vmatprep.subr.mxu0 0.0
  %954 = vmatpush1.msra.mxu0 0.0
  %955 = vmatprep.subr.mxu0 0.0
  %956 = vmatpush1.msra.mxu0 0.0
  %957 = vmatprep.subr.mxu0 0.0
  %958 = vmatpush1.msra.mxu0 0.0
  %959 = vmatprep.subr.mxu0 0.0
  %960 = vmatpush1.msra.mxu0 0.0
  %961 = vmatprep.subr.mxu0 0.0
  %962 = vmatpush1.msra.mxu0 0.0
  %963 = vmatprep.subr.mxu0 0.0
  %964 = vmatpush1.msra.mxu0 0.0
  %965 = vmatprep.subr.mxu0 %v778
  %966 = vmatpush1.msra.mxu0 %v784
  %967 = vmatprep.subr.mxu0 0.0
  %968 = vmatpush2.msra.mxu0 0.0
  %969 = vmatprep.subr.mxu0 0.0
  %970 = vmatpush2.msra.mxu0 0.0
  %971 = vmatprep.subr.mxu0 0.0
  %972 = vmatpush2.msra.mxu0 0.0
  %973 = vmatprep.subr.mxu0 0.0
  %974 = vmatpush2.msra.mxu0 0.0
  %975 = vmatprep.subr.mxu0 0.0
  %976 = vmatpush2.msra.mxu0 0.0
  %977 = vmatprep.subr.mxu0 0.0
  %978 = vmatpush2.msra.mxu0 0.0
  %979 = vmatprep.subr.mxu0 0.0
  %980 = vmatpush2.msra.mxu0 0.0
  %981 = vmatprep.subr.mxu0 0.0
  %982 = vmatpush2.msra.mxu0 0.0
  %983 = vmatprep.subr.mxu0 0.0
  %984 = vmatpush2.msra.mxu0 0.0
  %985 = vmatprep.subr.mxu0 0.0
  %986 = vmatpush2.msra.mxu0 0.0
  %987 = vmatprep.subr.mxu0 0.0
  %988 = vmatpush2.msra.mxu0 0.0
  %989 = vmatprep.subr.mxu0 0.0
  %990 = vmatpush2.msra.mxu0 0.0
  %991 = vmatprep.subr.mxu0 0.0
  %992 = vmatpush2.msra.mxu0 0.0
  %993 = vmatprep.subr.mxu0 0.0
  %994 = vmatpush2.msra.mxu0 0.0
  %995 = vmatprep.subr.mxu0 0.0
  %996 = vmatpush2.msra.mxu0 0.0
  %997 = vmatprep.subr.mxu0 0.0
  %998 = vmatpush2.msra.mxu0 0.0
  %999 = vmatprep.mubr.f32.mxu0 0.0
  %1000 = vmatmul.mubr.f32.gmra.mxu0 %v791
  %v1001 = vpop.f32.mrf.mxu0
  %v1002 = vadd.f32 0.0, %v1001
  %v1003 = vpop.f32.mrf.mxu0
  %v1004 = vadd.f32 0.0, %v1003
  %1005 = vdwg.mxu0
  %v1006 = vadd.f32 %v619, %v860
  %v1007 = vadd.f32 %v621, %v862
  %v1008 = vadd.f32 %v690, %v931
  %v1009 = vadd.f32 %v692, %v933
  %v1010 = vadd.f32 %v761, %v1002
  %v1011 = vadd.f32 %v763, %v1004
  %v1012 = vld [vmem:[#allocation2] sm:$0xff]
  %v1013 = vld [vmem:[#allocation2 + $0x8] sm:$0xff]
  %v1014 = vld [vmem:[#allocation2 + $0x10] sm:$0xff]
  %v1015 = vld [vmem:[#allocation2 + $0x18] sm:$0xff]
  %v1016 = vld [vmem:[#allocation2 + $0x20] sm:$0xff]
  %v1017 = vld [vmem:[#allocation2 + $0x28] sm:$0xff]
  %v1018 = vld [vmem:[#allocation2 + $0x30] sm:$0xff]
  %1019 = vrot.lane.b32.xlu0 %v277, 104
  %v1020 = vpop.permute.xlu0 %1019
  %1028 = vrot.lane.b32.xlu0 %v1012, 1
  %v1029 = vpop.permute.xlu0 %1028
  %1030 = vrot.lane.b32.xlu0 %v1013, 1
  %v1031 = vpop.permute.xlu0 %1030
  %1032 = vrot.lane.b32.xlu0 %v1014, 1
  %v1033 = vpop.permute.xlu0 %1032
  %1034 = vrot.lane.b32.xlu0 %v1015, 1
  %v1035 = vpop.permute.xlu0 %1034
  %1036 = vrot.lane.b32.xlu0 %v1016, 1
  %v1037 = vpop.permute.xlu0 %1036
  %1038 = vrot.lane.b32.xlu0 %v1017, 1
  %v1039 = vpop.permute.xlu0 %1038
  %1040 = vrot.lane.b32.xlu0 %v1018, 1
  %v1041 = vpop.permute.xlu0 %1040
  %vm1042 = vcmask 7168
  %v1043 = vsel %vm1042, %v1029, %v1031
  %v1044 = vsel %vm1042, %v1031, %v1033
  %v1045 = vsel %vm1042, %v1033, %v1035
  %v1046 = vsel %vm1042, %v1035, %v1037
  %v1047 = vsel %vm1042, %v1037, %v1039
  %v1048 = vsel %vm1042, %v1039, %v1041
  %v1055 = vsel %vm36, %v1020, 0
  %1057 = vmatprep.subr.mxu0 0.0
  %1058 = vmatpush1.msra.mxu0 0.0
  %1059 = vmatprep.subr.mxu0 0.0
  %1060 = vmatpush1.msra.mxu0 0.0
  %1061 = vmatprep.subr.mxu0 0.0
  %1062 = vmatpush1.msra.mxu0 0.0
  %1063 = vmatprep.subr.mxu0 0.0
  %1064 = vmatpush1.msra.mxu0 0.0
  %1065 = vmatprep.subr.mxu0 0.0
  %1066 = vmatpush1.msra.mxu0 0.0
  %1067 = vmatprep.subr.mxu0 0.0
  %1068 = vmatpush1.msra.mxu0 0.0
  %1069 = vmatprep.subr.mxu0 0.0
  %1070 = vmatpush1.msra.mxu0 0.0
  %1071 = vmatprep.subr.mxu0 0.0
  %1072 = vmatpush1.msra.mxu0 0.0
  %1073 = vmatprep.subr.mxu0 0.0
  %1074 = vmatpush1.msra.mxu0 0.0
  %1075 = vmatprep.subr.mxu0 0.0
  %1076 = vmatpush1.msra.mxu0 0.0
  %1077 = vmatprep.subr.mxu0 0.0
  %1078 = vmatpush1.msra.mxu0 0.0
  %1079 = vmatprep.subr.mxu0 0.0
  %1080 = vmatpush1.msra.mxu0 0.0
  %1081 = vmatprep.subr.mxu0 0.0
  %1082 = vmatpush1.msra.mxu0 0.0
  %1083 = vmatprep.subr.mxu0 0.0
  %1084 = vmatpush1.msra.mxu0 0.0
  %1085 = vmatprep.subr.mxu0 0.0
  %1086 = vmatpush1.msra.mxu0 0.0
  %1087 = vmatprep.subr.mxu0 %v1044
  %1088 = vmatpush1.msra.mxu0 %v1043
  %1089 = vmatprep.subr.mxu0 0.0
  %1090 = vmatpush2.msra.mxu0 0.0
  %1091 = vmatprep.subr.mxu0 0.0
  %1092 = vmatpush2.msra.mxu0 0.0
  %1093 = vmatprep.subr.mxu0 0.0
  %1094 = vmatpush2.msra.mxu0 0.0
  %1095 = vmatprep.subr.mxu0 0.0
  %1096 = vmatpush2.msra.mxu0 0.0
  %1097 = vmatprep.subr.mxu0 0.0
  %1098 = vmatpush2.msra.mxu0 0.0
  %1099 = vmatprep.subr.mxu0 0.0
  %1100 = vmatpush2.msra.mxu0 0.0
  %1101 = vmatprep.subr.mxu0 0.0
  %1102 = vmatpush2.msra.mxu0 0.0
  %1103 = vmatprep.subr.mxu0 0.0
  %1104 = vmatpush2.msra.mxu0 0.0
  %1105 = vmatprep.subr.mxu0 0.0
  %1106 = vmatpush2.msra.mxu0 0.0
  %1107 = vmatprep.subr.mxu0 0.0
  %1108 = vmatpush2.msra.mxu0 0.0
  %1109 = vmatprep.subr.mxu0 0.0
  %1110 = vmatpush2.msra.mxu0 0.0
  %1111 = vmatprep.subr.mxu0 0.0
  %1112 = vmatpush2.msra.mxu0 0.0
  %1113 = vmatprep.subr.mxu0 0.0
  %1114 = vmatpush2.msra.mxu0 0.0
  %1115 = vmatprep.subr.mxu0 0.0
  %1116 = vmatpush2.msra.mxu0 0.0
  %1117 = vmatprep.subr.mxu0 0.0
  %1118 = vmatpush2.msra.mxu0 0.0
  %1119 = vmatprep.subr.mxu0 0.0
  %1120 = vmatpush2.msra.mxu0 0.0
  %1121 = vmatprep.mubr.f32.mxu0 0.0
  %1122 = vmatmul.mubr.f32.gmra.mxu0 %v1055
  %v1123 = vpop.f32.mrf.mxu0
  %v1124 = vadd.f32 0.0, %v1123
  %v1125 = vpop.f32.mrf.mxu0
  %v1126 = vadd.f32 0.0, %v1125
  %1127 = vdwg.mxu0
  %1128 = vmatprep.subr.mxu0 0.0
  %1129 = vmatpush1.msra.mxu0 0.0
  %1130 = vmatprep.subr.mxu0 0.0
  %1131 = vmatpush1.msra.mxu0 0.0
  %1132 = vmatprep.subr.mxu0 0.0
  %1133 = vmatpush1.msra.mxu0 0.0
  %1134 = vmatprep.subr.mxu0 0.0
  %1135 = vmatpush1.msra.mxu0 0.0
  %1136 = vmatprep.subr.mxu0 0.0
  %1137 = vmatpush1.msra.mxu0 0.0
  %1138 = vmatprep.subr.mxu0 0.0
  %1139 = vmatpush1.msra.mxu0 0.0
  %1140 = vmatprep.subr.mxu0 0.0
  %1141 = vmatpush1.msra.mxu0 0.0
  %1142 = vmatprep.subr.mxu0 0.0
  %1143 = vmatpush1.msra.mxu0 0.0
  %1144 = vmatprep.subr.mxu0 0.0
  %1145 = vmatpush1.msra.mxu0 0.0
  %1146 = vmatprep.subr.mxu0 0.0
  %1147 = vmatpush1.msra.mxu0 0.0
  %1148 = vmatprep.subr.mxu0 0.0
  %1149 = vmatpush1.msra.mxu0 0.0
  %1150 = vmatprep.subr.mxu0 0.0
  %1151 = vmatpush1.msra.mxu0 0.0
  %1152 = vmatprep.subr.mxu0 0.0
  %1153 = vmatpush1.msra.mxu0 0.0
  %1154 = vmatprep.subr.mxu0 0.0
  %1155 = vmatpush1.msra.mxu0 0.0
  %1156 = vmatprep.subr.mxu0 0.0
  %1157 = vmatpush1.msra.mxu0 0.0
  %1158 = vmatprep.subr.mxu0 %v1046
  %1159 = vmatpush1.msra.mxu0 %v1045
  %1160 = vmatprep.subr.mxu0 0.0
  %1161 = vmatpush2.msra.mxu0 0.0
  %1162 = vmatprep.subr.mxu0 0.0
  %1163 = vmatpush2.msra.mxu0 0.0
  %1164 = vmatprep.subr.mxu0 0.0
  %1165 = vmatpush2.msra.mxu0 0.0
  %1166 = vmatprep.subr.mxu0 0.0
  %1167 = vmatpush2.msra.mxu0 0.0
  %1168 = vmatprep.subr.mxu0 0.0
  %1169 = vmatpush2.msra.mxu0 0.0
  %1170 = vmatprep.subr.mxu0 0.0
  %1171 = vmatpush2.msra.mxu0 0.0
  %1172 = vmatprep.subr.mxu0 0.0
  %1173 = vmatpush2.msra.mxu0 0.0
  %1174 = vmatprep.subr.mxu0 0.0
  %1175 = vmatpush2.msra.mxu0 0.0
  %1176 = vmatprep.subr.mxu0 0.0
  %1177 = vmatpush2.msra.mxu0 0.0
  %1178 = vmatprep.subr.mxu0 0.0
  %1179 = vmatpush2.msra.mxu0 0.0
  %1180 = vmatprep.subr.mxu0 0.0
  %1181 = vmatpush2.msra.mxu0 0.0
  %1182 = vmatprep.subr.mxu0 0.0
  %1183 = vmatpush2.msra.mxu0 0.0
  %1184 = vmatprep.subr.mxu0 0.0
  %1185 = vmatpush2.msra.mxu0 0.0
  %1186 = vmatprep.subr.mxu0 0.0
  %1187 = vmatpush2.msra.mxu0 0.0
  %1188 = vmatprep.subr.mxu0 0.0
  %1189 = vmatpush2.msra.mxu0 0.0
  %1190 = vmatprep.subr.mxu0 0.0
  %1191 = vmatpush2.msra.mxu0 0.0
  %1192 = vmatprep.mubr.f32.mxu0 0.0
  %1193 = vmatmul.mubr.f32.gmra.mxu0 %v1055
  %v1194 = vpop.f32.mrf.mxu0
  %v1195 = vadd.f32 0.0, %v1194
  %v1196 = vpop.f32.mrf.mxu0
  %v1197 = vadd.f32 0.0, %v1196
  %1198 = vdwg.mxu0
  %1199 = vmatprep.subr.mxu0 0.0
  %1200 = vmatpush1.msra.mxu0 0.0
  %1201 = vmatprep.subr.mxu0 0.0
  %1202 = vmatpush1.msra.mxu0 0.0
  %1203 = vmatprep.subr.mxu0 0.0
  %1204 = vmatpush1.msra.mxu0 0.0
  %1205 = vmatprep.subr.mxu0 0.0
  %1206 = vmatpush1.msra.mxu0 0.0
  %1207 = vmatprep.subr.mxu0 0.0
  %1208 = vmatpush1.msra.mxu0 0.0
  %1209 = vmatprep.subr.mxu0 0.0
  %1210 = vmatpush1.msra.mxu0 0.0
  %1211 = vmatprep.subr.mxu0 0.0
  %1212 = vmatpush1.msra.mxu0 0.0
  %1213 = vmatprep.subr.mxu0 0.0
  %1214 = vmatpush1.msra.mxu0 0.0
  %1215 = vmatprep.subr.mxu0 0.0
  %1216 = vmatpush1.msra.mxu0 0.0
  %1217 = vmatprep.subr.mxu0 0.0
  %1218 = vmatpush1.msra.mxu0 0.0
  %1219 = vmatprep.subr.mxu0 0.0
  %1220 = vmatpush1.msra.mxu0 0.0
  %1221 = vmatprep.subr.mxu0 0.0
  %1222 = vmatpush1.msra.mxu0 0.0
  %1223 = vmatprep.subr.mxu0 0.0
  %1224 = vmatpush1.msra.mxu0 0.0
  %1225 = vmatprep.subr.mxu0 0.0
  %1226 = vmatpush1.msra.mxu0 0.0
  %1227 = vmatprep.subr.mxu0 0.0
  %1228 = vmatpush1.msra.mxu0 0.0
  %1229 = vmatprep.subr.mxu0 %v1048
  %1230 = vmatpush1.msra.mxu0 %v1047
  %1231 = vmatprep.subr.mxu0 0.0
  %1232 = vmatpush2.msra.mxu0 0.0
  %1233 = vmatprep.subr.mxu0 0.0
  %1234 = vmatpush2.msra.mxu0 0.0
  %1235 = vmatprep.subr.mxu0 0.0
  %1236 = vmatpush2.msra.mxu0 0.0
  %1237 = vmatprep.subr.mxu0 0.0
  %1238 = vmatpush2.msra.mxu0 0.0
  %1239 = vmatprep.subr.mxu0 0.0
  %1240 = vmatpush2.msra.mxu0 0.0
  %1241 = vmatprep.subr.mxu0 0.0
  %1242 = vmatpush2.msra.mxu0 0.0
  %1243 = vmatprep.subr.mxu0 0.0
  %1244 = vmatpush2.msra.mxu0 0.0
  %1245 = vmatprep.subr.mxu0 0.0
  %1246 = vmatpush2.msra.mxu0 0.0
  %1247 = vmatprep.subr.mxu0 0.0
  %1248 = vmatpush2.msra.mxu0 0.0
  %1249 = vmatprep.subr.mxu0 0.0
  %1250 = vmatpush2.msra.mxu0 0.0
  %1251 = vmatprep.subr.mxu0 0.0
  %1252 = vmatpush2.msra.mxu0 0.0
  %1253 = vmatprep.subr.mxu0 0.0
  %1254 = vmatpush2.msra.mxu0 0.0
  %1255 = vmatprep.subr.mxu0 0.0
  %1256 = vmatpush2.msra.mxu0 0.0
  %1257 = vmatprep.subr.mxu0 0.0
  %1258 = vmatpush2.msra.mxu0 0.0
  %1259 = vmatprep.subr.mxu0 0.0
  %1260 = vmatpush2.msra.mxu0 0.0
  %1261 = vmatprep.subr.mxu0 0.0
  %1262 = vmatpush2.msra.mxu0 0.0
  %1263 = vmatprep.mubr.f32.mxu0 0.0
  %1264 = vmatmul.mubr.f32.gmra.mxu0 %v1055
  %v1265 = vpop.f32.mrf.mxu0
  %v1266 = vadd.f32 0.0, %v1265
  %v1267 = vpop.f32.mrf.mxu0
  %v1268 = vadd.f32 0.0, %v1267
  %1269 = vdwg.mxu0
  %v1270 = vadd.f32 %v1006, %v1124
  %v1271 = vadd.f32 %v1007, %v1126
  %v1272 = vadd.f32 %v1008, %v1195
  %v1273 = vadd.f32 %v1009, %v1197
  %v1274 = vadd.f32 %v1010, %v1266
  %v1275 = vadd.f32 %v1011, %v1268
  %1276 = vrot.lane.b32.xlu0 %v277, 96
  %v1277 = vpop.permute.xlu0 %1276
  %v1278 = vsel %vm36, %v1277, 0
  %1280 = vmatprep.subr.mxu0 0.0
  %1281 = vmatpush1.msra.mxu0 0.0
  %1282 = vmatprep.subr.mxu0 0.0
  %1283 = vmatpush1.msra.mxu0 0.0
  %1284 = vmatprep.subr.mxu0 0.0
  %1285 = vmatpush1.msra.mxu0 0.0
  %1286 = vmatprep.subr.mxu0 0.0
  %1287 = vmatpush1.msra.mxu0 0.0
  %1288 = vmatprep.subr.mxu0 0.0
  %1289 = vmatpush1.msra.mxu0 0.0
  %1290 = vmatprep.subr.mxu0 0.0
  %1291 = vmatpush1.msra.mxu0 0.0
  %1292 = vmatprep.subr.mxu0 0.0
  %1293 = vmatpush1.msra.mxu0 0.0
  %1294 = vmatprep.subr.mxu0 0.0
  %1295 = vmatpush1.msra.mxu0 0.0
  %1296 = vmatprep.subr.mxu0 0.0
  %1297 = vmatpush1.msra.mxu0 0.0
  %1298 = vmatprep.subr.mxu0 0.0
  %1299 = vmatpush1.msra.mxu0 0.0
  %1300 = vmatprep.subr.mxu0 0.0
  %1301 = vmatpush1.msra.mxu0 0.0
  %1302 = vmatprep.subr.mxu0 0.0
  %1303 = vmatpush1.msra.mxu0 0.0
  %1304 = vmatprep.subr.mxu0 0.0
  %1305 = vmatpush1.msra.mxu0 0.0
  %1306 = vmatprep.subr.mxu0 0.0
  %1307 = vmatpush1.msra.mxu0 0.0
  %1308 = vmatprep.subr.mxu0 0.0
  %1309 = vmatpush1.msra.mxu0 0.0
  %1310 = vmatprep.subr.mxu0 %v1014
  %1311 = vmatpush1.msra.mxu0 %v1013
  %1312 = vmatprep.subr.mxu0 0.0
  %1313 = vmatpush2.msra.mxu0 0.0
  %1314 = vmatprep.subr.mxu0 0.0
  %1315 = vmatpush2.msra.mxu0 0.0
  %1316 = vmatprep.subr.mxu0 0.0
  %1317 = vmatpush2.msra.mxu0 0.0
  %1318 = vmatprep.subr.mxu0 0.0
  %1319 = vmatpush2.msra.mxu0 0.0
  %1320 = vmatprep.subr.mxu0 0.0
  %1321 = vmatpush2.msra.mxu0 0.0
  %1322 = vmatprep.subr.mxu0 0.0
  %1323 = vmatpush2.msra.mxu0 0.0
  %1324 = vmatprep.subr.mxu0 0.0
  %1325 = vmatpush2.msra.mxu0 0.0
  %1326 = vmatprep.subr.mxu0 0.0
  %1327 = vmatpush2.msra.mxu0 0.0
  %1328 = vmatprep.subr.mxu0 0.0
  %1329 = vmatpush2.msra.mxu0 0.0
  %1330 = vmatprep.subr.mxu0 0.0
  %1331 = vmatpush2.msra.mxu0 0.0
  %1332 = vmatprep.subr.mxu0 0.0
  %1333 = vmatpush2.msra.mxu0 0.0
  %1334 = vmatprep.subr.mxu0 0.0
  %1335 = vmatpush2.msra.mxu0 0.0
  %1336 = vmatprep.subr.mxu0 0.0
  %1337 = vmatpush2.msra.mxu0 0.0
  %1338 = vmatprep.subr.mxu0 0.0
  %1339 = vmatpush2.msra.mxu0 0.0
  %1340 = vmatprep.subr.mxu0 0.0
  %1341 = vmatpush2.msra.mxu0 0.0
  %1342 = vmatprep.subr.mxu0 0.0
  %1343 = vmatpush2.msra.mxu0 0.0
  %1344 = vmatprep.mubr.f32.mxu0 0.0
  %1345 = vmatmul.mubr.f32.gmra.mxu0 %v1278
  %v1346 = vpop.f32.mrf.mxu0
  %v1347 = vadd.f32 0.0, %v1346
  %v1348 = vpop.f32.mrf.mxu0
  %v1349 = vadd.f32 0.0, %v1348
  %1350 = vdwg.mxu0
  %1351 = vmatprep.subr.mxu0 0.0
  %1352 = vmatpush1.msra.mxu0 0.0
  %1353 = vmatprep.subr.mxu0 0.0
  %1354 = vmatpush1.msra.mxu0 0.0
  %1355 = vmatprep.subr.mxu0 0.0
  %1356 = vmatpush1.msra.mxu0 0.0
  %1357 = vmatprep.subr.mxu0 0.0
  %1358 = vmatpush1.msra.mxu0 0.0
  %1359 = vmatprep.subr.mxu0 0.0
  %1360 = vmatpush1.msra.mxu0 0.0
  %1361 = vmatprep.subr.mxu0 0.0
  %1362 = vmatpush1.msra.mxu0 0.0
  %1363 = vmatprep.subr.mxu0 0.0
  %1364 = vmatpush1.msra.mxu0 0.0
  %1365 = vmatprep.subr.mxu0 0.0
  %1366 = vmatpush1.msra.mxu0 0.0
  %1367 = vmatprep.subr.mxu0 0.0
  %1368 = vmatpush1.msra.mxu0 0.0
  %1369 = vmatprep.subr.mxu0 0.0
  %1370 = vmatpush1.msra.mxu0 0.0
  %1371 = vmatprep.subr.mxu0 0.0
  %1372 = vmatpush1.msra.mxu0 0.0
  %1373 = vmatprep.subr.mxu0 0.0
  %1374 = vmatpush1.msra.mxu0 0.0
  %1375 = vmatprep.subr.mxu0 0.0
  %1376 = vmatpush1.msra.mxu0 0.0
  %1377 = vmatprep.subr.mxu0 0.0
  %1378 = vmatpush1.msra.mxu0 0.0
  %1379 = vmatprep.subr.mxu0 0.0
  %1380 = vmatpush1.msra.mxu0 0.0
  %1381 = vmatprep.subr.mxu0 %v1016
  %1382 = vmatpush1.msra.mxu0 %v1015
  %1383 = vmatprep.subr.mxu0 0.0
  %1384 = vmatpush2.msra.mxu0 0.0
  %1385 = vmatprep.subr.mxu0 0.0
  %1386 = vmatpush2.msra.mxu0 0.0
  %1387 = vmatprep.subr.mxu0 0.0
  %1388 = vmatpush2.msra.mxu0 0.0
  %1389 = vmatprep.subr.mxu0 0.0
  %1390 = vmatpush2.msra.mxu0 0.0
  %1391 = vmatprep.subr.mxu0 0.0
  %1392 = vmatpush2.msra.mxu0 0.0
  %1393 = vmatprep.subr.mxu0 0.0
  %1394 = vmatpush2.msra.mxu0 0.0
  %1395 = vmatprep.subr.mxu0 0.0
  %1396 = vmatpush2.msra.mxu0 0.0
  %1397 = vmatprep.subr.mxu0 0.0
  %1398 = vmatpush2.msra.mxu0 0.0
  %1399 = vmatprep.subr.mxu0 0.0
  %1400 = vmatpush2.msra.mxu0 0.0
  %1401 = vmatprep.subr.mxu0 0.0
  %1402 = vmatpush2.msra.mxu0 0.0
  %1403 = vmatprep.subr.mxu0 0.0
  %1404 = vmatpush2.msra.mxu0 0.0
  %1405 = vmatprep.subr.mxu0 0.0
  %1406 = vmatpush2.msra.mxu0 0.0
  %1407 = vmatprep.subr.mxu0 0.0
  %1408 = vmatpush2.msra.mxu0 0.0
  %1409 = vmatprep.subr.mxu0 0.0
  %1410 = vmatpush2.msra.mxu0 0.0
  %1411 = vmatprep.subr.mxu0 0.0
  %1412 = vmatpush2.msra.mxu0 0.0
  %1413 = vmatprep.subr.mxu0 0.0
  %1414 = vmatpush2.msra.mxu0 0.0
  %1415 = vmatprep.mubr.f32.mxu0 0.0
  %1416 = vmatmul.mubr.f32.gmra.mxu0 %v1278
  %v1417 = vpop.f32.mrf.mxu0
  %v1418 = vadd.f32 0.0, %v1417
  %v1419 = vpop.f32.mrf.mxu0
  %v1420 = vadd.f32 0.0, %v1419
  %1421 = vdwg.mxu0
  %1422 = vmatprep.subr.mxu0 0.0
  %1423 = vmatpush1.msra.mxu0 0.0
  %1424 = vmatprep.subr.mxu0 0.0
  %1425 = vmatpush1.msra.mxu0 0.0
  %1426 = vmatprep.subr.mxu0 0.0
  %1427 = vmatpush1.msra.mxu0 0.0
  %1428 = vmatprep.subr.mxu0 0.0
  %1429 = vmatpush1.msra.mxu0 0.0
  %1430 = vmatprep.subr.mxu0 0.0
  %1431 = vmatpush1.msra.mxu0 0.0
  %1432 = vmatprep.subr.mxu0 0.0
  %1433 = vmatpush1.msra.mxu0 0.0
  %1434 = vmatprep.subr.mxu0 0.0
  %1435 = vmatpush1.msra.mxu0 0.0
  %1436 = vmatprep.subr.mxu0 0.0
  %1437 = vmatpush1.msra.mxu0 0.0
  %1438 = vmatprep.subr.mxu0 0.0
  %1439 = vmatpush1.msra.mxu0 0.0
  %1440 = vmatprep.subr.mxu0 0.0
  %1441 = vmatpush1.msra.mxu0 0.0
  %1442 = vmatprep.subr.mxu0 0.0
  %1443 = vmatpush1.msra.mxu0 0.0
  %1444 = vmatprep.subr.mxu0 0.0
  %1445 = vmatpush1.msra.mxu0 0.0
  %1446 = vmatprep.subr.mxu0 0.0
  %1447 = vmatpush1.msra.mxu0 0.0
  %1448 = vmatprep.subr.mxu0 0.0
  %1449 = vmatpush1.msra.mxu0 0.0
  %1450 = vmatprep.subr.mxu0 0.0
  %1451 = vmatpush1.msra.mxu0 0.0
  %1452 = vmatprep.subr.mxu0 %v1018
  %1453 = vmatpush1.msra.mxu0 %v1017
  %1454 = vmatprep.subr.mxu0 0.0
  %1455 = vmatpush2.msra.mxu0 0.0
  %1456 = vmatprep.subr.mxu0 0.0
  %1457 = vmatpush2.msra.mxu0 0.0
  %1458 = vmatprep.subr.mxu0 0.0
  %1459 = vmatpush2.msra.mxu0 0.0
  %1460 = vmatprep.subr.mxu0 0.0
  %1461 = vmatpush2.msra.mxu0 0.0
  %1462 = vmatprep.subr.mxu0 0.0
  %1463 = vmatpush2.msra.mxu0 0.0
  %1464 = vmatprep.subr.mxu0 0.0
  %1465 = vmatpush2.msra.mxu0 0.0
  %1466 = vmatprep.subr.mxu0 0.0
  %1467 = vmatpush2.msra.mxu0 0.0
  %1468 = vmatprep.subr.mxu0 0.0
  %1469 = vmatpush2.msra.mxu0 0.0
  %1470 = vmatprep.subr.mxu0 0.0
  %1471 = vmatpush2.msra.mxu0 0.0
  %1472 = vmatprep.subr.mxu0 0.0
  %1473 = vmatpush2.msra.mxu0 0.0
  %1474 = vmatprep.subr.mxu0 0.0
  %1475 = vmatpush2.msra.mxu0 0.0
  %1476 = vmatprep.subr.mxu0 0.0
  %1477 = vmatpush2.msra.mxu0 0.0
  %1478 = vmatprep.subr.mxu0 0.0
  %1479 = vmatpush2.msra.mxu0 0.0
  %1480 = vmatprep.subr.mxu0 0.0
  %1481 = vmatpush2.msra.mxu0 0.0
  %1482 = vmatprep.subr.mxu0 0.0
  %1483 = vmatpush2.msra.mxu0 0.0
  %1484 = vmatprep.subr.mxu0 0.0
  %1485 = vmatpush2.msra.mxu0 0.0
  %1486 = vmatprep.mubr.f32.mxu0 0.0
  %1487 = vmatmul.mubr.f32.gmra.mxu0 %v1278
  %v1488 = vpop.f32.mrf.mxu0
  %v1489 = vadd.f32 0.0, %v1488
  %v1490 = vpop.f32.mrf.mxu0
  %v1491 = vadd.f32 0.0, %v1490
  %1492 = vdwg.mxu0
  %v1493 = vadd.f32 %v1270, %v1347
  %v1494 = vadd.f32 %v1271, %v1349
  %v1495 = vadd.f32 %v1272, %v1418
  %v1496 = vadd.f32 %v1273, %v1420
  %v1497 = vadd.f32 %v1274, %v1489
  %v1498 = vadd.f32 %v1275, %v1491
  %1499 = vrot.lane.b32.xlu0 %v277, 88
  %v1500 = vpop.permute.xlu0 %1499
  %1501 = vrot.lane.b32.xlu0 %v1013, 127
  %v1502 = vpop.permute.xlu0 %1501
  %1503 = vrot.lane.b32.xlu0 %v1014, 127
  %v1504 = vpop.permute.xlu0 %1503
  %1505 = vrot.lane.b32.xlu0 %v1015, 127
  %v1506 = vpop.permute.xlu0 %1505
  %1507 = vrot.lane.b32.xlu0 %v1016, 127
  %v1508 = vpop.permute.xlu0 %1507
  %1509 = vrot.lane.b32.xlu0 %v1017, 127
  %v1510 = vpop.permute.xlu0 %1509
  %1511 = vrot.lane.b32.xlu0 %v1018, 127
  %v1512 = vpop.permute.xlu0 %1511
  %vm1513 = vcmask 1039360
  %v1514 = vsel %vm1513, %v1502, %v1504
  %v1515 = vsel %vm1513, %v1504, %v1506
  %v1516 = vsel %vm1513, %v1506, %v1508
  %v1517 = vsel %vm1513, %v1508, %v1510
  %v1518 = vsel %vm1513, %v1510, %v1512
  %v1525 = vsel %vm36, %v1500, 0
  %1527 = vmatprep.subr.mxu0 0.0
  %1528 = vmatpush1.msra.mxu0 0.0
  %1529 = vmatprep.subr.mxu0 0.0
  %1530 = vmatpush1.msra.mxu0 0.0
  %1531 = vmatprep.subr.mxu0 0.0
  %1532 = vmatpush1.msra.mxu0 0.0
  %1533 = vmatprep.subr.mxu0 0.0
  %1534 = vmatpush1.msra.mxu0 0.0
  %1535 = vmatprep.subr.mxu0 0.0
  %1536 = vmatpush1.msra.mxu0 0.0
  %1537 = vmatprep.subr.mxu0 0.0
  %1538 = vmatpush1.msra.mxu0 0.0
  %1539 = vmatprep.subr.mxu0 0.0
  %1540 = vmatpush1.msra.mxu0 0.0
  %1541 = vmatprep.subr.mxu0 0.0
  %1542 = vmatpush1.msra.mxu0 0.0
  %1543 = vmatprep.subr.mxu0 0.0
  %1544 = vmatpush1.msra.mxu0 0.0
  %1545 = vmatprep.subr.mxu0 0.0
  %1546 = vmatpush1.msra.mxu0 0.0
  %1547 = vmatprep.subr.mxu0 0.0
  %1548 = vmatpush1.msra.mxu0 0.0
  %1549 = vmatprep.subr.mxu0 0.0
  %1550 = vmatpush1.msra.mxu0 0.0
  %1551 = vmatprep.subr.mxu0 0.0
  %1552 = vmatpush1.msra.mxu0 0.0
  %1553 = vmatprep.subr.mxu0 0.0
  %1554 = vmatpush1.msra.mxu0 0.0
  %1555 = vmatprep.subr.mxu0 0.0
  %1556 = vmatpush1.msra.mxu0 0.0
  %1557 = vmatprep.subr.mxu0 %v1515
  %1558 = vmatpush1.msra.mxu0 %v1514
  %1559 = vmatprep.subr.mxu0 0.0
  %1560 = vmatpush2.msra.mxu0 0.0
  %1561 = vmatprep.subr.mxu0 0.0
  %1562 = vmatpush2.msra.mxu0 0.0
  %1563 = vmatprep.subr.mxu0 0.0
  %1564 = vmatpush2.msra.mxu0 0.0
  %1565 = vmatprep.subr.mxu0 0.0
  %1566 = vmatpush2.msra.mxu0 0.0
  %1567 = vmatprep.subr.mxu0 0.0
  %1568 = vmatpush2.msra.mxu0 0.0
  %1569 = vmatprep.subr.mxu0 0.0
  %1570 = vmatpush2.msra.mxu0 0.0
  %1571 = vmatprep.subr.mxu0 0.0
  %1572 = vmatpush2.msra.mxu0 0.0
  %1573 = vmatprep.subr.mxu0 0.0
  %1574 = vmatpush2.msra.mxu0 0.0
  %1575 = vmatprep.subr.mxu0 0.0
  %1576 = vmatpush2.msra.mxu0 0.0
  %1577 = vmatprep.subr.mxu0 0.0
  %1578 = vmatpush2.msra.mxu0 0.0
  %1579 = vmatprep.subr.mxu0 0.0
  %1580 = vmatpush2.msra.mxu0 0.0
  %1581 = vmatprep.subr.mxu0 0.0
  %1582 = vmatpush2.msra.mxu0 0.0
  %1583 = vmatprep.subr.mxu0 0.0
  %1584 = vmatpush2.msra.mxu0 0.0
  %1585 = vmatprep.subr.mxu0 0.0
  %1586 = vmatpush2.msra.mxu0 0.0
  %1587 = vmatprep.subr.mxu0 0.0
  %1588 = vmatpush2.msra.mxu0 0.0
  %1589 = vmatprep.subr.mxu0 0.0
  %1590 = vmatpush2.msra.mxu0 0.0
  %1591 = vmatprep.mubr.f32.mxu0 0.0
  %1592 = vmatmul.mubr.f32.gmra.mxu0 %v1525
  %v1593 = vpop.f32.mrf.mxu0
  %v1594 = vadd.f32 0.0, %v1593
  %v1595 = vpop.f32.mrf.mxu0
  %v1596 = vadd.f32 0.0, %v1595
  %1597 = vdwg.mxu0
  %1598 = vmatprep.subr.mxu0 0.0
  %1599 = vmatpush1.msra.mxu0 0.0
  %1600 = vmatprep.subr.mxu0 0.0
  %1601 = vmatpush1.msra.mxu0 0.0
  %1602 = vmatprep.subr.mxu0 0.0
  %1603 = vmatpush1.msra.mxu0 0.0
  %1604 = vmatprep.subr.mxu0 0.0
  %1605 = vmatpush1.msra.mxu0 0.0
  %1606 = vmatprep.subr.mxu0 0.0
  %1607 = vmatpush1.msra.mxu0 0.0
  %1608 = vmatprep.subr.mxu0 0.0
  %1609 = vmatpush1.msra.mxu0 0.0
  %1610 = vmatprep.subr.mxu0 0.0
  %1611 = vmatpush1.msra.mxu0 0.0
  %1612 = vmatprep.subr.mxu0 0.0
  %1613 = vmatpush1.msra.mxu0 0.0
  %1614 = vmatprep.subr.mxu0 0.0
  %1615 = vmatpush1.msra.mxu0 0.0
  %1616 = vmatprep.subr.mxu0 0.0
  %1617 = vmatpush1.msra.mxu0 0.0
  %1618 = vmatprep.subr.mxu0 0.0
  %1619 = vmatpush1.msra.mxu0 0.0
  %1620 = vmatprep.subr.mxu0 0.0
  %1621 = vmatpush1.msra.mxu0 0.0
  %1622 = vmatprep.subr.mxu0 0.0
  %1623 = vmatpush1.msra.mxu0 0.0
  %1624 = vmatprep.subr.mxu0 0.0
  %1625 = vmatpush1.msra.mxu0 0.0
  %1626 = vmatprep.subr.mxu0 0.0
  %1627 = vmatpush1.msra.mxu0 0.0
  %1628 = vmatprep.subr.mxu0 %v1517
  %1629 = vmatpush1.msra.mxu0 %v1516
  %1630 = vmatprep.subr.mxu0 0.0
  %1631 = vmatpush2.msra.mxu0 0.0
  %1632 = vmatprep.subr.mxu0 0.0
  %1633 = vmatpush2.msra.mxu0 0.0
  %1634 = vmatprep.subr.mxu0 0.0
  %1635 = vmatpush2.msra.mxu0 0.0
  %1636 = vmatprep.subr.mxu0 0.0
  %1637 = vmatpush2.msra.mxu0 0.0
  %1638 = vmatprep.subr.mxu0 0.0
  %1639 = vmatpush2.msra.mxu0 0.0
  %1640 = vmatprep.subr.mxu0 0.0
  %1641 = vmatpush2.msra.mxu0 0.0
  %1642 = vmatprep.subr.mxu0 0.0
  %1643 = vmatpush2.msra.mxu0 0.0
  %1644 = vmatprep.subr.mxu0 0.0
  %1645 = vmatpush2.msra.mxu0 0.0
  %1646 = vmatprep.subr.mxu0 0.0
  %1647 = vmatpush2.msra.mxu0 0.0
  %1648 = vmatprep.subr.mxu0 0.0
  %1649 = vmatpush2.msra.mxu0 0.0
  %1650 = vmatprep.subr.mxu0 0.0
  %1651 = vmatpush2.msra.mxu0 0.0
  %1652 = vmatprep.subr.mxu0 0.0
  %1653 = vmatpush2.msra.mxu0 0.0
  %1654 = vmatprep.subr.mxu0 0.0
  %1655 = vmatpush2.msra.mxu0 0.0
  %1656 = vmatprep.subr.mxu0 0.0
  %1657 = vmatpush2.msra.mxu0 0.0
  %1658 = vmatprep.subr.mxu0 0.0
  %1659 = vmatpush2.msra.mxu0 0.0
  %1660 = vmatprep.subr.mxu0 0.0
  %1661 = vmatpush2.msra.mxu0 0.0
  %1662 = vmatprep.mubr.f32.mxu0 0.0
  %1663 = vmatmul.mubr.f32.gmra.mxu0 %v1525
  %v1664 = vpop.f32.mrf.mxu0
  %v1665 = vadd.f32 0.0, %v1664
  %v1666 = vpop.f32.mrf.mxu0
  %v1667 = vadd.f32 0.0, %v1666
  %1668 = vdwg.mxu0
  %1669 = vmatprep.subr.mxu0 0.0
  %1670 = vmatpush1.msra.mxu0 0.0
  %1671 = vmatprep.subr.mxu0 0.0
  %1672 = vmatpush1.msra.mxu0 0.0
  %1673 = vmatprep.subr.mxu0 0.0
  %1674 = vmatpush1.msra.mxu0 0.0
  %1675 = vmatprep.subr.mxu0 0.0
  %1676 = vmatpush1.msra.mxu0 0.0
  %1677 = vmatprep.subr.mxu0 0.0
  %1678 = vmatpush1.msra.mxu0 0.0
  %1679 = vmatprep.subr.mxu0 0.0
  %1680 = vmatpush1.msra.mxu0 0.0
  %1681 = vmatprep.subr.mxu0 0.0
  %1682 = vmatpush1.msra.mxu0 0.0
  %1683 = vmatprep.subr.mxu0 0.0
  %1684 = vmatpush1.msra.mxu0 0.0
  %1685 = vmatprep.subr.mxu0 0.0
  %1686 = vmatpush1.msra.mxu0 0.0
  %1687 = vmatprep.subr.mxu0 0.0
  %1688 = vmatpush1.msra.mxu0 0.0
  %1689 = vmatprep.subr.mxu0 0.0
  %1690 = vmatpush1.msra.mxu0 0.0
  %1691 = vmatprep.subr.mxu0 0.0
  %1692 = vmatpush1.msra.mxu0 0.0
  %1693 = vmatprep.subr.mxu0 0.0
  %1694 = vmatpush1.msra.mxu0 0.0
  %1695 = vmatprep.subr.mxu0 0.0
  %1696 = vmatpush1.msra.mxu0 0.0
  %1697 = vmatprep.subr.mxu0 0.0
  %1698 = vmatpush1.msra.mxu0 0.0
  %1699 = vmatprep.subr.mxu0 %v1512
  %1700 = vmatpush1.msra.mxu0 %v1518
  %1701 = vmatprep.subr.mxu0 0.0
  %1702 = vmatpush2.msra.mxu0 0.0
  %1703 = vmatprep.subr.mxu0 0.0
  %1704 = vmatpush2.msra.mxu0 0.0
  %1705 = vmatprep.subr.mxu0 0.0
  %1706 = vmatpush2.msra.mxu0 0.0
  %1707 = vmatprep.subr.mxu0 0.0
  %1708 = vmatpush2.msra.mxu0 0.0
  %1709 = vmatprep.subr.mxu0 0.0
  %1710 = vmatpush2.msra.mxu0 0.0
  %1711 = vmatprep.subr.mxu0 0.0
  %1712 = vmatpush2.msra.mxu0 0.0
  %1713 = vmatprep.subr.mxu0 0.0
  %1714 = vmatpush2.msra.mxu0 0.0
  %1715 = vmatprep.subr.mxu0 0.0
  %1716 = vmatpush2.msra.mxu0 0.0
  %1717 = vmatprep.subr.mxu0 0.0
  %1718 = vmatpush2.msra.mxu0 0.0
  %1719 = vmatprep.subr.mxu0 0.0
  %1720 = vmatpush2.msra.mxu0 0.0
  %1721 = vmatprep.subr.mxu0 0.0
  %1722 = vmatpush2.msra.mxu0 0.0
  %1723 = vmatprep.subr.mxu0 0.0
  %1724 = vmatpush2.msra.mxu0 0.0
  %1725 = vmatprep.subr.mxu0 0.0
  %1726 = vmatpush2.msra.mxu0 0.0
  %1727 = vmatprep.subr.mxu0 0.0
  %1728 = vmatpush2.msra.mxu0 0.0
  %1729 = vmatprep.subr.mxu0 0.0
  %1730 = vmatpush2.msra.mxu0 0.0
  %1731 = vmatprep.subr.mxu0 0.0
  %1732 = vmatpush2.msra.mxu0 0.0
  %1733 = vmatprep.mubr.f32.mxu0 0.0
  %1734 = vmatmul.mubr.f32.gmra.mxu0 %v1525
  %v1735 = vpop.f32.mrf.mxu0
  %v1736 = vadd.f32 0.0, %v1735
  %v1737 = vpop.f32.mrf.mxu0
  %v1738 = vadd.f32 0.0, %v1737
  %1739 = vdwg.mxu0
  %v1740 = vadd.f32 %v1493, %v1594
  %v1741 = vadd.f32 %v1494, %v1596
  %v1742 = vadd.f32 %v1495, %v1665
  %v1743 = vadd.f32 %v1496, %v1667
  %v1744 = vadd.f32 %v1497, %v1736
  %v1745 = vadd.f32 %v1498, %v1738
  %1746 = vrot.lane.b32.xlu0 %v277, 80
  %v1747 = vpop.permute.xlu0 %1746
  %1748 = vrot.lane.b32.xlu0 %v1013, 111
  %v1749 = vpop.permute.xlu0 %1748
  %1750 = vrot.lane.b32.xlu0 %v1014, 111
  %v1751 = vpop.permute.xlu0 %1750
  %1752 = vrot.lane.b32.xlu0 %v1015, 111
  %v1753 = vpop.permute.xlu0 %1752
  %1754 = vrot.lane.b32.xlu0 %v1016, 111
  %v1755 = vpop.permute.xlu0 %1754
  %1756 = vrot.lane.b32.xlu0 %v1017, 111
  %v1757 = vpop.permute.xlu0 %1756
  %1758 = vrot.lane.b32.xlu0 %v1018, 111
  %v1759 = vpop.permute.xlu0 %1758
  %vm1760 = vcmask 908288
  %v1761 = vsel %vm1760, %v1749, %v1751
  %v1762 = vsel %vm1760, %v1751, %v1753
  %v1763 = vsel %vm1760, %v1753, %v1755
  %v1764 = vsel %vm1760, %v1755, %v1757
  %v1765 = vsel %vm1760, %v1757, %v1759
  %v1772 = vsel %vm36, %v1747, 0
  %1774 = vmatprep.subr.mxu0 0.0
  %1775 = vmatpush1.msra.mxu0 0.0
  %1776 = vmatprep.subr.mxu0 0.0
  %1777 = vmatpush1.msra.mxu0 0.0
  %1778 = vmatprep.subr.mxu0 0.0
  %1779 = vmatpush1.msra.mxu0 0.0
  %1780 = vmatprep.subr.mxu0 0.0
  %1781 = vmatpush1.msra.mxu0 0.0
  %1782 = vmatprep.subr.mxu0 0.0
  %1783 = vmatpush1.msra.mxu0 0.0
  %1784 = vmatprep.subr.mxu0 0.0
  %1785 = vmatpush1.msra.mxu0 0.0
  %1786 = vmatprep.subr.mxu0 0.0
  %1787 = vmatpush1.msra.mxu0 0.0
  %1788 = vmatprep.subr.mxu0 0.0
  %1789 = vmatpush1.msra.mxu0 0.0
  %1790 = vmatprep.subr.mxu0 0.0
  %1791 = vmatpush1.msra.mxu0 0.0
  %1792 = vmatprep.subr.mxu0 0.0
  %1793 = vmatpush1.msra.mxu0 0.0
  %1794 = vmatprep.subr.mxu0 0.0
  %1795 = vmatpush1.msra.mxu0 0.0
  %1796 = vmatprep.subr.mxu0 0.0
  %1797 = vmatpush1.msra.mxu0 0.0
  %1798 = vmatprep.subr.mxu0 0.0
  %1799 = vmatpush1.msra.mxu0 0.0
  %1800 = vmatprep.subr.mxu0 0.0
  %1801 = vmatpush1.msra.mxu0 0.0
  %1802 = vmatprep.subr.mxu0 0.0
  %1803 = vmatpush1.msra.mxu0 0.0
  %1804 = vmatprep.subr.mxu0 %v1762
  %1805 = vmatpush1.msra.mxu0 %v1761
  %1806 = vmatprep.subr.mxu0 0.0
  %1807 = vmatpush2.msra.mxu0 0.0
  %1808 = vmatprep.subr.mxu0 0.0
  %1809 = vmatpush2.msra.mxu0 0.0
  %1810 = vmatprep.subr.mxu0 0.0
  %1811 = vmatpush2.msra.mxu0 0.0
  %1812 = vmatprep.subr.mxu0 0.0
  %1813 = vmatpush2.msra.mxu0 0.0
  %1814 = vmatprep.subr.mxu0 0.0
  %1815 = vmatpush2.msra.mxu0 0.0
  %1816 = vmatprep.subr.mxu0 0.0
  %1817 = vmatpush2.msra.mxu0 0.0
  %1818 = vmatprep.subr.mxu0 0.0
  %1819 = vmatpush2.msra.mxu0 0.0
  %1820 = vmatprep.subr.mxu0 0.0
  %1821 = vmatpush2.msra.mxu0 0.0
  %1822 = vmatprep.subr.mxu0 0.0
  %1823 = vmatpush2.msra.mxu0 0.0
  %1824 = vmatprep.subr.mxu0 0.0
  %1825 = vmatpush2.msra.mxu0 0.0
  %1826 = vmatprep.subr.mxu0 0.0
  %1827 = vmatpush2.msra.mxu0 0.0
  %1828 = vmatprep.subr.mxu0 0.0
  %1829 = vmatpush2.msra.mxu0 0.0
  %1830 = vmatprep.subr.mxu0 0.0
  %1831 = vmatpush2.msra.mxu0 0.0
  %1832 = vmatprep.subr.mxu0 0.0
  %1833 = vmatpush2.msra.mxu0 0.0
  %1834 = vmatprep.subr.mxu0 0.0
  %1835 = vmatpush2.msra.mxu0 0.0
  %1836 = vmatprep.subr.mxu0 0.0
  %1837 = vmatpush2.msra.mxu0 0.0
  %1838 = vmatprep.mubr.f32.mxu0 0.0
  %1839 = vmatmul.mubr.f32.gmra.mxu0 %v1772
  %v1840 = vpop.f32.mrf.mxu0
  %v1841 = vadd.f32 0.0, %v1840
  %v1842 = vpop.f32.mrf.mxu0
  %v1843 = vadd.f32 0.0, %v1842
  %1844 = vdwg.mxu0
  %1845 = vmatprep.subr.mxu0 0.0
  %1846 = vmatpush1.msra.mxu0 0.0
  %1847 = vmatprep.subr.mxu0 0.0
  %1848 = vmatpush1.msra.mxu0 0.0
  %1849 = vmatprep.subr.mxu0 0.0
  %1850 = vmatpush1.msra.mxu0 0.0
  %1851 = vmatprep.subr.mxu0 0.0
  %1852 = vmatpush1.msra.mxu0 0.0
  %1853 = vmatprep.subr.mxu0 0.0
  %1854 = vmatpush1.msra.mxu0 0.0
  %1855 = vmatprep.subr.mxu0 0.0
  %1856 = vmatpush1.msra.mxu0 0.0
  %1857 = vmatprep.subr.mxu0 0.0
  %1858 = vmatpush1.msra.mxu0 0.0
  %1859 = vmatprep.subr.mxu0 0.0
  %1860 = vmatpush1.msra.mxu0 0.0
  %1861 = vmatprep.subr.mxu0 0.0
  %1862 = vmatpush1.msra.mxu0 0.0
  %1863 = vmatprep.subr.mxu0 0.0
  %1864 = vmatpush1.msra.mxu0 0.0
  %1865 = vmatprep.subr.mxu0 0.0
  %1866 = vmatpush1.msra.mxu0 0.0
  %1867 = vmatprep.subr.mxu0 0.0
  %1868 = vmatpush1.msra.mxu0 0.0
  %1869 = vmatprep.subr.mxu0 0.0
  %1870 = vmatpush1.msra.mxu0 0.0
  %1871 = vmatprep.subr.mxu0 0.0
  %1872 = vmatpush1.msra.mxu0 0.0
  %1873 = vmatprep.subr.mxu0 0.0
  %1874 = vmatpush1.msra.mxu0 0.0
  %1875 = vmatprep.subr.mxu0 %v1764
  %1876 = vmatpush1.msra.mxu0 %v1763
  %1877 = vmatprep.subr.mxu0 0.0
  %1878 = vmatpush2.msra.mxu0 0.0
  %1879 = vmatprep.subr.mxu0 0.0
  %1880 = vmatpush2.msra.mxu0 0.0
  %1881 = vmatprep.subr.mxu0 0.0
  %1882 = vmatpush2.msra.mxu0 0.0
  %1883 = vmatprep.subr.mxu0 0.0
  %1884 = vmatpush2.msra.mxu0 0.0
  %1885 = vmatprep.subr.mxu0 0.0
  %1886 = vmatpush2.msra.mxu0 0.0
  %1887 = vmatprep.subr.mxu0 0.0
  %1888 = vmatpush2.msra.mxu0 0.0
  %1889 = vmatprep.subr.mxu0 0.0
  %1890 = vmatpush2.msra.mxu0 0.0
  %1891 = vmatprep.subr.mxu0 0.0
  %1892 = vmatpush2.msra.mxu0 0.0
  %1893 = vmatprep.subr.mxu0 0.0
  %1894 = vmatpush2.msra.mxu0 0.0
  %1895 = vmatprep.subr.mxu0 0.0
  %1896 = vmatpush2.msra.mxu0 0.0
  %1897 = vmatprep.subr.mxu0 0.0
  %1898 = vmatpush2.msra.mxu0 0.0
  %1899 = vmatprep.subr.mxu0 0.0
  %1900 = vmatpush2.msra.mxu0 0.0
  %1901 = vmatprep.subr.mxu0 0.0
  %1902 = vmatpush2.msra.mxu0 0.0
  %1903 = vmatprep.subr.mxu0 0.0
  %1904 = vmatpush2.msra.mxu0 0.0
  %1905 = vmatprep.subr.mxu0 0.0
  %1906 = vmatpush2.msra.mxu0 0.0
  %1907 = vmatprep.subr.mxu0 0.0
  %1908 = vmatpush2.msra.mxu0 0.0
  %1909 = vmatprep.mubr.f32.mxu0 0.0
  %1910 = vmatmul.mubr.f32.gmra.mxu0 %v1772
  %v1911 = vpop.f32.mrf.mxu0
  %v1912 = vadd.f32 0.0, %v1911
  %v1913 = vpop.f32.mrf.mxu0
  %v1914 = vadd.f32 0.0, %v1913
  %1915 = vdwg.mxu0
  %1916 = vmatprep.subr.mxu0 0.0
  %1917 = vmatpush1.msra.mxu0 0.0
  %1918 = vmatprep.subr.mxu0 0.0
  %1919 = vmatpush1.msra.mxu0 0.0
  %1920 = vmatprep.subr.mxu0 0.0
  %1921 = vmatpush1.msra.mxu0 0.0
  %1922 = vmatprep.subr.mxu0 0.0
  %1923 = vmatpush1.msra.mxu0 0.0
  %1924 = vmatprep.subr.mxu0 0.0
  %1925 = vmatpush1.msra.mxu0 0.0
  %1926 = vmatprep.subr.mxu0 0.0
  %1927 = vmatpush1.msra.mxu0 0.0
  %1928 = vmatprep.subr.mxu0 0.0
  %1929 = vmatpush1.msra.mxu0 0.0
  %1930 = vmatprep.subr.mxu0 0.0
  %1931 = vmatpush1.msra.mxu0 0.0
  %1932 = vmatprep.subr.mxu0 0.0
  %1933 = vmatpush1.msra.mxu0 0.0
  %1934 = vmatprep.subr.mxu0 0.0
  %1935 = vmatpush1.msra.mxu0 0.0
  %1936 = vmatprep.subr.mxu0 0.0
  %1937 = vmatpush1.msra.mxu0 0.0
  %1938 = vmatprep.subr.mxu0 0.0
  %1939 = vmatpush1.msra.mxu0 0.0
  %1940 = vmatprep.subr.mxu0 0.0
  %1941 = vmatpush1.msra.mxu0 0.0
  %1942 = vmatprep.subr.mxu0 0.0
  %1943 = vmatpush1.msra.mxu0 0.0
  %1944 = vmatprep.subr.mxu0 0.0
  %1945 = vmatpush1.msra.mxu0 0.0
  %1946 = vmatprep.subr.mxu0 %v1759
  %1947 = vmatpush1.msra.mxu0 %v1765
  %1948 = vmatprep.subr.mxu0 0.0
  %1949 = vmatpush2.msra.mxu0 0.0
  %1950 = vmatprep.subr.mxu0 0.0
  %1951 = vmatpush2.msra.mxu0 0.0
  %1952 = vmatprep.subr.mxu0 0.0
  %1953 = vmatpush2.msra.mxu0 0.0
  %1954 = vmatprep.subr.mxu0 0.0
  %1955 = vmatpush2.msra.mxu0 0.0
  %1956 = vmatprep.subr.mxu0 0.0
  %1957 = vmatpush2.msra.mxu0 0.0
  %1958 = vmatprep.subr.mxu0 0.0
  %1959 = vmatpush2.msra.mxu0 0.0
  %1960 = vmatprep.subr.mxu0 0.0
  %1961 = vmatpush2.msra.mxu0 0.0
  %1962 = vmatprep.subr.mxu0 0.0
  %1963 = vmatpush2.msra.mxu0 0.0
  %1964 = vmatprep.subr.mxu0 0.0
  %1965 = vmatpush2.msra.mxu0 0.0
  %1966 = vmatprep.subr.mxu0 0.0
  %1967 = vmatpush2.msra.mxu0 0.0
  %1968 = vmatprep.subr.mxu0 0.0
  %1969 = vmatpush2.msra.mxu0 0.0
  %1970 = vmatprep.subr.mxu0 0.0
  %1971 = vmatpush2.msra.mxu0 0.0
  %1972 = vmatprep.subr.mxu0 0.0
  %1973 = vmatpush2.msra.mxu0 0.0
  %1974 = vmatprep.subr.mxu0 0.0
  %1975 = vmatpush2.msra.mxu0 0.0
  %1976 = vmatprep.subr.mxu0 0.0
  %1977 = vmatpush2.msra.mxu0 0.0
  %1978 = vmatprep.subr.mxu0 0.0
  %1979 = vmatpush2.msra.mxu0 0.0
  %1980 = vmatprep.mubr.f32.mxu0 0.0
  %1981 = vmatmul.mubr.f32.gmra.mxu0 %v1772
  %v1982 = vpop.f32.mrf.mxu0
  %v1983 = vadd.f32 0.0, %v1982
  %v1984 = vpop.f32.mrf.mxu0
  %v1985 = vadd.f32 0.0, %v1984
  %1986 = vdwg.mxu0
  %v1987 = vadd.f32 %v1740, %v1841
  %v1988 = vadd.f32 %v1741, %v1843
  %v1989 = vadd.f32 %v1742, %v1912
  %v1990 = vadd.f32 %v1743, %v1914
  %v1991 = vadd.f32 %v1744, %v1983
  %v1992 = vadd.f32 %v1745, %v1985
  %1993 = vrot.lane.b32.xlu0 %v277, 72
  %v1994 = vpop.permute.xlu0 %1993
  %1995 = vrot.lane.b32.xlu0 %v1013, 110
  %v1996 = vpop.permute.xlu0 %1995
  %1997 = vrot.lane.b32.xlu0 %v1014, 110
  %v1998 = vpop.permute.xlu0 %1997
  %1999 = vrot.lane.b32.xlu0 %v1015, 110
  %v2000 = vpop.permute.xlu0 %1999
  %2001 = vrot.lane.b32.xlu0 %v1016, 110
  %v2002 = vpop.permute.xlu0 %2001
  %2003 = vrot.lane.b32.xlu0 %v1017, 110
  %v2004 = vpop.permute.xlu0 %2003
  %2005 = vrot.lane.b32.xlu0 %v1018, 110
  %v2006 = vpop.permute.xlu0 %2005
  %vm2007 = vcmask 900096
  %v2008 = vsel %vm2007, %v1996, %v1998
  %v2009 = vsel %vm2007, %v1998, %v2000
  %v2010 = vsel %vm2007, %v2000, %v2002
  %v2011 = vsel %vm2007, %v2002, %v2004
  %v2012 = vsel %vm2007, %v2004, %v2006
  %v2019 = vsel %vm36, %v1994, 0
  %2021 = vmatprep.subr.mxu0 0.0
  %2022 = vmatpush1.msra.mxu0 0.0
  %2023 = vmatprep.subr.mxu0 0.0
  %2024 = vmatpush1.msra.mxu0 0.0
  %2025 = vmatprep.subr.mxu0 0.0
  %2026 = vmatpush1.msra.mxu0 0.0
  %2027 = vmatprep.subr.mxu0 0.0
  %2028 = vmatpush1.msra.mxu0 0.0
  %2029 = vmatprep.subr.mxu0 0.0
  %2030 = vmatpush1.msra.mxu0 0.0
  %2031 = vmatprep.subr.mxu0 0.0
  %2032 = vmatpush1.msra.mxu0 0.0
  %2033 = vmatprep.subr.mxu0 0.0
  %2034 = vmatpush1.msra.mxu0 0.0
  %2035 = vmatprep.subr.mxu0 0.0
  %2036 = vmatpush1.msra.mxu0 0.0
  %2037 = vmatprep.subr.mxu0 0.0
  %2038 = vmatpush1.msra.mxu0 0.0
  %2039 = vmatprep.subr.mxu0 0.0
  %2040 = vmatpush1.msra.mxu0 0.0
  %2041 = vmatprep.subr.mxu0 0.0
  %2042 = vmatpush1.msra.mxu0 0.0
  %2043 = vmatprep.subr.mxu0 0.0
  %2044 = vmatpush1.msra.mxu0 0.0
  %2045 = vmatprep.subr.mxu0 0.0
  %2046 = vmatpush1.msra.mxu0 0.0
  %2047 = vmatprep.subr.mxu0 0.0
  %2048 = vmatpush1.msra.mxu0 0.0
  %2049 = vmatprep.subr.mxu0 0.0
  %2050 = vmatpush1.msra.mxu0 0.0
  %2051 = vmatprep.subr.mxu0 %v2009
  %2052 = vmatpush1.msra.mxu0 %v2008
  %2053 = vmatprep.subr.mxu0 0.0
  %2054 = vmatpush2.msra.mxu0 0.0
  %2055 = vmatprep.subr.mxu0 0.0
  %2056 = vmatpush2.msra.mxu0 0.0
  %2057 = vmatprep.subr.mxu0 0.0
  %2058 = vmatpush2.msra.mxu0 0.0
  %2059 = vmatprep.subr.mxu0 0.0
  %2060 = vmatpush2.msra.mxu0 0.0
  %2061 = vmatprep.subr.mxu0 0.0
  %2062 = vmatpush2.msra.mxu0 0.0
  %2063 = vmatprep.subr.mxu0 0.0
  %2064 = vmatpush2.msra.mxu0 0.0
  %2065 = vmatprep.subr.mxu0 0.0
  %2066 = vmatpush2.msra.mxu0 0.0
  %2067 = vmatprep.subr.mxu0 0.0
  %2068 = vmatpush2.msra.mxu0 0.0
  %2069 = vmatprep.subr.mxu0 0.0
  %2070 = vmatpush2.msra.mxu0 0.0
  %2071 = vmatprep.subr.mxu0 0.0
  %2072 = vmatpush2.msra.mxu0 0.0
  %2073 = vmatprep.subr.mxu0 0.0
  %2074 = vmatpush2.msra.mxu0 0.0
  %2075 = vmatprep.subr.mxu0 0.0
  %2076 = vmatpush2.msra.mxu0 0.0
  %2077 = vmatprep.subr.mxu0 0.0
  %2078 = vmatpush2.msra.mxu0 0.0
  %2079 = vmatprep.subr.mxu0 0.0
  %2080 = vmatpush2.msra.mxu0 0.0
  %2081 = vmatprep.subr.mxu0 0.0
  %2082 = vmatpush2.msra.mxu0 0.0
  %2083 = vmatprep.subr.mxu0 0.0
  %2084 = vmatpush2.msra.mxu0 0.0
  %2085 = vmatprep.mubr.f32.mxu0 0.0
  %2086 = vmatmul.mubr.f32.gmra.mxu0 %v2019
  %v2087 = vpop.f32.mrf.mxu0
  %v2088 = vadd.f32 0.0, %v2087
  %v2089 = vpop.f32.mrf.mxu0
  %v2090 = vadd.f32 0.0, %v2089
  %2091 = vdwg.mxu0
  %2092 = vmatprep.subr.mxu0 0.0
  %2093 = vmatpush1.msra.mxu0 0.0
  %2094 = vmatprep.subr.mxu0 0.0
  %2095 = vmatpush1.msra.mxu0 0.0
  %2096 = vmatprep.subr.mxu0 0.0
  %2097 = vmatpush1.msra.mxu0 0.0
  %2098 = vmatprep.subr.mxu0 0.0
  %2099 = vmatpush1.msra.mxu0 0.0
  %2100 = vmatprep.subr.mxu0 0.0
  %2101 = vmatpush1.msra.mxu0 0.0
  %2102 = vmatprep.subr.mxu0 0.0
  %2103 = vmatpush1.msra.mxu0 0.0
  %2104 = vmatprep.subr.mxu0 0.0
  %2105 = vmatpush1.msra.mxu0 0.0
  %2106 = vmatprep.subr.mxu0 0.0
  %2107 = vmatpush1.msra.mxu0 0.0
  %2108 = vmatprep.subr.mxu0 0.0
  %2109 = vmatpush1.msra.mxu0 0.0
  %2110 = vmatprep.subr.mxu0 0.0
  %2111 = vmatpush1.msra.mxu0 0.0
  %2112 = vmatprep.subr.mxu0 0.0
  %2113 = vmatpush1.msra.mxu0 0.0
  %2114 = vmatprep.subr.mxu0 0.0
  %2115 = vmatpush1.msra.mxu0 0.0
  %2116 = vmatprep.subr.mxu0 0.0
  %2117 = vmatpush1.msra.mxu0 0.0
  %2118 = vmatprep.subr.mxu0 0.0
  %2119 = vmatpush1.msra.mxu0 0.0
  %2120 = vmatprep.subr.mxu0 0.0
  %2121 = vmatpush1.msra.mxu0 0.0
  %2122 = vmatprep.subr.mxu0 %v2011
  %2123 = vmatpush1.msra.mxu0 %v2010
  %2124 = vmatprep.subr.mxu0 0.0
  %2125 = vmatpush2.msra.mxu0 0.0
  %2126 = vmatprep.subr.mxu0 0.0
  %2127 = vmatpush2.msra.mxu0 0.0
  %2128 = vmatprep.subr.mxu0 0.0
  %2129 = vmatpush2.msra.mxu0 0.0
  %2130 = vmatprep.subr.mxu0 0.0
  %2131 = vmatpush2.msra.mxu0 0.0
  %2132 = vmatprep.subr.mxu0 0.0
  %2133 = vmatpush2.msra.mxu0 0.0
  %2134 = vmatprep.subr.mxu0 0.0
  %2135 = vmatpush2.msra.mxu0 0.0
  %2136 = vmatprep.subr.mxu0 0.0
  %2137 = vmatpush2.msra.mxu0 0.0
  %2138 = vmatprep.subr.mxu0 0.0
  %2139 = vmatpush2.msra.mxu0 0.0
  %2140 = vmatprep.subr.mxu0 0.0
  %2141 = vmatpush2.msra.mxu0 0.0
  %2142 = vmatprep.subr.mxu0 0.0
  %2143 = vmatpush2.msra.mxu0 0.0
  %2144 = vmatprep.subr.mxu0 0.0
  %2145 = vmatpush2.msra.mxu0 0.0
  %2146 = vmatprep.subr.mxu0 0.0
  %2147 = vmatpush2.msra.mxu0 0.0
  %2148 = vmatprep.subr.mxu0 0.0
  %2149 = vmatpush2.msra.mxu0 0.0
  %2150 = vmatprep.subr.mxu0 0.0
  %2151 = vmatpush2.msra.mxu0 0.0
  %2152 = vmatprep.subr.mxu0 0.0
  %2153 = vmatpush2.msra.mxu0 0.0
  %2154 = vmatprep.subr.mxu0 0.0
  %2155 = vmatpush2.msra.mxu0 0.0
  %2156 = vmatprep.mubr.f32.mxu0 0.0
  %2157 = vmatmul.mubr.f32.gmra.mxu0 %v2019
  %v2158 = vpop.f32.mrf.mxu0
  %v2159 = vadd.f32 0.0, %v2158
  %v2160 = vpop.f32.mrf.mxu0
  %v2161 = vadd.f32 0.0, %v2160
  %2162 = vdwg.mxu0
  %2163 = vmatprep.subr.mxu0 0.0
  %2164 = vmatpush1.msra.mxu0 0.0
  %2165 = vmatprep.subr.mxu0 0.0
  %2166 = vmatpush1.msra.mxu0 0.0
  %2167 = vmatprep.subr.mxu0 0.0
  %2168 = vmatpush1.msra.mxu0 0.0
  %2169 = vmatprep.subr.mxu0 0.0
  %2170 = vmatpush1.msra.mxu0 0.0
  %2171 = vmatprep.subr.mxu0 0.0
  %2172 = vmatpush1.msra.mxu0 0.0
  %2173 = vmatprep.subr.mxu0 0.0
  %2174 = vmatpush1.msra.mxu0 0.0
  %2175 = vmatprep.subr.mxu0 0.0
  %2176 = vmatpush1.msra.mxu0 0.0
  %2177 = vmatprep.subr.mxu0 0.0
  %2178 = vmatpush1.msra.mxu0 0.0
  %2179 = vmatprep.subr.mxu0 0.0
  %2180 = vmatpush1.msra.mxu0 0.0
  %2181 = vmatprep.subr.mxu0 0.0
  %2182 = vmatpush1.msra.mxu0 0.0
  %2183 = vmatprep.subr.mxu0 0.0
  %2184 = vmatpush1.msra.mxu0 0.0
  %2185 = vmatprep.subr.mxu0 0.0
  %2186 = vmatpush1.msra.mxu0 0.0
  %2187 = vmatprep.subr.mxu0 0.0
  %2188 = vmatpush1.msra.mxu0 0.0
  %2189 = vmatprep.subr.mxu0 0.0
  %2190 = vmatpush1.msra.mxu0 0.0
  %2191 = vmatprep.subr.mxu0 0.0
  %2192 = vmatpush1.msra.mxu0 0.0
  %2193 = vmatprep.subr.mxu0 %v2006
  %2194 = vmatpush1.msra.mxu0 %v2012
  %2195 = vmatprep.subr.mxu0 0.0
  %2196 = vmatpush2.msra.mxu0 0.0
  %2197 = vmatprep.subr.mxu0 0.0
  %2198 = vmatpush2.msra.mxu0 0.0
  %2199 = vmatprep.subr.mxu0 0.0
  %2200 = vmatpush2.msra.mxu0 0.0
  %2201 = vmatprep.subr.mxu0 0.0
  %2202 = vmatpush2.msra.mxu0 0.0
  %2203 = vmatprep.subr.mxu0 0.0
  %2204 = vmatpush2.msra.mxu0 0.0
  %2205 = vmatprep.subr.mxu0 0.0
  %2206 = vmatpush2.msra.mxu0 0.0
  %2207 = vmatprep.subr.mxu0 0.0
  %2208 = vmatpush2.msra.mxu0 0.0
  %2209 = vmatprep.subr.mxu0 0.0
  %2210 = vmatpush2.msra.mxu0 0.0
  %2211 = vmatprep.subr.mxu0 0.0
  %2212 = vmatpush2.msra.mxu0 0.0
  %2213 = vmatprep.subr.mxu0 0.0
  %2214 = vmatpush2.msra.mxu0 0.0
  %2215 = vmatprep.subr.mxu0 0.0
  %2216 = vmatpush2.msra.mxu0 0.0
  %2217 = vmatprep.subr.mxu0 0.0
  %2218 = vmatpush2.msra.mxu0 0.0
  %2219 = vmatprep.subr.mxu0 0.0
  %2220 = vmatpush2.msra.mxu0 0.0
  %2221 = vmatprep.subr.mxu0 0.0
  %2222 = vmatpush2.msra.mxu0 0.0
  %2223 = vmatprep.subr.mxu0 0.0
  %2224 = vmatpush2.msra.mxu0 0.0
  %2225 = vmatprep.subr.mxu0 0.0
  %2226 = vmatpush2.msra.mxu0 0.0
  %2227 = vmatprep.mubr.f32.mxu0 0.0
  %2228 = vmatmul.mubr.f32.gmra.mxu0 %v2019
  %v2229 = vpop.f32.mrf.mxu0
  %v2230 = vadd.f32 0.0, %v2229
  %v2231 = vpop.f32.mrf.mxu0
  %v2232 = vadd.f32 0.0, %v2231
  %2233 = vdwg.mxu0
  %v2234 = vadd.f32 %v1987, %v2088
  %v2235 = vadd.f32 %v1988, %v2090
  %v2236 = vadd.f32 %v1989, %v2159
  %v2237 = vadd.f32 %v1990, %v2161
  %v2238 = vadd.f32 %v1991, %v2230
  %v2239 = vadd.f32 %v1992, %v2232
  %2240 = vrot.lane.b32.xlu0 %v277, 64
  %v2241 = vpop.permute.xlu0 %2240
  %2242 = vrot.lane.b32.xlu0 %v1013, 109
  %v2243 = vpop.permute.xlu0 %2242
  %2244 = vrot.lane.b32.xlu0 %v1014, 109
  %v2245 = vpop.permute.xlu0 %2244
  %2246 = vrot.lane.b32.xlu0 %v1015, 109
  %v2247 = vpop.permute.xlu0 %2246
  %2248 = vrot.lane.b32.xlu0 %v1016, 109
  %v2249 = vpop.permute.xlu0 %2248
  %2250 = vrot.lane.b32.xlu0 %v1017, 109
  %v2251 = vpop.permute.xlu0 %2250
  %2252 = vrot.lane.b32.xlu0 %v1018, 109
  %v2253 = vpop.permute.xlu0 %2252
  %vm2254 = vcmask 891904
  %v2255 = vsel %vm2254, %v2243, %v2245
  %v2256 = vsel %vm2254, %v2245, %v2247
  %v2257 = vsel %vm2254, %v2247, %v2249
  %v2258 = vsel %vm2254, %v2249, %v2251
  %v2259 = vsel %vm2254, %v2251, %v2253
  %v2266 = vsel %vm36, %v2241, 0
  %2268 = vmatprep.subr.mxu0 0.0
  %2269 = vmatpush1.msra.mxu0 0.0
  %2270 = vmatprep.subr.mxu0 0.0
  %2271 = vmatpush1.msra.mxu0 0.0
  %2272 = vmatprep.subr.mxu0 0.0
  %2273 = vmatpush1.msra.mxu0 0.0
  %2274 = vmatprep.subr.mxu0 0.0
  %2275 = vmatpush1.msra.mxu0 0.0
  %2276 = vmatprep.subr.mxu0 0.0
  %2277 = vmatpush1.msra.mxu0 0.0
  %2278 = vmatprep.subr.mxu0 0.0
  %2279 = vmatpush1.msra.mxu0 0.0
  %2280 = vmatprep.subr.mxu0 0.0
  %2281 = vmatpush1.msra.mxu0 0.0
  %2282 = vmatprep.subr.mxu0 0.0
  %2283 = vmatpush1.msra.mxu0 0.0
  %2284 = vmatprep.subr.mxu0 0.0
  %2285 = vmatpush1.msra.mxu0 0.0
  %2286 = vmatprep.subr.mxu0 0.0
  %2287 = vmatpush1.msra.mxu0 0.0
  %2288 = vmatprep.subr.mxu0 0.0
  %2289 = vmatpush1.msra.mxu0 0.0
  %2290 = vmatprep.subr.mxu0 0.0
  %2291 = vmatpush1.msra.mxu0 0.0
  %2292 = vmatprep.subr.mxu0 0.0
  %2293 = vmatpush1.msra.mxu0 0.0
  %2294 = vmatprep.subr.mxu0 0.0
  %2295 = vmatpush1.msra.mxu0 0.0
  %2296 = vmatprep.subr.mxu0 0.0
  %2297 = vmatpush1.msra.mxu0 0.0
  %2298 = vmatprep.subr.mxu0 %v2256
  %2299 = vmatpush1.msra.mxu0 %v2255
  %2300 = vmatprep.subr.mxu0 0.0
  %2301 = vmatpush2.msra.mxu0 0.0
  %2302 = vmatprep.subr.mxu0 0.0
  %2303 = vmatpush2.msra.mxu0 0.0
  %2304 = vmatprep.subr.mxu0 0.0
  %2305 = vmatpush2.msra.mxu0 0.0
  %2306 = vmatprep.subr.mxu0 0.0
  %2307 = vmatpush2.msra.mxu0 0.0
  %2308 = vmatprep.subr.mxu0 0.0
  %2309 = vmatpush2.msra.mxu0 0.0
  %2310 = vmatprep.subr.mxu0 0.0
  %2311 = vmatpush2.msra.mxu0 0.0
  %2312 = vmatprep.subr.mxu0 0.0
  %2313 = vmatpush2.msra.mxu0 0.0
  %2314 = vmatprep.subr.mxu0 0.0
  %2315 = vmatpush2.msra.mxu0 0.0
  %2316 = vmatprep.subr.mxu0 0.0
  %2317 = vmatpush2.msra.mxu0 0.0
  %2318 = vmatprep.subr.mxu0 0.0
  %2319 = vmatpush2.msra.mxu0 0.0
  %2320 = vmatprep.subr.mxu0 0.0
  %2321 = vmatpush2.msra.mxu0 0.0
  %2322 = vmatprep.subr.mxu0 0.0
  %2323 = vmatpush2.msra.mxu0 0.0
  %2324 = vmatprep.subr.mxu0 0.0
  %2325 = vmatpush2.msra.mxu0 0.0
  %2326 = vmatprep.subr.mxu0 0.0
  %2327 = vmatpush2.msra.mxu0 0.0
  %2328 = vmatprep.subr.mxu0 0.0
  %2329 = vmatpush2.msra.mxu0 0.0
  %2330 = vmatprep.subr.mxu0 0.0
  %2331 = vmatpush2.msra.mxu0 0.0
  %2332 = vmatprep.mubr.f32.mxu0 0.0
  %2333 = vmatmul.mubr.f32.gmra.mxu0 %v2266
  %v2334 = vpop.f32.mrf.mxu0
  %v2335 = vadd.f32 0.0, %v2334
  %v2336 = vpop.f32.mrf.mxu0
  %v2337 = vadd.f32 0.0, %v2336
  %2338 = vdwg.mxu0
  %2339 = vmatprep.subr.mxu0 0.0
  %2340 = vmatpush1.msra.mxu0 0.0
  %2341 = vmatprep.subr.mxu0 0.0
  %2342 = vmatpush1.msra.mxu0 0.0
  %2343 = vmatprep.subr.mxu0 0.0
  %2344 = vmatpush1.msra.mxu0 0.0
  %2345 = vmatprep.subr.mxu0 0.0
  %2346 = vmatpush1.msra.mxu0 0.0
  %2347 = vmatprep.subr.mxu0 0.0
  %2348 = vmatpush1.msra.mxu0 0.0
  %2349 = vmatprep.subr.mxu0 0.0
  %2350 = vmatpush1.msra.mxu0 0.0
  %2351 = vmatprep.subr.mxu0 0.0
  %2352 = vmatpush1.msra.mxu0 0.0
  %2353 = vmatprep.subr.mxu0 0.0
  %2354 = vmatpush1.msra.mxu0 0.0
  %2355 = vmatprep.subr.mxu0 0.0
  %2356 = vmatpush1.msra.mxu0 0.0
  %2357 = vmatprep.subr.mxu0 0.0
  %2358 = vmatpush1.msra.mxu0 0.0
  %2359 = vmatprep.subr.mxu0 0.0
  %2360 = vmatpush1.msra.mxu0 0.0
  %2361 = vmatprep.subr.mxu0 0.0
  %2362 = vmatpush1.msra.mxu0 0.0
  %2363 = vmatprep.subr.mxu0 0.0
  %2364 = vmatpush1.msra.mxu0 0.0
  %2365 = vmatprep.subr.mxu0 0.0
  %2366 = vmatpush1.msra.mxu0 0.0
  %2367 = vmatprep.subr.mxu0 0.0
  %2368 = vmatpush1.msra.mxu0 0.0
  %2369 = vmatprep.subr.mxu0 %v2258
  %2370 = vmatpush1.msra.mxu0 %v2257
  %2371 = vmatprep.subr.mxu0 0.0
  %2372 = vmatpush2.msra.mxu0 0.0
  %2373 = vmatprep.subr.mxu0 0.0
  %2374 = vmatpush2.msra.mxu0 0.0
  %2375 = vmatprep.subr.mxu0 0.0
  %2376 = vmatpush2.msra.mxu0 0.0
  %2377 = vmatprep.subr.mxu0 0.0
  %2378 = vmatpush2.msra.mxu0 0.0
  %2379 = vmatprep.subr.mxu0 0.0
  %2380 = vmatpush2.msra.mxu0 0.0
  %2381 = vmatprep.subr.mxu0 0.0
  %2382 = vmatpush2.msra.mxu0 0.0
  %2383 = vmatprep.subr.mxu0 0.0
  %2384 = vmatpush2.msra.mxu0 0.0
  %2385 = vmatprep.subr.mxu0 0.0
  %2386 = vmatpush2.msra.mxu0 0.0
  %2387 = vmatprep.subr.mxu0 0.0
  %2388 = vmatpush2.msra.mxu0 0.0
  %2389 = vmatprep.subr.mxu0 0.0
  %2390 = vmatpush2.msra.mxu0 0.0
  %2391 = vmatprep.subr.mxu0 0.0
  %2392 = vmatpush2.msra.mxu0 0.0
  %2393 = vmatprep.subr.mxu0 0.0
  %2394 = vmatpush2.msra.mxu0 0.0
  %2395 = vmatprep.subr.mxu0 0.0
  %2396 = vmatpush2.msra.mxu0 0.0
  %2397 = vmatprep.subr.mxu0 0.0
  %2398 = vmatpush2.msra.mxu0 0.0
  %2399 = vmatprep.subr.mxu0 0.0
  %2400 = vmatpush2.msra.mxu0 0.0
  %2401 = vmatprep.subr.mxu0 0.0
  %2402 = vmatpush2.msra.mxu0 0.0
  %2403 = vmatprep.mubr.f32.mxu0 0.0
  %2404 = vmatmul.mubr.f32.gmra.mxu0 %v2266
  %v2405 = vpop.f32.mrf.mxu0
  %v2406 = vadd.f32 0.0, %v2405
  %v2407 = vpop.f32.mrf.mxu0
  %v2408 = vadd.f32 0.0, %v2407
  %2409 = vdwg.mxu0
  %2410 = vmatprep.subr.mxu0 0.0
  %2411 = vmatpush1.msra.mxu0 0.0
  %2412 = vmatprep.subr.mxu0 0.0
  %2413 = vmatpush1.msra.mxu0 0.0
  %2414 = vmatprep.subr.mxu0 0.0
  %2415 = vmatpush1.msra.mxu0 0.0
  %2416 = vmatprep.subr.mxu0 0.0
  %2417 = vmatpush1.msra.mxu0 0.0
  %2418 = vmatprep.subr.mxu0 0.0
  %2419 = vmatpush1.msra.mxu0 0.0
  %2420 = vmatprep.subr.mxu0 0.0
  %2421 = vmatpush1.msra.mxu0 0.0
  %2422 = vmatprep.subr.mxu0 0.0
  %2423 = vmatpush1.msra.mxu0 0.0
  %2424 = vmatprep.subr.mxu0 0.0
  %2425 = vmatpush1.msra.mxu0 0.0
  %2426 = vmatprep.subr.mxu0 0.0
  %2427 = vmatpush1.msra.mxu0 0.0
  %2428 = vmatprep.subr.mxu0 0.0
  %2429 = vmatpush1.msra.mxu0 0.0
  %2430 = vmatprep.subr.mxu0 0.0
  %2431 = vmatpush1.msra.mxu0 0.0
  %2432 = vmatprep.subr.mxu0 0.0
  %2433 = vmatpush1.msra.mxu0 0.0
  %2434 = vmatprep.subr.mxu0 0.0
  %2435 = vmatpush1.msra.mxu0 0.0
  %2436 = vmatprep.subr.mxu0 0.0
  %2437 = vmatpush1.msra.mxu0 0.0
  %2438 = vmatprep.subr.mxu0 0.0
  %2439 = vmatpush1.msra.mxu0 0.0
  %2440 = vmatprep.subr.mxu0 %v2253
  %2441 = vmatpush1.msra.mxu0 %v2259
  %2442 = vmatprep.subr.mxu0 0.0
  %2443 = vmatpush2.msra.mxu0 0.0
  %2444 = vmatprep.subr.mxu0 0.0
  %2445 = vmatpush2.msra.mxu0 0.0
  %2446 = vmatprep.subr.mxu0 0.0
  %2447 = vmatpush2.msra.mxu0 0.0
  %2448 = vmatprep.subr.mxu0 0.0
  %2449 = vmatpush2.msra.mxu0 0.0
  %2450 = vmatprep.subr.mxu0 0.0
  %2451 = vmatpush2.msra.mxu0 0.0
  %2452 = vmatprep.subr.mxu0 0.0
  %2453 = vmatpush2.msra.mxu0 0.0
  %2454 = vmatprep.subr.mxu0 0.0
  %2455 = vmatpush2.msra.mxu0 0.0
  %2456 = vmatprep.subr.mxu0 0.0
  %2457 = vmatpush2.msra.mxu0 0.0
  %2458 = vmatprep.subr.mxu0 0.0
  %2459 = vmatpush2.msra.mxu0 0.0
  %2460 = vmatprep.subr.mxu0 0.0
  %2461 = vmatpush2.msra.mxu0 0.0
  %2462 = vmatprep.subr.mxu0 0.0
  %2463 = vmatpush2.msra.mxu0 0.0
  %2464 = vmatprep.subr.mxu0 0.0
  %2465 = vmatpush2.msra.mxu0 0.0
  %2466 = vmatprep.subr.mxu0 0.0
  %2467 = vmatpush2.msra.mxu0 0.0
  %2468 = vmatprep.subr.mxu0 0.0
  %2469 = vmatpush2.msra.mxu0 0.0
  %2470 = vmatprep.subr.mxu0 0.0
  %2471 = vmatpush2.msra.mxu0 0.0
  %2472 = vmatprep.subr.mxu0 0.0
  %2473 = vmatpush2.msra.mxu0 0.0
  %2474 = vmatprep.mubr.f32.mxu0 0.0
  %2475 = vmatmul.mubr.f32.gmra.mxu0 %v2266
  %v2476 = vpop.f32.mrf.mxu0
  %v2477 = vadd.f32 0.0, %v2476
  %v2478 = vpop.f32.mrf.mxu0
  %v2479 = vadd.f32 0.0, %v2478
  %2480 = vdwg.mxu0
  %v2481 = vadd.f32 %v2234, %v2335
  %v2482 = vadd.f32 %v2235, %v2337
  %v2483 = vadd.f32 %v2236, %v2406
  %v2484 = vadd.f32 %v2237, %v2408
  %v2485 = vadd.f32 %v2238, %v2477
  %v2486 = vadd.f32 %v2239, %v2479
  %v2488 = vlaneseq
  %v2489 = vshrl.u32 %v2488, 7
  %v2490 = vsub.s32 0, %v2489
  %v2491 = vrot.slane %v270, %v2490
  %v2492 = vlaneseq
  %v2493 = vshrl.u32 %v2492, 7
  %v2494 = vsub.s32 1, %v2493
  %v2495 = vrot.slane %v270, %v2494
  %v2496 = vlaneseq
  %v2497 = vshrl.u32 %v2496, 7
  %v2498 = vsub.s32 2, %v2497
  %v2499 = vrot.slane %v270, %v2498
  %v2500 = vlaneseq
  %v2501 = vshrl.u32 %v2500, 7
  %v2502 = vsub.s32 3, %v2501
  %v2503 = vrot.slane %v270, %v2502
  %v2504 = vlaneseq
  %v2505 = vshrl.u32 %v2504, 7
  %v2506 = vsub.s32 4, %v2505
  %v2507 = vrot.slane %v270, %v2506
  %v2508 = vlaneseq
  %v2509 = vshrl.u32 %v2508, 7
  %v2510 = vsub.s32 5, %v2509
  %v2511 = vrot.slane %v270, %v2510
  %v2518 = vmul.f32 %v2481, %v2491
  %v2519 = vmul.f32 %v2482, %v2495
  %v2520 = vmul.f32 %v2483, %v2499
  %v2521 = vmul.f32 %v2484, %v2503
  %v2522 = vmul.f32 %v2485, %v2507
  %v2523 = vmul.f32 %v2486, %v2511
  %v2524 = vadd.f32 %v2518, %v2519
  %v2525 = vadd.f32 %v2524, %v2520
  %v2526 = vadd.f32 %v2525, %v2521
  %v2527 = vadd.f32 %v2526, %v2522
  %v2528 = vsel %vm36, %v2523, 0.0
  %v2529 = vadd.f32 %v2527, %v2528
  %2530 = vadd.xlane.f32.xlu0 %v2529
  %v2531 = vpop.xlane.xlu0 %2530
  %v2532 = vmul.f32 %v2531, 0.001953125
  %v2533 = vsub.f32 %v2481, %v2532
  %v2534 = vsub.f32 %v2482, %v2532
  %v2535 = vsub.f32 %v2483, %v2532
  %v2536 = vsub.f32 %v2484, %v2532
  %v2537 = vsub.f32 %v2485, %v2532
  %v2538 = vsub.f32 %v2486, %v2532
  %v2539 = vmul.f32 %v2533, %v2533
  %v2540 = vmul.f32 %v2534, %v2534
  %v2541 = vmul.f32 %v2535, %v2535
  %v2542 = vmul.f32 %v2536, %v2536
  %v2543 = vmul.f32 %v2537, %v2537
  %v2544 = vmul.f32 %v2538, %v2538
  %v2545 = vmul.f32 %v2539, %v2491
  %v2546 = vmul.f32 %v2540, %v2495
  %v2547 = vmul.f32 %v2541, %v2499
  %v2548 = vmul.f32 %v2542, %v2503
  %v2549 = vmul.f32 %v2543, %v2507
  %v2550 = vmul.f32 %v2544, %v2511
  %v2551 = vadd.f32 %v2545, %v2546
  %v2552 = vadd.f32 %v2551, %v2547
  %v2553 = vadd.f32 %v2552, %v2548
  %v2554 = vadd.f32 %v2553, %v2549
  %v2555 = vsel %vm36, %v2550, 0.0
  %v2556 = vadd.f32 %v2554, %v2555
  %2557 = vadd.xlane.f32.xlu0 %v2556
  %v2558 = vpop.xlane.xlu0 %2557
  %v2559 = vmul.f32 %v2558, 0.001953125
  %v2560 = vld [vmem:[%s3] sm:$0xff]
  %v2561 = vadd.f32 %v2559, 1e-05
  %v2562 = vrsqrt.pop %v2561
  %v2563 = vmul.f32 %v2560, %v2562
  %2565 = vset.pattern.permute.xlu0 0
  %2566 = vperm.xlu0 %2565, %v2563
  %v2567 = vpop.permute.xlu0 %2566
  %v2569 = vmul.f32 %v2533, %v2567
  %v2570 = vmul.f32 %v2534, %v2567
  %v2571 = vmul.f32 %v2535, %v2567
  %v2572 = vmul.f32 %v2536, %v2567
  %v2573 = vmul.f32 %v2537, %v2567
  %v2574 = vmul.f32 %v2538, %v2567
  %v2575 = vld [vmem:[%s4] sm:$0xff]
  %2577 = vset.pattern.permute.xlu0 0
  %2578 = vperm.xlu0 %2577, %v2575
  %v2579 = vpop.permute.xlu0 %2578
  %v2581 = vadd.f32 %v2569, %v2579
  %v2582 = vadd.f32 %v2570, %v2579
  %v2583 = vadd.f32 %v2571, %v2579
  %v2584 = vadd.f32 %v2572, %v2579
  %v2585 = vadd.f32 %v2573, %v2579
  %v2586 = vadd.f32 %v2574, %v2579
  %v2587 = vmax.f32 %v2581, 0.0
  %v2588 = vmax.f32 %v2582, 0.0
  %v2589 = vmax.f32 %v2583, 0.0
  %v2590 = vmax.f32 %v2584, 0.0
  %v2591 = vmax.f32 %v2585, 0.0
  %v2592 = vmax.f32 %v2586, 0.0
  %v2593 = vmul.f32 %v2587, %v2491
  %v2594 = vmul.f32 %v2588, %v2495
  %v2595 = vmul.f32 %v2589, %v2499
  %v2596 = vmul.f32 %v2590, %v2503
  %v2597 = vmul.f32 %v2591, %v2507
  %v2598 = vmul.f32 %v2592, %v2511
  %2599 = vst [vmem:[#allocation3] sm:$0xff] 0.0
  %vm2600 = vcmask 1047616
  %2601 = vst.msk [vmem:[#allocation3 + $0x30] sm:$0xff] %vm2600, 0.0
  %2602 = vst.msk [vmem:[#allocation3 + $0x38] sm:$0xff] %vm36, 0.0
  %2603 = vst [vmem:[#allocation3 + $0x8] sm:$0xff] %v2593
  %2604 = vst [vmem:[#allocation3 + $0x10] sm:$0xff] %v2594
  %2605 = vst [vmem:[#allocation3 + $0x18] sm:$0xff] %v2595
  %2606 = vst [vmem:[#allocation3 + $0x20] sm:$0xff] %v2596
  %2607 = vst [vmem:[#allocation3 + $0x28] sm:$0xff] %v2597
  %2608 = vst.msk [vmem:[#allocation3 + $0x30] sm:$0xff] %vm36, %v2598
  %v2609 = vld [vmem:[#allocation3] sm:$0xff]
  %v2610 = vld [vmem:[#allocation3 + $0x8] sm:$0xff]
  %v2611 = vld [vmem:[#allocation3 + $0x10] sm:$0xff]
  %v2612 = vld [vmem:[#allocation3 + $0x18] sm:$0xff]
  %v2613 = vld [vmem:[#allocation3 + $0x20] sm:$0xff]
  %v2614 = vld [vmem:[#allocation3 + $0x28] sm:$0xff]
  %v2615 = vld [vmem:[%s5] sm:$0xff]
  %2617 = vrot.lane.b32.xlu0 %v2615, 120
  %v2618 = vpop.permute.xlu0 %2617
  %2625 = vrot.lane.b32.xlu0 %v2609, 18
  %v2626 = vpop.permute.xlu0 %2625
  %2627 = vrot.lane.b32.xlu0 %v2610, 18
  %v2628 = vpop.permute.xlu0 %2627
  %2629 = vrot.lane.b32.xlu0 %v2611, 18
  %v2630 = vpop.permute.xlu0 %2629
  %2631 = vrot.lane.b32.xlu0 %v2612, 18
  %v2632 = vpop.permute.xlu0 %2631
  %2633 = vrot.lane.b32.xlu0 %v2613, 18
  %v2634 = vpop.permute.xlu0 %2633
  %2635 = vrot.lane.b32.xlu0 %v2614, 18
  %v2636 = vpop.permute.xlu0 %2635
  %v2637 = vsel %vm299, %v2626, %v2628
  %v2638 = vsel %vm299, %v2628, %v2630
  %v2639 = vsel %vm299, %v2630, %v2632
  %v2640 = vsel %vm299, %v2632, %v2634
  %v2641 = vsel %vm299, %v2634, %v2636
  %v2648 = vsel %vm36, %v2618, 0
  %2650 = vmatprep.subr.mxu0 0.0
  %2651 = vmatpush1.msra.mxu0 0.0
  %2652 = vmatprep.subr.mxu0 0.0
  %2653 = vmatpush1.msra.mxu0 0.0
  %2654 = vmatprep.subr.mxu0 0.0
  %2655 = vmatpush1.msra.mxu0 0.0
  %2656 = vmatprep.subr.mxu0 0.0
  %2657 = vmatpush1.msra.mxu0 0.0
  %2658 = vmatprep.subr.mxu0 0.0
  %2659 = vmatpush1.msra.mxu0 0.0
  %2660 = vmatprep.subr.mxu0 0.0
  %2661 = vmatpush1.msra.mxu0 0.0
  %2662 = vmatprep.subr.mxu0 0.0
  %2663 = vmatpush1.msra.mxu0 0.0
  %2664 = vmatprep.subr.mxu0 0.0
  %2665 = vmatpush1.msra.mxu0 0.0
  %2666 = vmatprep.subr.mxu0 0.0
  %2667 = vmatpush1.msra.mxu0 0.0
  %2668 = vmatprep.subr.mxu0 0.0
  %2669 = vmatpush1.msra.mxu0 0.0
  %2670 = vmatprep.subr.mxu0 0.0
  %2671 = vmatpush1.msra.mxu0 0.0
  %2672 = vmatprep.subr.mxu0 0.0
  %2673 = vmatpush1.msra.mxu0 0.0
  %2674 = vmatprep.subr.mxu0 0.0
  %2675 = vmatpush1.msra.mxu0 0.0
  %2676 = vmatprep.subr.mxu0 0.0
  %2677 = vmatpush1.msra.mxu0 0.0
  %2678 = vmatprep.subr.mxu0 0.0
  %2679 = vmatpush1.msra.mxu0 0.0
  %2680 = vmatprep.subr.mxu0 %v2638
  %2681 = vmatpush1.msra.mxu0 %v2637
  %2682 = vmatprep.subr.mxu0 0.0
  %2683 = vmatpush2.msra.mxu0 0.0
  %2684 = vmatprep.subr.mxu0 0.0
  %2685 = vmatpush2.msra.mxu0 0.0
  %2686 = vmatprep.subr.mxu0 0.0
  %2687 = vmatpush2.msra.mxu0 0.0
  %2688 = vmatprep.subr.mxu0 0.0
  %2689 = vmatpush2.msra.mxu0 0.0
  %2690 = vmatprep.subr.mxu0 0.0
  %2691 = vmatpush2.msra.mxu0 0.0
  %2692 = vmatprep.subr.mxu0 0.0
  %2693 = vmatpush2.msra.mxu0 0.0
  %2694 = vmatprep.subr.mxu0 0.0
  %2695 = vmatpush2.msra.mxu0 0.0
  %2696 = vmatprep.subr.mxu0 0.0
  %2697 = vmatpush2.msra.mxu0 0.0
  %2698 = vmatprep.subr.mxu0 0.0
  %2699 = vmatpush2.msra.mxu0 0.0
  %2700 = vmatprep.subr.mxu0 0.0
  %2701 = vmatpush2.msra.mxu0 0.0
  %2702 = vmatprep.subr.mxu0 0.0
  %2703 = vmatpush2.msra.mxu0 0.0
  %2704 = vmatprep.subr.mxu0 0.0
  %2705 = vmatpush2.msra.mxu0 0.0
  %2706 = vmatprep.subr.mxu0 0.0
  %2707 = vmatpush2.msra.mxu0 0.0
  %2708 = vmatprep.subr.mxu0 0.0
  %2709 = vmatpush2.msra.mxu0 0.0
  %2710 = vmatprep.subr.mxu0 0.0
  %2711 = vmatpush2.msra.mxu0 0.0
  %2712 = vmatprep.subr.mxu0 0.0
  %2713 = vmatpush2.msra.mxu0 0.0
  %2714 = vmatprep.mubr.f32.mxu0 0.0
  %2715 = vmatmul.mubr.f32.gmra.mxu0 %v2648
  %v2716 = vpop.f32.mrf.mxu0
  %v2717 = vadd.f32 0.0, %v2716
  %v2718 = vpop.f32.mrf.mxu0
  %v2719 = vadd.f32 0.0, %v2718
  %2720 = vdwg.mxu0
  %2721 = vmatprep.subr.mxu0 0.0
  %2722 = vmatpush1.msra.mxu0 0.0
  %2723 = vmatprep.subr.mxu0 0.0
  %2724 = vmatpush1.msra.mxu0 0.0
  %2725 = vmatprep.subr.mxu0 0.0
  %2726 = vmatpush1.msra.mxu0 0.0
  %2727 = vmatprep.subr.mxu0 0.0
  %2728 = vmatpush1.msra.mxu0 0.0
  %2729 = vmatprep.subr.mxu0 0.0
  %2730 = vmatpush1.msra.mxu0 0.0
  %2731 = vmatprep.subr.mxu0 0.0
  %2732 = vmatpush1.msra.mxu0 0.0
  %2733 = vmatprep.subr.mxu0 0.0
  %2734 = vmatpush1.msra.mxu0 0.0
  %2735 = vmatprep.subr.mxu0 0.0
  %2736 = vmatpush1.msra.mxu0 0.0
  %2737 = vmatprep.subr.mxu0 0.0
  %2738 = vmatpush1.msra.mxu0 0.0
  %2739 = vmatprep.subr.mxu0 0.0
  %2740 = vmatpush1.msra.mxu0 0.0
  %2741 = vmatprep.subr.mxu0 0.0
  %2742 = vmatpush1.msra.mxu0 0.0
  %2743 = vmatprep.subr.mxu0 0.0
  %2744 = vmatpush1.msra.mxu0 0.0
  %2745 = vmatprep.subr.mxu0 0.0
  %2746 = vmatpush1.msra.mxu0 0.0
  %2747 = vmatprep.subr.mxu0 0.0
  %2748 = vmatpush1.msra.mxu0 0.0
  %2749 = vmatprep.subr.mxu0 0.0
  %2750 = vmatpush1.msra.mxu0 0.0
  %2751 = vmatprep.subr.mxu0 %v2640
  %2752 = vmatpush1.msra.mxu0 %v2639
  %2753 = vmatprep.subr.mxu0 0.0
  %2754 = vmatpush2.msra.mxu0 0.0
  %2755 = vmatprep.subr.mxu0 0.0
  %2756 = vmatpush2.msra.mxu0 0.0
  %2757 = vmatprep.subr.mxu0 0.0
  %2758 = vmatpush2.msra.mxu0 0.0
  %2759 = vmatprep.subr.mxu0 0.0
  %2760 = vmatpush2.msra.mxu0 0.0
  %2761 = vmatprep.subr.mxu0 0.0
  %2762 = vmatpush2.msra.mxu0 0.0
  %2763 = vmatprep.subr.mxu0 0.0
  %2764 = vmatpush2.msra.mxu0 0.0
  %2765 = vmatprep.subr.mxu0 0.0
  %2766 = vmatpush2.msra.mxu0 0.0
  %2767 = vmatprep.subr.mxu0 0.0
  %2768 = vmatpush2.msra.mxu0 0.0
  %2769 = vmatprep.subr.mxu0 0.0
  %2770 = vmatpush2.msra.mxu0 0.0
  %2771 = vmatprep.subr.mxu0 0.0
  %2772 = vmatpush2.msra.mxu0 0.0
  %2773 = vmatprep.subr.mxu0 0.0
  %2774 = vmatpush2.msra.mxu0 0.0
  %2775 = vmatprep.subr.mxu0 0.0
  %2776 = vmatpush2.msra.mxu0 0.0
  %2777 = vmatprep.subr.mxu0 0.0
  %2778 = vmatpush2.msra.mxu0 0.0
  %2779 = vmatprep.subr.mxu0 0.0
  %2780 = vmatpush2.msra.mxu0 0.0
  %2781 = vmatprep.subr.mxu0 0.0
  %2782 = vmatpush2.msra.mxu0 0.0
  %2783 = vmatprep.subr.mxu0 0.0
  %2784 = vmatpush2.msra.mxu0 0.0
  %2785 = vmatprep.mubr.f32.mxu0 0.0
  %2786 = vmatmul.mubr.f32.gmra.mxu0 %v2648
  %v2787 = vpop.f32.mrf.mxu0
  %v2788 = vadd.f32 0.0, %v2787
  %v2789 = vpop.f32.mrf.mxu0
  %v2790 = vadd.f32 0.0, %v2789
  %2791 = vdwg.mxu0
  %2792 = vmatprep.subr.mxu0 0.0
  %2793 = vmatpush1.msra.mxu0 0.0
  %2794 = vmatprep.subr.mxu0 0.0
  %2795 = vmatpush1.msra.mxu0 0.0
  %2796 = vmatprep.subr.mxu0 0.0
  %2797 = vmatpush1.msra.mxu0 0.0
  %2798 = vmatprep.subr.mxu0 0.0
  %2799 = vmatpush1.msra.mxu0 0.0
  %2800 = vmatprep.subr.mxu0 0.0
  %2801 = vmatpush1.msra.mxu0 0.0
  %2802 = vmatprep.subr.mxu0 0.0
  %2803 = vmatpush1.msra.mxu0 0.0
  %2804 = vmatprep.subr.mxu0 0.0
  %2805 = vmatpush1.msra.mxu0 0.0
  %2806 = vmatprep.subr.mxu0 0.0
  %2807 = vmatpush1.msra.mxu0 0.0
  %2808 = vmatprep.subr.mxu0 0.0
  %2809 = vmatpush1.msra.mxu0 0.0
  %2810 = vmatprep.subr.mxu0 0.0
  %2811 = vmatpush1.msra.mxu0 0.0
  %2812 = vmatprep.subr.mxu0 0.0
  %2813 = vmatpush1.msra.mxu0 0.0
  %2814 = vmatprep.subr.mxu0 0.0
  %2815 = vmatpush1.msra.mxu0 0.0
  %2816 = vmatprep.subr.mxu0 0.0
  %2817 = vmatpush1.msra.mxu0 0.0
  %2818 = vmatprep.subr.mxu0 0.0
  %2819 = vmatpush1.msra.mxu0 0.0
  %2820 = vmatprep.subr.mxu0 0.0
  %2821 = vmatpush1.msra.mxu0 0.0
  %2822 = vmatprep.subr.mxu0 %v2636
  %2823 = vmatpush1.msra.mxu0 %v2641
  %2824 = vmatprep.subr.mxu0 0.0
  %2825 = vmatpush2.msra.mxu0 0.0
  %2826 = vmatprep.subr.mxu0 0.0
  %2827 = vmatpush2.msra.mxu0 0.0
  %2828 = vmatprep.subr.mxu0 0.0
  %2829 = vmatpush2.msra.mxu0 0.0
  %2830 = vmatprep.subr.mxu0 0.0
  %2831 = vmatpush2.msra.mxu0 0.0
  %2832 = vmatprep.subr.mxu0 0.0
  %2833 = vmatpush2.msra.mxu0 0.0
  %2834 = vmatprep.subr.mxu0 0.0
  %2835 = vmatpush2.msra.mxu0 0.0
  %2836 = vmatprep.subr.mxu0 0.0
  %2837 = vmatpush2.msra.mxu0 0.0
  %2838 = vmatprep.subr.mxu0 0.0
  %2839 = vmatpush2.msra.mxu0 0.0
  %2840 = vmatprep.subr.mxu0 0.0
  %2841 = vmatpush2.msra.mxu0 0.0
  %2842 = vmatprep.subr.mxu0 0.0
  %2843 = vmatpush2.msra.mxu0 0.0
  %2844 = vmatprep.subr.mxu0 0.0
  %2845 = vmatpush2.msra.mxu0 0.0
  %2846 = vmatprep.subr.mxu0 0.0
  %2847 = vmatpush2.msra.mxu0 0.0
  %2848 = vmatprep.subr.mxu0 0.0
  %2849 = vmatpush2.msra.mxu0 0.0
  %2850 = vmatprep.subr.mxu0 0.0
  %2851 = vmatpush2.msra.mxu0 0.0
  %2852 = vmatprep.subr.mxu0 0.0
  %2853 = vmatpush2.msra.mxu0 0.0
  %2854 = vmatprep.subr.mxu0 0.0
  %2855 = vmatpush2.msra.mxu0 0.0
  %2856 = vmatprep.mubr.f32.mxu0 0.0
  %2857 = vmatmul.mubr.f32.gmra.mxu0 %v2648
  %v2858 = vpop.f32.mrf.mxu0
  %v2859 = vadd.f32 0.0, %v2858
  %v2860 = vpop.f32.mrf.mxu0
  %v2861 = vadd.f32 0.0, %v2860
  %2862 = vdwg.mxu0
  %2863 = vrot.lane.b32.xlu0 %v2609, 19
  %v2864 = vpop.permute.xlu0 %2863
  %2865 = vrot.lane.b32.xlu0 %v2610, 19
  %v2866 = vpop.permute.xlu0 %2865
  %2867 = vrot.lane.b32.xlu0 %v2611, 19
  %v2868 = vpop.permute.xlu0 %2867
  %2869 = vrot.lane.b32.xlu0 %v2612, 19
  %v2870 = vpop.permute.xlu0 %2869
  %2871 = vrot.lane.b32.xlu0 %v2613, 19
  %v2872 = vpop.permute.xlu0 %2871
  %2873 = vrot.lane.b32.xlu0 %v2614, 19
  %v2874 = vpop.permute.xlu0 %2873
  %v2875 = vsel %vm538, %v2864, %v2866
  %v2876 = vsel %vm538, %v2866, %v2868
  %v2877 = vsel %vm538, %v2868, %v2870
  %v2878 = vsel %vm538, %v2870, %v2872
  %v2879 = vsel %vm538, %v2872, %v2874
  %v2886 = vsel %vm36, %v2615, 0
  %2888 = vmatprep.subr.mxu0 0.0
  %2889 = vmatpush1.msra.mxu0 0.0
  %2890 = vmatprep.subr.mxu0 0.0
  %2891 = vmatpush1.msra.mxu0 0.0
  %2892 = vmatprep.subr.mxu0 0.0
  %2893 = vmatpush1.msra.mxu0 0.0
  %2894 = vmatprep.subr.mxu0 0.0
  %2895 = vmatpush1.msra.mxu0 0.0
  %2896 = vmatprep.subr.mxu0 0.0
  %2897 = vmatpush1.msra.mxu0 0.0
  %2898 = vmatprep.subr.mxu0 0.0
  %2899 = vmatpush1.msra.mxu0 0.0
  %2900 = vmatprep.subr.mxu0 0.0
  %2901 = vmatpush1.msra.mxu0 0.0
  %2902 = vmatprep.subr.mxu0 0.0
  %2903 = vmatpush1.msra.mxu0 0.0
  %2904 = vmatprep.subr.mxu0 0.0
  %2905 = vmatpush1.msra.mxu0 0.0
  %2906 = vmatprep.subr.mxu0 0.0
  %2907 = vmatpush1.msra.mxu0 0.0
  %2908 = vmatprep.subr.mxu0 0.0
  %2909 = vmatpush1.msra.mxu0 0.0
  %2910 = vmatprep.subr.mxu0 0.0
  %2911 = vmatpush1.msra.mxu0 0.0
  %2912 = vmatprep.subr.mxu0 0.0
  %2913 = vmatpush1.msra.mxu0 0.0
  %2914 = vmatprep.subr.mxu0 0.0
  %2915 = vmatpush1.msra.mxu0 0.0
  %2916 = vmatprep.subr.mxu0 0.0
  %2917 = vmatpush1.msra.mxu0 0.0
  %2918 = vmatprep.subr.mxu0 %v2876
  %2919 = vmatpush1.msra.mxu0 %v2875
  %2920 = vmatprep.subr.mxu0 0.0
  %2921 = vmatpush2.msra.mxu0 0.0
  %2922 = vmatprep.subr.mxu0 0.0
  %2923 = vmatpush2.msra.mxu0 0.0
  %2924 = vmatprep.subr.mxu0 0.0
  %2925 = vmatpush2.msra.mxu0 0.0
  %2926 = vmatprep.subr.mxu0 0.0
  %2927 = vmatpush2.msra.mxu0 0.0
  %2928 = vmatprep.subr.mxu0 0.0
  %2929 = vmatpush2.msra.mxu0 0.0
  %2930 = vmatprep.subr.mxu0 0.0
  %2931 = vmatpush2.msra.mxu0 0.0
  %2932 = vmatprep.subr.mxu0 0.0
  %2933 = vmatpush2.msra.mxu0 0.0
  %2934 = vmatprep.subr.mxu0 0.0
  %2935 = vmatpush2.msra.mxu0 0.0
  %2936 = vmatprep.subr.mxu0 0.0
  %2937 = vmatpush2.msra.mxu0 0.0
  %2938 = vmatprep.subr.mxu0 0.0
  %2939 = vmatpush2.msra.mxu0 0.0
  %2940 = vmatprep.subr.mxu0 0.0
  %2941 = vmatpush2.msra.mxu0 0.0
  %2942 = vmatprep.subr.mxu0 0.0
  %2943 = vmatpush2.msra.mxu0 0.0
  %2944 = vmatprep.subr.mxu0 0.0
  %2945 = vmatpush2.msra.mxu0 0.0
  %2946 = vmatprep.subr.mxu0 0.0
  %2947 = vmatpush2.msra.mxu0 0.0
  %2948 = vmatprep.subr.mxu0 0.0
  %2949 = vmatpush2.msra.mxu0 0.0
  %2950 = vmatprep.subr.mxu0 0.0
  %2951 = vmatpush2.msra.mxu0 0.0
  %2952 = vmatprep.mubr.f32.mxu0 0.0
  %2953 = vmatmul.mubr.f32.gmra.mxu0 %v2886
  %v2954 = vpop.f32.mrf.mxu0
  %v2955 = vadd.f32 %v2717, %v2954
  %v2956 = vpop.f32.mrf.mxu0
  %v2957 = vadd.f32 %v2719, %v2956
  %2958 = vdwg.mxu0
  %2959 = vmatprep.subr.mxu0 0.0
  %2960 = vmatpush1.msra.mxu0 0.0
  %2961 = vmatprep.subr.mxu0 0.0
  %2962 = vmatpush1.msra.mxu0 0.0
  %2963 = vmatprep.subr.mxu0 0.0
  %2964 = vmatpush1.msra.mxu0 0.0
  %2965 = vmatprep.subr.mxu0 0.0
  %2966 = vmatpush1.msra.mxu0 0.0
  %2967 = vmatprep.subr.mxu0 0.0
  %2968 = vmatpush1.msra.mxu0 0.0
  %2969 = vmatprep.subr.mxu0 0.0
  %2970 = vmatpush1.msra.mxu0 0.0
  %2971 = vmatprep.subr.mxu0 0.0
  %2972 = vmatpush1.msra.mxu0 0.0
  %2973 = vmatprep.subr.mxu0 0.0
  %2974 = vmatpush1.msra.mxu0 0.0
  %2975 = vmatprep.subr.mxu0 0.0
  %2976 = vmatpush1.msra.mxu0 0.0
  %2977 = vmatprep.subr.mxu0 0.0
  %2978 = vmatpush1.msra.mxu0 0.0
  %2979 = vmatprep.subr.mxu0 0.0
  %2980 = vmatpush1.msra.mxu0 0.0
  %2981 = vmatprep.subr.mxu0 0.0
  %2982 = vmatpush1.msra.mxu0 0.0
  %2983 = vmatprep.subr.mxu0 0.0
  %2984 = vmatpush1.msra.mxu0 0.0
  %2985 = vmatprep.subr.mxu0 0.0
  %2986 = vmatpush1.msra.mxu0 0.0
  %2987 = vmatprep.subr.mxu0 0.0
  %2988 = vmatpush1.msra.mxu0 0.0
  %2989 = vmatprep.subr.mxu0 %v2878
  %2990 = vmatpush1.msra.mxu0 %v2877
  %2991 = vmatprep.subr.mxu0 0.0
  %2992 = vmatpush2.msra.mxu0 0.0
  %2993 = vmatprep.subr.mxu0 0.0
  %2994 = vmatpush2.msra.mxu0 0.0
  %2995 = vmatprep.subr.mxu0 0.0
  %2996 = vmatpush2.msra.mxu0 0.0
  %2997 = vmatprep.subr.mxu0 0.0
  %2998 = vmatpush2.msra.mxu0 0.0
  %2999 = vmatprep.subr.mxu0 0.0
  %3000 = vmatpush2.msra.mxu0 0.0
  %3001 = vmatprep.subr.mxu0 0.0
  %3002 = vmatpush2.msra.mxu0 0.0
  %3003 = vmatprep.subr.mxu0 0.0
  %3004 = vmatpush2.msra.mxu0 0.0
  %3005 = vmatprep.subr.mxu0 0.0
  %3006 = vmatpush2.msra.mxu0 0.0
  %3007 = vmatprep.subr.mxu0 0.0
  %3008 = vmatpush2.msra.mxu0 0.0
  %3009 = vmatprep.subr.mxu0 0.0
  %3010 = vmatpush2.msra.mxu0 0.0
  %3011 = vmatprep.subr.mxu0 0.0
  %3012 = vmatpush2.msra.mxu0 0.0
  %3013 = vmatprep.subr.mxu0 0.0
  %3014 = vmatpush2.msra.mxu0 0.0
  %3015 = vmatprep.subr.mxu0 0.0
  %3016 = vmatpush2.msra.mxu0 0.0
  %3017 = vmatprep.subr.mxu0 0.0
  %3018 = vmatpush2.msra.mxu0 0.0
  %3019 = vmatprep.subr.mxu0 0.0
  %3020 = vmatpush2.msra.mxu0 0.0
  %3021 = vmatprep.subr.mxu0 0.0
  %3022 = vmatpush2.msra.mxu0 0.0
  %3023 = vmatprep.mubr.f32.mxu0 0.0
  %3024 = vmatmul.mubr.f32.gmra.mxu0 %v2886
  %v3025 = vpop.f32.mrf.mxu0
  %v3026 = vadd.f32 %v2788, %v3025
  %v3027 = vpop.f32.mrf.mxu0
  %v3028 = vadd.f32 %v2790, %v3027
  %3029 = vdwg.mxu0
  %3030 = vmatprep.subr.mxu0 0.0
  %3031 = vmatpush1.msra.mxu0 0.0
  %3032 = vmatprep.subr.mxu0 0.0
  %3033 = vmatpush1.msra.mxu0 0.0
  %3034 = vmatprep.subr.mxu0 0.0
  %3035 = vmatpush1.msra.mxu0 0.0
  %3036 = vmatprep.subr.mxu0 0.0
  %3037 = vmatpush1.msra.mxu0 0.0
  %3038 = vmatprep.subr.mxu0 0.0
  %3039 = vmatpush1.msra.mxu0 0.0
  %3040 = vmatprep.subr.mxu0 0.0
  %3041 = vmatpush1.msra.mxu0 0.0
  %3042 = vmatprep.subr.mxu0 0.0
  %3043 = vmatpush1.msra.mxu0 0.0
  %3044 = vmatprep.subr.mxu0 0.0
  %3045 = vmatpush1.msra.mxu0 0.0
  %3046 = vmatprep.subr.mxu0 0.0
  %3047 = vmatpush1.msra.mxu0 0.0
  %3048 = vmatprep.subr.mxu0 0.0
  %3049 = vmatpush1.msra.mxu0 0.0
  %3050 = vmatprep.subr.mxu0 0.0
  %3051 = vmatpush1.msra.mxu0 0.0
  %3052 = vmatprep.subr.mxu0 0.0
  %3053 = vmatpush1.msra.mxu0 0.0
  %3054 = vmatprep.subr.mxu0 0.0
  %3055 = vmatpush1.msra.mxu0 0.0
  %3056 = vmatprep.subr.mxu0 0.0
  %3057 = vmatpush1.msra.mxu0 0.0
  %3058 = vmatprep.subr.mxu0 0.0
  %3059 = vmatpush1.msra.mxu0 0.0
  %3060 = vmatprep.subr.mxu0 %v2874
  %3061 = vmatpush1.msra.mxu0 %v2879
  %3062 = vmatprep.subr.mxu0 0.0
  %3063 = vmatpush2.msra.mxu0 0.0
  %3064 = vmatprep.subr.mxu0 0.0
  %3065 = vmatpush2.msra.mxu0 0.0
  %3066 = vmatprep.subr.mxu0 0.0
  %3067 = vmatpush2.msra.mxu0 0.0
  %3068 = vmatprep.subr.mxu0 0.0
  %3069 = vmatpush2.msra.mxu0 0.0
  %3070 = vmatprep.subr.mxu0 0.0
  %3071 = vmatpush2.msra.mxu0 0.0
  %3072 = vmatprep.subr.mxu0 0.0
  %3073 = vmatpush2.msra.mxu0 0.0
  %3074 = vmatprep.subr.mxu0 0.0
  %3075 = vmatpush2.msra.mxu0 0.0
  %3076 = vmatprep.subr.mxu0 0.0
  %3077 = vmatpush2.msra.mxu0 0.0
  %3078 = vmatprep.subr.mxu0 0.0
  %3079 = vmatpush2.msra.mxu0 0.0
  %3080 = vmatprep.subr.mxu0 0.0
  %3081 = vmatpush2.msra.mxu0 0.0
  %3082 = vmatprep.subr.mxu0 0.0
  %3083 = vmatpush2.msra.mxu0 0.0
  %3084 = vmatprep.subr.mxu0 0.0
  %3085 = vmatpush2.msra.mxu0 0.0
  %3086 = vmatprep.subr.mxu0 0.0
  %3087 = vmatpush2.msra.mxu0 0.0
  %3088 = vmatprep.subr.mxu0 0.0
  %3089 = vmatpush2.msra.mxu0 0.0
  %3090 = vmatprep.subr.mxu0 0.0
  %3091 = vmatpush2.msra.mxu0 0.0
  %3092 = vmatprep.subr.mxu0 0.0
  %3093 = vmatpush2.msra.mxu0 0.0
  %3094 = vmatprep.mubr.f32.mxu0 0.0
  %3095 = vmatmul.mubr.f32.gmra.mxu0 %v2886
  %v3096 = vpop.f32.mrf.mxu0
  %v3097 = vadd.f32 %v2859, %v3096
  %v3098 = vpop.f32.mrf.mxu0
  %v3099 = vadd.f32 %v2861, %v3098
  %3100 = vdwg.mxu0
  %3101 = vrot.lane.b32.xlu0 %v2615, 112
  %v3102 = vpop.permute.xlu0 %3101
  %3103 = vrot.lane.b32.xlu0 %v2609, 17
  %v3104 = vpop.permute.xlu0 %3103
  %3105 = vrot.lane.b32.xlu0 %v2610, 17
  %v3106 = vpop.permute.xlu0 %3105
  %3107 = vrot.lane.b32.xlu0 %v2611, 17
  %v3108 = vpop.permute.xlu0 %3107
  %3109 = vrot.lane.b32.xlu0 %v2612, 17
  %v3110 = vpop.permute.xlu0 %3109
  %3111 = vrot.lane.b32.xlu0 %v2613, 17
  %v3112 = vpop.permute.xlu0 %3111
  %3113 = vrot.lane.b32.xlu0 %v2614, 17
  %v3114 = vpop.permute.xlu0 %3113
  %v3115 = vsel %vm779, %v3104, %v3106
  %v3116 = vsel %vm779, %v3106, %v3108
  %v3117 = vsel %vm779, %v3108, %v3110
  %v3118 = vsel %vm779, %v3110, %v3112
  %v3119 = vsel %vm779, %v3112, %v3114
  %v3126 = vsel %vm36, %v3102, 0
  %3128 = vmatprep.subr.mxu0 0.0
  %3129 = vmatpush1.msra.mxu0 0.0
  %3130 = vmatprep.subr.mxu0 0.0
  %3131 = vmatpush1.msra.mxu0 0.0
  %3132 = vmatprep.subr.mxu0 0.0
  %3133 = vmatpush1.msra.mxu0 0.0
  %3134 = vmatprep.subr.mxu0 0.0
  %3135 = vmatpush1.msra.mxu0 0.0
  %3136 = vmatprep.subr.mxu0 0.0
  %3137 = vmatpush1.msra.mxu0 0.0
  %3138 = vmatprep.subr.mxu0 0.0
  %3139 = vmatpush1.msra.mxu0 0.0
  %3140 = vmatprep.subr.mxu0 0.0
  %3141 = vmatpush1.msra.mxu0 0.0
  %3142 = vmatprep.subr.mxu0 0.0
  %3143 = vmatpush1.msra.mxu0 0.0
  %3144 = vmatprep.subr.mxu0 0.0
  %3145 = vmatpush1.msra.mxu0 0.0
  %3146 = vmatprep.subr.mxu0 0.0
  %3147 = vmatpush1.msra.mxu0 0.0
  %3148 = vmatprep.subr.mxu0 0.0
  %3149 = vmatpush1.msra.mxu0 0.0
  %3150 = vmatprep.subr.mxu0 0.0
  %3151 = vmatpush1.msra.mxu0 0.0
  %3152 = vmatprep.subr.mxu0 0.0
  %3153 = vmatpush1.msra.mxu0 0.0
  %3154 = vmatprep.subr.mxu0 0.0
  %3155 = vmatpush1.msra.mxu0 0.0
  %3156 = vmatprep.subr.mxu0 0.0
  %3157 = vmatpush1.msra.mxu0 0.0
  %3158 = vmatprep.subr.mxu0 %v3116
  %3159 = vmatpush1.msra.mxu0 %v3115
  %3160 = vmatprep.subr.mxu0 0.0
  %3161 = vmatpush2.msra.mxu0 0.0
  %3162 = vmatprep.subr.mxu0 0.0
  %3163 = vmatpush2.msra.mxu0 0.0
  %3164 = vmatprep.subr.mxu0 0.0
  %3165 = vmatpush2.msra.mxu0 0.0
  %3166 = vmatprep.subr.mxu0 0.0
  %3167 = vmatpush2.msra.mxu0 0.0
  %3168 = vmatprep.subr.mxu0 0.0
  %3169 = vmatpush2.msra.mxu0 0.0
  %3170 = vmatprep.subr.mxu0 0.0
  %3171 = vmatpush2.msra.mxu0 0.0
  %3172 = vmatprep.subr.mxu0 0.0
  %3173 = vmatpush2.msra.mxu0 0.0
  %3174 = vmatprep.subr.mxu0 0.0
  %3175 = vmatpush2.msra.mxu0 0.0
  %3176 = vmatprep.subr.mxu0 0.0
  %3177 = vmatpush2.msra.mxu0 0.0
  %3178 = vmatprep.subr.mxu0 0.0
  %3179 = vmatpush2.msra.mxu0 0.0
  %3180 = vmatprep.subr.mxu0 0.0
  %3181 = vmatpush2.msra.mxu0 0.0
  %3182 = vmatprep.subr.mxu0 0.0
  %3183 = vmatpush2.msra.mxu0 0.0
  %3184 = vmatprep.subr.mxu0 0.0
  %3185 = vmatpush2.msra.mxu0 0.0
  %3186 = vmatprep.subr.mxu0 0.0
  %3187 = vmatpush2.msra.mxu0 0.0
  %3188 = vmatprep.subr.mxu0 0.0
  %3189 = vmatpush2.msra.mxu0 0.0
  %3190 = vmatprep.subr.mxu0 0.0
  %3191 = vmatpush2.msra.mxu0 0.0
  %3192 = vmatprep.mubr.f32.mxu0 0.0
  %3193 = vmatmul.mubr.f32.gmra.mxu0 %v3126
  %v3194 = vpop.f32.mrf.mxu0
  %v3195 = vadd.f32 0.0, %v3194
  %v3196 = vpop.f32.mrf.mxu0
  %v3197 = vadd.f32 0.0, %v3196
  %3198 = vdwg.mxu0
  %3199 = vmatprep.subr.mxu0 0.0
  %3200 = vmatpush1.msra.mxu0 0.0
  %3201 = vmatprep.subr.mxu0 0.0
  %3202 = vmatpush1.msra.mxu0 0.0
  %3203 = vmatprep.subr.mxu0 0.0
  %3204 = vmatpush1.msra.mxu0 0.0
  %3205 = vmatprep.subr.mxu0 0.0
  %3206 = vmatpush1.msra.mxu0 0.0
  %3207 = vmatprep.subr.mxu0 0.0
  %3208 = vmatpush1.msra.mxu0 0.0
  %3209 = vmatprep.subr.mxu0 0.0
  %3210 = vmatpush1.msra.mxu0 0.0
  %3211 = vmatprep.subr.mxu0 0.0
  %3212 = vmatpush1.msra.mxu0 0.0
  %3213 = vmatprep.subr.mxu0 0.0
  %3214 = vmatpush1.msra.mxu0 0.0
  %3215 = vmatprep.subr.mxu0 0.0
  %3216 = vmatpush1.msra.mxu0 0.0
  %3217 = vmatprep.subr.mxu0 0.0
  %3218 = vmatpush1.msra.mxu0 0.0
  %3219 = vmatprep.subr.mxu0 0.0
  %3220 = vmatpush1.msra.mxu0 0.0
  %3221 = vmatprep.subr.mxu0 0.0
  %3222 = vmatpush1.msra.mxu0 0.0
  %3223 = vmatprep.subr.mxu0 0.0
  %3224 = vmatpush1.msra.mxu0 0.0
  %3225 = vmatprep.subr.mxu0 0.0
  %3226 = vmatpush1.msra.mxu0 0.0
  %3227 = vmatprep.subr.mxu0 0.0
  %3228 = vmatpush1.msra.mxu0 0.0
  %3229 = vmatprep.subr.mxu0 %v3118
  %3230 = vmatpush1.msra.mxu0 %v3117
  %3231 = vmatprep.subr.mxu0 0.0
  %3232 = vmatpush2.msra.mxu0 0.0
  %3233 = vmatprep.subr.mxu0 0.0
  %3234 = vmatpush2.msra.mxu0 0.0
  %3235 = vmatprep.subr.mxu0 0.0
  %3236 = vmatpush2.msra.mxu0 0.0
  %3237 = vmatprep.subr.mxu0 0.0
  %3238 = vmatpush2.msra.mxu0 0.0
  %3239 = vmatprep.subr.mxu0 0.0
  %3240 = vmatpush2.msra.mxu0 0.0
  %3241 = vmatprep.subr.mxu0 0.0
  %3242 = vmatpush2.msra.mxu0 0.0
  %3243 = vmatprep.subr.mxu0 0.0
  %3244 = vmatpush2.msra.mxu0 0.0
  %3245 = vmatprep.subr.mxu0 0.0
  %3246 = vmatpush2.msra.mxu0 0.0
  %3247 = vmatprep.subr.mxu0 0.0
  %3248 = vmatpush2.msra.mxu0 0.0
  %3249 = vmatprep.subr.mxu0 0.0
  %3250 = vmatpush2.msra.mxu0 0.0
  %3251 = vmatprep.subr.mxu0 0.0
  %3252 = vmatpush2.msra.mxu0 0.0
  %3253 = vmatprep.subr.mxu0 0.0
  %3254 = vmatpush2.msra.mxu0 0.0
  %3255 = vmatprep.subr.mxu0 0.0
  %3256 = vmatpush2.msra.mxu0 0.0
  %3257 = vmatprep.subr.mxu0 0.0
  %3258 = vmatpush2.msra.mxu0 0.0
  %3259 = vmatprep.subr.mxu0 0.0
  %3260 = vmatpush2.msra.mxu0 0.0
  %3261 = vmatprep.subr.mxu0 0.0
  %3262 = vmatpush2.msra.mxu0 0.0
  %3263 = vmatprep.mubr.f32.mxu0 0.0
  %3264 = vmatmul.mubr.f32.gmra.mxu0 %v3126
  %v3265 = vpop.f32.mrf.mxu0
  %v3266 = vadd.f32 0.0, %v3265
  %v3267 = vpop.f32.mrf.mxu0
  %v3268 = vadd.f32 0.0, %v3267
  %3269 = vdwg.mxu0
  %3270 = vmatprep.subr.mxu0 0.0
  %3271 = vmatpush1.msra.mxu0 0.0
  %3272 = vmatprep.subr.mxu0 0.0
  %3273 = vmatpush1.msra.mxu0 0.0
  %3274 = vmatprep.subr.mxu0 0.0
  %3275 = vmatpush1.msra.mxu0 0.0
  %3276 = vmatprep.subr.mxu0 0.0
  %3277 = vmatpush1.msra.mxu0 0.0
  %3278 = vmatprep.subr.mxu0 0.0
  %3279 = vmatpush1.msra.mxu0 0.0
  %3280 = vmatprep.subr.mxu0 0.0
  %3281 = vmatpush1.msra.mxu0 0.0
  %3282 = vmatprep.subr.mxu0 0.0
  %3283 = vmatpush1.msra.mxu0 0.0
  %3284 = vmatprep.subr.mxu0 0.0
  %3285 = vmatpush1.msra.mxu0 0.0
  %3286 = vmatprep.subr.mxu0 0.0
  %3287 = vmatpush1.msra.mxu0 0.0
  %3288 = vmatprep.subr.mxu0 0.0
  %3289 = vmatpush1.msra.mxu0 0.0
  %3290 = vmatprep.subr.mxu0 0.0
  %3291 = vmatpush1.msra.mxu0 0.0
  %3292 = vmatprep.subr.mxu0 0.0
  %3293 = vmatpush1.msra.mxu0 0.0
  %3294 = vmatprep.subr.mxu0 0.0
  %3295 = vmatpush1.msra.mxu0 0.0
  %3296 = vmatprep.subr.mxu0 0.0
  %3297 = vmatpush1.msra.mxu0 0.0
  %3298 = vmatprep.subr.mxu0 0.0
  %3299 = vmatpush1.msra.mxu0 0.0
  %3300 = vmatprep.subr.mxu0 %v3114
  %3301 = vmatpush1.msra.mxu0 %v3119
  %3302 = vmatprep.subr.mxu0 0.0
  %3303 = vmatpush2.msra.mxu0 0.0
  %3304 = vmatprep.subr.mxu0 0.0
  %3305 = vmatpush2.msra.mxu0 0.0
  %3306 = vmatprep.subr.mxu0 0.0
  %3307 = vmatpush2.msra.mxu0 0.0
  %3308 = vmatprep.subr.mxu0 0.0
  %3309 = vmatpush2.msra.mxu0 0.0
  %3310 = vmatprep.subr.mxu0 0.0
  %3311 = vmatpush2.msra.mxu0 0.0
  %3312 = vmatprep.subr.mxu0 0.0
  %3313 = vmatpush2.msra.mxu0 0.0
  %3314 = vmatprep.subr.mxu0 0.0
  %3315 = vmatpush2.msra.mxu0 0.0
  %3316 = vmatprep.subr.mxu0 0.0
  %3317 = vmatpush2.msra.mxu0 0.0
  %3318 = vmatprep.subr.mxu0 0.0
  %3319 = vmatpush2.msra.mxu0 0.0
  %3320 = vmatprep.subr.mxu0 0.0
  %3321 = vmatpush2.msra.mxu0 0.0
  %3322 = vmatprep.subr.mxu0 0.0
  %3323 = vmatpush2.msra.mxu0 0.0
  %3324 = vmatprep.subr.mxu0 0.0
  %3325 = vmatpush2.msra.mxu0 0.0
  %3326 = vmatprep.subr.mxu0 0.0
  %3327 = vmatpush2.msra.mxu0 0.0
  %3328 = vmatprep.subr.mxu0 0.0
  %3329 = vmatpush2.msra.mxu0 0.0
  %3330 = vmatprep.subr.mxu0 0.0
  %3331 = vmatpush2.msra.mxu0 0.0
  %3332 = vmatprep.subr.mxu0 0.0
  %3333 = vmatpush2.msra.mxu0 0.0
  %3334 = vmatprep.mubr.f32.mxu0 0.0
  %3335 = vmatmul.mubr.f32.gmra.mxu0 %v3126
  %v3336 = vpop.f32.mrf.mxu0
  %v3337 = vadd.f32 0.0, %v3336
  %v3338 = vpop.f32.mrf.mxu0
  %v3339 = vadd.f32 0.0, %v3338
  %3340 = vdwg.mxu0
  %v3341 = vadd.f32 %v2955, %v3195
  %v3342 = vadd.f32 %v2957, %v3197
  %v3343 = vadd.f32 %v3026, %v3266
  %v3344 = vadd.f32 %v3028, %v3268
  %v3345 = vadd.f32 %v3097, %v3337
  %v3346 = vadd.f32 %v3099, %v3339
  %v3347 = vld [vmem:[#allocation3] sm:$0xff]
  %v3348 = vld [vmem:[#allocation3 + $0x8] sm:$0xff]
  %v3349 = vld [vmem:[#allocation3 + $0x10] sm:$0xff]
  %v3350 = vld [vmem:[#allocation3 + $0x18] sm:$0xff]
  %v3351 = vld [vmem:[#allocation3 + $0x20] sm:$0xff]
  %v3352 = vld [vmem:[#allocation3 + $0x28] sm:$0xff]
  %v3353 = vld [vmem:[#allocation3 + $0x30] sm:$0xff]
  %3354 = vrot.lane.b32.xlu0 %v2615, 104
  %v3355 = vpop.permute.xlu0 %3354
  %3363 = vrot.lane.b32.xlu0 %v3347, 1
  %v3364 = vpop.permute.xlu0 %3363
  %3365 = vrot.lane.b32.xlu0 %v3348, 1
  %v3366 = vpop.permute.xlu0 %3365
  %3367 = vrot.lane.b32.xlu0 %v3349, 1
  %v3368 = vpop.permute.xlu0 %3367
  %3369 = vrot.lane.b32.xlu0 %v3350, 1
  %v3370 = vpop.permute.xlu0 %3369
  %3371 = vrot.lane.b32.xlu0 %v3351, 1
  %v3372 = vpop.permute.xlu0 %3371
  %3373 = vrot.lane.b32.xlu0 %v3352, 1
  %v3374 = vpop.permute.xlu0 %3373
  %3375 = vrot.lane.b32.xlu0 %v3353, 1
  %v3376 = vpop.permute.xlu0 %3375
  %v3377 = vsel %vm1042, %v3364, %v3366
  %v3378 = vsel %vm1042, %v3366, %v3368
  %v3379 = vsel %vm1042, %v3368, %v3370
  %v3380 = vsel %vm1042, %v3370, %v3372
  %v3381 = vsel %vm1042, %v3372, %v3374
  %v3382 = vsel %vm1042, %v3374, %v3376
  %v3389 = vsel %vm36, %v3355, 0
  %3391 = vmatprep.subr.mxu0 0.0
  %3392 = vmatpush1.msra.mxu0 0.0
  %3393 = vmatprep.subr.mxu0 0.0
  %3394 = vmatpush1.msra.mxu0 0.0
  %3395 = vmatprep.subr.mxu0 0.0
  %3396 = vmatpush1.msra.mxu0 0.0
  %3397 = vmatprep.subr.mxu0 0.0
  %3398 = vmatpush1.msra.mxu0 0.0
  %3399 = vmatprep.subr.mxu0 0.0
  %3400 = vmatpush1.msra.mxu0 0.0
  %3401 = vmatprep.subr.mxu0 0.0
  %3402 = vmatpush1.msra.mxu0 0.0
  %3403 = vmatprep.subr.mxu0 0.0
  %3404 = vmatpush1.msra.mxu0 0.0
  %3405 = vmatprep.subr.mxu0 0.0
  %3406 = vmatpush1.msra.mxu0 0.0
  %3407 = vmatprep.subr.mxu0 0.0
  %3408 = vmatpush1.msra.mxu0 0.0
  %3409 = vmatprep.subr.mxu0 0.0
  %3410 = vmatpush1.msra.mxu0 0.0
  %3411 = vmatprep.subr.mxu0 0.0
  %3412 = vmatpush1.msra.mxu0 0.0
  %3413 = vmatprep.subr.mxu0 0.0
  %3414 = vmatpush1.msra.mxu0 0.0
  %3415 = vmatprep.subr.mxu0 0.0
  %3416 = vmatpush1.msra.mxu0 0.0
  %3417 = vmatprep.subr.mxu0 0.0
  %3418 = vmatpush1.msra.mxu0 0.0
  %3419 = vmatprep.subr.mxu0 0.0
  %3420 = vmatpush1.msra.mxu0 0.0
  %3421 = vmatprep.subr.mxu0 %v3378
  %3422 = vmatpush1.msra.mxu0 %v3377
  %3423 = vmatprep.subr.mxu0 0.0
  %3424 = vmatpush2.msra.mxu0 0.0
  %3425 = vmatprep.subr.mxu0 0.0
  %3426 = vmatpush2.msra.mxu0 0.0
  %3427 = vmatprep.subr.mxu0 0.0
  %3428 = vmatpush2.msra.mxu0 0.0
  %3429 = vmatprep.subr.mxu0 0.0
  %3430 = vmatpush2.msra.mxu0 0.0
  %3431 = vmatprep.subr.mxu0 0.0
  %3432 = vmatpush2.msra.mxu0 0.0
  %3433 = vmatprep.subr.mxu0 0.0
  %3434 = vmatpush2.msra.mxu0 0.0
  %3435 = vmatprep.subr.mxu0 0.0
  %3436 = vmatpush2.msra.mxu0 0.0
  %3437 = vmatprep.subr.mxu0 0.0
  %3438 = vmatpush2.msra.mxu0 0.0
  %3439 = vmatprep.subr.mxu0 0.0
  %3440 = vmatpush2.msra.mxu0 0.0
  %3441 = vmatprep.subr.mxu0 0.0
  %3442 = vmatpush2.msra.mxu0 0.0
  %3443 = vmatprep.subr.mxu0 0.0
  %3444 = vmatpush2.msra.mxu0 0.0
  %3445 = vmatprep.subr.mxu0 0.0
  %3446 = vmatpush2.msra.mxu0 0.0
  %3447 = vmatprep.subr.mxu0 0.0
  %3448 = vmatpush2.msra.mxu0 0.0
  %3449 = vmatprep.subr.mxu0 0.0
  %3450 = vmatpush2.msra.mxu0 0.0
  %3451 = vmatprep.subr.mxu0 0.0
  %3452 = vmatpush2.msra.mxu0 0.0
  %3453 = vmatprep.subr.mxu0 0.0
  %3454 = vmatpush2.msra.mxu0 0.0
  %3455 = vmatprep.mubr.f32.mxu0 0.0
  %3456 = vmatmul.mubr.f32.gmra.mxu0 %v3389
  %v3457 = vpop.f32.mrf.mxu0
  %v3458 = vadd.f32 0.0, %v3457
  %v3459 = vpop.f32.mrf.mxu0
  %v3460 = vadd.f32 0.0, %v3459
  %3461 = vdwg.mxu0
  %3462 = vmatprep.subr.mxu0 0.0
  %3463 = vmatpush1.msra.mxu0 0.0
  %3464 = vmatprep.subr.mxu0 0.0
  %3465 = vmatpush1.msra.mxu0 0.0
  %3466 = vmatprep.subr.mxu0 0.0
  %3467 = vmatpush1.msra.mxu0 0.0
  %3468 = vmatprep.subr.mxu0 0.0
  %3469 = vmatpush1.msra.mxu0 0.0
  %3470 = vmatprep.subr.mxu0 0.0
  %3471 = vmatpush1.msra.mxu0 0.0
  %3472 = vmatprep.subr.mxu0 0.0
  %3473 = vmatpush1.msra.mxu0 0.0
  %3474 = vmatprep.subr.mxu0 0.0
  %3475 = vmatpush1.msra.mxu0 0.0
  %3476 = vmatprep.subr.mxu0 0.0
  %3477 = vmatpush1.msra.mxu0 0.0
  %3478 = vmatprep.subr.mxu0 0.0
  %3479 = vmatpush1.msra.mxu0 0.0
  %3480 = vmatprep.subr.mxu0 0.0
  %3481 = vmatpush1.msra.mxu0 0.0
  %3482 = vmatprep.subr.mxu0 0.0
  %3483 = vmatpush1.msra.mxu0 0.0
  %3484 = vmatprep.subr.mxu0 0.0
  %3485 = vmatpush1.msra.mxu0 0.0
  %3486 = vmatprep.subr.mxu0 0.0
  %3487 = vmatpush1.msra.mxu0 0.0
  %3488 = vmatprep.subr.mxu0 0.0
  %3489 = vmatpush1.msra.mxu0 0.0
  %3490 = vmatprep.subr.mxu0 0.0
  %3491 = vmatpush1.msra.mxu0 0.0
  %3492 = vmatprep.subr.mxu0 %v3380
  %3493 = vmatpush1.msra.mxu0 %v3379
  %3494 = vmatprep.subr.mxu0 0.0
  %3495 = vmatpush2.msra.mxu0 0.0
  %3496 = vmatprep.subr.mxu0 0.0
  %3497 = vmatpush2.msra.mxu0 0.0
  %3498 = vmatprep.subr.mxu0 0.0
  %3499 = vmatpush2.msra.mxu0 0.0
  %3500 = vmatprep.subr.mxu0 0.0
  %3501 = vmatpush2.msra.mxu0 0.0
  %3502 = vmatprep.subr.mxu0 0.0
  %3503 = vmatpush2.msra.mxu0 0.0
  %3504 = vmatprep.subr.mxu0 0.0
  %3505 = vmatpush2.msra.mxu0 0.0
  %3506 = vmatprep.subr.mxu0 0.0
  %3507 = vmatpush2.msra.mxu0 0.0
  %3508 = vmatprep.subr.mxu0 0.0
  %3509 = vmatpush2.msra.mxu0 0.0
  %3510 = vmatprep.subr.mxu0 0.0
  %3511 = vmatpush2.msra.mxu0 0.0
  %3512 = vmatprep.subr.mxu0 0.0
  %3513 = vmatpush2.msra.mxu0 0.0
  %3514 = vmatprep.subr.mxu0 0.0
  %3515 = vmatpush2.msra.mxu0 0.0
  %3516 = vmatprep.subr.mxu0 0.0
  %3517 = vmatpush2.msra.mxu0 0.0
  %3518 = vmatprep.subr.mxu0 0.0
  %3519 = vmatpush2.msra.mxu0 0.0
  %3520 = vmatprep.subr.mxu0 0.0
  %3521 = vmatpush2.msra.mxu0 0.0
  %3522 = vmatprep.subr.mxu0 0.0
  %3523 = vmatpush2.msra.mxu0 0.0
  %3524 = vmatprep.subr.mxu0 0.0
  %3525 = vmatpush2.msra.mxu0 0.0
  %3526 = vmatprep.mubr.f32.mxu0 0.0
  %3527 = vmatmul.mubr.f32.gmra.mxu0 %v3389
  %v3528 = vpop.f32.mrf.mxu0
  %v3529 = vadd.f32 0.0, %v3528
  %v3530 = vpop.f32.mrf.mxu0
  %v3531 = vadd.f32 0.0, %v3530
  %3532 = vdwg.mxu0
  %3533 = vmatprep.subr.mxu0 0.0
  %3534 = vmatpush1.msra.mxu0 0.0
  %3535 = vmatprep.subr.mxu0 0.0
  %3536 = vmatpush1.msra.mxu0 0.0
  %3537 = vmatprep.subr.mxu0 0.0
  %3538 = vmatpush1.msra.mxu0 0.0
  %3539 = vmatprep.subr.mxu0 0.0
  %3540 = vmatpush1.msra.mxu0 0.0
  %3541 = vmatprep.subr.mxu0 0.0
  %3542 = vmatpush1.msra.mxu0 0.0
  %3543 = vmatprep.subr.mxu0 0.0
  %3544 = vmatpush1.msra.mxu0 0.0
  %3545 = vmatprep.subr.mxu0 0.0
  %3546 = vmatpush1.msra.mxu0 0.0
  %3547 = vmatprep.subr.mxu0 0.0
  %3548 = vmatpush1.msra.mxu0 0.0
  %3549 = vmatprep.subr.mxu0 0.0
  %3550 = vmatpush1.msra.mxu0 0.0
  %3551 = vmatprep.subr.mxu0 0.0
  %3552 = vmatpush1.msra.mxu0 0.0
  %3553 = vmatprep.subr.mxu0 0.0
  %3554 = vmatpush1.msra.mxu0 0.0
  %3555 = vmatprep.subr.mxu0 0.0
  %3556 = vmatpush1.msra.mxu0 0.0
  %3557 = vmatprep.subr.mxu0 0.0
  %3558 = vmatpush1.msra.mxu0 0.0
  %3559 = vmatprep.subr.mxu0 0.0
  %3560 = vmatpush1.msra.mxu0 0.0
  %3561 = vmatprep.subr.mxu0 0.0
  %3562 = vmatpush1.msra.mxu0 0.0
  %3563 = vmatprep.subr.mxu0 %v3382
  %3564 = vmatpush1.msra.mxu0 %v3381
  %3565 = vmatprep.subr.mxu0 0.0
  %3566 = vmatpush2.msra.mxu0 0.0
  %3567 = vmatprep.subr.mxu0 0.0
  %3568 = vmatpush2.msra.mxu0 0.0
  %3569 = vmatprep.subr.mxu0 0.0
  %3570 = vmatpush2.msra.mxu0 0.0
  %3571 = vmatprep.subr.mxu0 0.0
  %3572 = vmatpush2.msra.mxu0 0.0
  %3573 = vmatprep.subr.mxu0 0.0
  %3574 = vmatpush2.msra.mxu0 0.0
  %3575 = vmatprep.subr.mxu0 0.0
  %3576 = vmatpush2.msra.mxu0 0.0
  %3577 = vmatprep.subr.mxu0 0.0
  %3578 = vmatpush2.msra.mxu0 0.0
  %3579 = vmatprep.subr.mxu0 0.0
  %3580 = vmatpush2.msra.mxu0 0.0
  %3581 = vmatprep.subr.mxu0 0.0
  %3582 = vmatpush2.msra.mxu0 0.0
  %3583 = vmatprep.subr.mxu0 0.0
  %3584 = vmatpush2.msra.mxu0 0.0
  %3585 = vmatprep.subr.mxu0 0.0
  %3586 = vmatpush2.msra.mxu0 0.0
  %3587 = vmatprep.subr.mxu0 0.0
  %3588 = vmatpush2.msra.mxu0 0.0
  %3589 = vmatprep.subr.mxu0 0.0
  %3590 = vmatpush2.msra.mxu0 0.0
  %3591 = vmatprep.subr.mxu0 0.0
  %3592 = vmatpush2.msra.mxu0 0.0
  %3593 = vmatprep.subr.mxu0 0.0
  %3594 = vmatpush2.msra.mxu0 0.0
  %3595 = vmatprep.subr.mxu0 0.0
  %3596 = vmatpush2.msra.mxu0 0.0
  %3597 = vmatprep.mubr.f32.mxu0 0.0
  %3598 = vmatmul.mubr.f32.gmra.mxu0 %v3389
  %v3599 = vpop.f32.mrf.mxu0
  %v3600 = vadd.f32 0.0, %v3599
  %v3601 = vpop.f32.mrf.mxu0
  %v3602 = vadd.f32 0.0, %v3601
  %3603 = vdwg.mxu0
  %v3604 = vadd.f32 %v3341, %v3458
  %v3605 = vadd.f32 %v3342, %v3460
  %v3606 = vadd.f32 %v3343, %v3529
  %v3607 = vadd.f32 %v3344, %v3531
  %v3608 = vadd.f32 %v3345, %v3600
  %v3609 = vadd.f32 %v3346, %v3602
  %3610 = vrot.lane.b32.xlu0 %v2615, 96
  %v3611 = vpop.permute.xlu0 %3610
  %v3612 = vsel %vm36, %v3611, 0
  %3614 = vmatprep.subr.mxu0 0.0
  %3615 = vmatpush1.msra.mxu0 0.0
  %3616 = vmatprep.subr.mxu0 0.0
  %3617 = vmatpush1.msra.mxu0 0.0
  %3618 = vmatprep.subr.mxu0 0.0
  %3619 = vmatpush1.msra.mxu0 0.0
  %3620 = vmatprep.subr.mxu0 0.0
  %3621 = vmatpush1.msra.mxu0 0.0
  %3622 = vmatprep.subr.mxu0 0.0
  %3623 = vmatpush1.msra.mxu0 0.0
  %3624 = vmatprep.subr.mxu0 0.0
  %3625 = vmatpush1.msra.mxu0 0.0
  %3626 = vmatprep.subr.mxu0 0.0
  %3627 = vmatpush1.msra.mxu0 0.0
  %3628 = vmatprep.subr.mxu0 0.0
  %3629 = vmatpush1.msra.mxu0 0.0
  %3630 = vmatprep.subr.mxu0 0.0
  %3631 = vmatpush1.msra.mxu0 0.0
  %3632 = vmatprep.subr.mxu0 0.0
  %3633 = vmatpush1.msra.mxu0 0.0
  %3634 = vmatprep.subr.mxu0 0.0
  %3635 = vmatpush1.msra.mxu0 0.0
  %3636 = vmatprep.subr.mxu0 0.0
  %3637 = vmatpush1.msra.mxu0 0.0
  %3638 = vmatprep.subr.mxu0 0.0
  %3639 = vmatpush1.msra.mxu0 0.0
  %3640 = vmatprep.subr.mxu0 0.0
  %3641 = vmatpush1.msra.mxu0 0.0
  %3642 = vmatprep.subr.mxu0 0.0
  %3643 = vmatpush1.msra.mxu0 0.0
  %3644 = vmatprep.subr.mxu0 %v3349
  %3645 = vmatpush1.msra.mxu0 %v3348
  %3646 = vmatprep.subr.mxu0 0.0
  %3647 = vmatpush2.msra.mxu0 0.0
  %3648 = vmatprep.subr.mxu0 0.0
  %3649 = vmatpush2.msra.mxu0 0.0
  %3650 = vmatprep.subr.mxu0 0.0
  %3651 = vmatpush2.msra.mxu0 0.0
  %3652 = vmatprep.subr.mxu0 0.0
  %3653 = vmatpush2.msra.mxu0 0.0
  %3654 = vmatprep.subr.mxu0 0.0
  %3655 = vmatpush2.msra.mxu0 0.0
  %3656 = vmatprep.subr.mxu0 0.0
  %3657 = vmatpush2.msra.mxu0 0.0
  %3658 = vmatprep.subr.mxu0 0.0
  %3659 = vmatpush2.msra.mxu0 0.0
  %3660 = vmatprep.subr.mxu0 0.0
  %3661 = vmatpush2.msra.mxu0 0.0
  %3662 = vmatprep.subr.mxu0 0.0
  %3663 = vmatpush2.msra.mxu0 0.0
  %3664 = vmatprep.subr.mxu0 0.0
  %3665 = vmatpush2.msra.mxu0 0.0
  %3666 = vmatprep.subr.mxu0 0.0
  %3667 = vmatpush2.msra.mxu0 0.0
  %3668 = vmatprep.subr.mxu0 0.0
  %3669 = vmatpush2.msra.mxu0 0.0
  %3670 = vmatprep.subr.mxu0 0.0
  %3671 = vmatpush2.msra.mxu0 0.0
  %3672 = vmatprep.subr.mxu0 0.0
  %3673 = vmatpush2.msra.mxu0 0.0
  %3674 = vmatprep.subr.mxu0 0.0
  %3675 = vmatpush2.msra.mxu0 0.0
  %3676 = vmatprep.subr.mxu0 0.0
  %3677 = vmatpush2.msra.mxu0 0.0
  %3678 = vmatprep.mubr.f32.mxu0 0.0
  %3679 = vmatmul.mubr.f32.gmra.mxu0 %v3612
  %v3680 = vpop.f32.mrf.mxu0
  %v3681 = vadd.f32 0.0, %v3680
  %v3682 = vpop.f32.mrf.mxu0
  %v3683 = vadd.f32 0.0, %v3682
  %3684 = vdwg.mxu0
  %3685 = vmatprep.subr.mxu0 0.0
  %3686 = vmatpush1.msra.mxu0 0.0
  %3687 = vmatprep.subr.mxu0 0.0
  %3688 = vmatpush1.msra.mxu0 0.0
  %3689 = vmatprep.subr.mxu0 0.0
  %3690 = vmatpush1.msra.mxu0 0.0
  %3691 = vmatprep.subr.mxu0 0.0
  %3692 = vmatpush1.msra.mxu0 0.0
  %3693 = vmatprep.subr.mxu0 0.0
  %3694 = vmatpush1.msra.mxu0 0.0
  %3695 = vmatprep.subr.mxu0 0.0
  %3696 = vmatpush1.msra.mxu0 0.0
  %3697 = vmatprep.subr.mxu0 0.0
  %3698 = vmatpush1.msra.mxu0 0.0
  %3699 = vmatprep.subr.mxu0 0.0
  %3700 = vmatpush1.msra.mxu0 0.0
  %3701 = vmatprep.subr.mxu0 0.0
  %3702 = vmatpush1.msra.mxu0 0.0
  %3703 = vmatprep.subr.mxu0 0.0
  %3704 = vmatpush1.msra.mxu0 0.0
  %3705 = vmatprep.subr.mxu0 0.0
  %3706 = vmatpush1.msra.mxu0 0.0
  %3707 = vmatprep.subr.mxu0 0.0
  %3708 = vmatpush1.msra.mxu0 0.0
  %3709 = vmatprep.subr.mxu0 0.0
  %3710 = vmatpush1.msra.mxu0 0.0
  %3711 = vmatprep.subr.mxu0 0.0
  %3712 = vmatpush1.msra.mxu0 0.0
  %3713 = vmatprep.subr.mxu0 0.0
  %3714 = vmatpush1.msra.mxu0 0.0
  %3715 = vmatprep.subr.mxu0 %v3351
  %3716 = vmatpush1.msra.mxu0 %v3350
  %3717 = vmatprep.subr.mxu0 0.0
  %3718 = vmatpush2.msra.mxu0 0.0
  %3719 = vmatprep.subr.mxu0 0.0
  %3720 = vmatpush2.msra.mxu0 0.0
  %3721 = vmatprep.subr.mxu0 0.0
  %3722 = vmatpush2.msra.mxu0 0.0
  %3723 = vmatprep.subr.mxu0 0.0
  %3724 = vmatpush2.msra.mxu0 0.0
  %3725 = vmatprep.subr.mxu0 0.0
  %3726 = vmatpush2.msra.mxu0 0.0
  %3727 = vmatprep.subr.mxu0 0.0
  %3728 = vmatpush2.msra.mxu0 0.0
  %3729 = vmatprep.subr.mxu0 0.0
  %3730 = vmatpush2.msra.mxu0 0.0
  %3731 = vmatprep.subr.mxu0 0.0
  %3732 = vmatpush2.msra.mxu0 0.0
  %3733 = vmatprep.subr.mxu0 0.0
  %3734 = vmatpush2.msra.mxu0 0.0
  %3735 = vmatprep.subr.mxu0 0.0
  %3736 = vmatpush2.msra.mxu0 0.0
  %3737 = vmatprep.subr.mxu0 0.0
  %3738 = vmatpush2.msra.mxu0 0.0
  %3739 = vmatprep.subr.mxu0 0.0
  %3740 = vmatpush2.msra.mxu0 0.0
  %3741 = vmatprep.subr.mxu0 0.0
  %3742 = vmatpush2.msra.mxu0 0.0
  %3743 = vmatprep.subr.mxu0 0.0
  %3744 = vmatpush2.msra.mxu0 0.0
  %3745 = vmatprep.subr.mxu0 0.0
  %3746 = vmatpush2.msra.mxu0 0.0
  %3747 = vmatprep.subr.mxu0 0.0
  %3748 = vmatpush2.msra.mxu0 0.0
  %3749 = vmatprep.mubr.f32.mxu0 0.0
  %3750 = vmatmul.mubr.f32.gmra.mxu0 %v3612
  %v3751 = vpop.f32.mrf.mxu0
  %v3752 = vadd.f32 0.0, %v3751
  %v3753 = vpop.f32.mrf.mxu0
  %v3754 = vadd.f32 0.0, %v3753
  %3755 = vdwg.mxu0
  %3756 = vmatprep.subr.mxu0 0.0
  %3757 = vmatpush1.msra.mxu0 0.0
  %3758 = vmatprep.subr.mxu0 0.0
  %3759 = vmatpush1.msra.mxu0 0.0
  %3760 = vmatprep.subr.mxu0 0.0
  %3761 = vmatpush1.msra.mxu0 0.0
  %3762 = vmatprep.subr.mxu0 0.0
  %3763 = vmatpush1.msra.mxu0 0.0
  %3764 = vmatprep.subr.mxu0 0.0
  %3765 = vmatpush1.msra.mxu0 0.0
  %3766 = vmatprep.subr.mxu0 0.0
  %3767 = vmatpush1.msra.mxu0 0.0
  %3768 = vmatprep.subr.mxu0 0.0
  %3769 = vmatpush1.msra.mxu0 0.0
  %3770 = vmatprep.subr.mxu0 0.0
  %3771 = vmatpush1.msra.mxu0 0.0
  %3772 = vmatprep.subr.mxu0 0.0
  %3773 = vmatpush1.msra.mxu0 0.0
  %3774 = vmatprep.subr.mxu0 0.0
  %3775 = vmatpush1.msra.mxu0 0.0
  %3776 = vmatprep.subr.mxu0 0.0
  %3777 = vmatpush1.msra.mxu0 0.0
  %3778 = vmatprep.subr.mxu0 0.0
  %3779 = vmatpush1.msra.mxu0 0.0
  %3780 = vmatprep.subr.mxu0 0.0
  %3781 = vmatpush1.msra.mxu0 0.0
  %3782 = vmatprep.subr.mxu0 0.0
  %3783 = vmatpush1.msra.mxu0 0.0
  %3784 = vmatprep.subr.mxu0 0.0
  %3785 = vmatpush1.msra.mxu0 0.0
  %3786 = vmatprep.subr.mxu0 %v3353
  %3787 = vmatpush1.msra.mxu0 %v3352
  %3788 = vmatprep.subr.mxu0 0.0
  %3789 = vmatpush2.msra.mxu0 0.0
  %3790 = vmatprep.subr.mxu0 0.0
  %3791 = vmatpush2.msra.mxu0 0.0
  %3792 = vmatprep.subr.mxu0 0.0
  %3793 = vmatpush2.msra.mxu0 0.0
  %3794 = vmatprep.subr.mxu0 0.0
  %3795 = vmatpush2.msra.mxu0 0.0
  %3796 = vmatprep.subr.mxu0 0.0
  %3797 = vmatpush2.msra.mxu0 0.0
  %3798 = vmatprep.subr.mxu0 0.0
  %3799 = vmatpush2.msra.mxu0 0.0
  %3800 = vmatprep.subr.mxu0 0.0
  %3801 = vmatpush2.msra.mxu0 0.0
  %3802 = vmatprep.subr.mxu0 0.0
  %3803 = vmatpush2.msra.mxu0 0.0
  %3804 = vmatprep.subr.mxu0 0.0
  %3805 = vmatpush2.msra.mxu0 0.0
  %3806 = vmatprep.subr.mxu0 0.0
  %3807 = vmatpush2.msra.mxu0 0.0
  %3808 = vmatprep.subr.mxu0 0.0
  %3809 = vmatpush2.msra.mxu0 0.0
  %3810 = vmatprep.subr.mxu0 0.0
  %3811 = vmatpush2.msra.mxu0 0.0
  %3812 = vmatprep.subr.mxu0 0.0
  %3813 = vmatpush2.msra.mxu0 0.0
  %3814 = vmatprep.subr.mxu0 0.0
  %3815 = vmatpush2.msra.mxu0 0.0
  %3816 = vmatprep.subr.mxu0 0.0
  %3817 = vmatpush2.msra.mxu0 0.0
  %3818 = vmatprep.subr.mxu0 0.0
  %3819 = vmatpush2.msra.mxu0 0.0
  %3820 = vmatprep.mubr.f32.mxu0 0.0
  %3821 = vmatmul.mubr.f32.gmra.mxu0 %v3612
  %v3822 = vpop.f32.mrf.mxu0
  %v3823 = vadd.f32 0.0, %v3822
  %v3824 = vpop.f32.mrf.mxu0
  %v3825 = vadd.f32 0.0, %v3824
  %3826 = vdwg.mxu0
  %v3827 = vadd.f32 %v3604, %v3681
  %v3828 = vadd.f32 %v3605, %v3683
  %v3829 = vadd.f32 %v3606, %v3752
  %v3830 = vadd.f32 %v3607, %v3754
  %v3831 = vadd.f32 %v3608, %v3823
  %v3832 = vadd.f32 %v3609, %v3825
  %3833 = vrot.lane.b32.xlu0 %v2615, 88
  %v3834 = vpop.permute.xlu0 %3833
  %3835 = vrot.lane.b32.xlu0 %v3348, 127
  %v3836 = vpop.permute.xlu0 %3835
  %3837 = vrot.lane.b32.xlu0 %v3349, 127
  %v3838 = vpop.permute.xlu0 %3837
  %3839 = vrot.lane.b32.xlu0 %v3350, 127
  %v3840 = vpop.permute.xlu0 %3839
  %3841 = vrot.lane.b32.xlu0 %v3351, 127
  %v3842 = vpop.permute.xlu0 %3841
  %3843 = vrot.lane.b32.xlu0 %v3352, 127
  %v3844 = vpop.permute.xlu0 %3843
  %3845 = vrot.lane.b32.xlu0 %v3353, 127
  %v3846 = vpop.permute.xlu0 %3845
  %v3847 = vsel %vm1513, %v3836, %v3838
  %v3848 = vsel %vm1513, %v3838, %v3840
  %v3849 = vsel %vm1513, %v3840, %v3842
  %v3850 = vsel %vm1513, %v3842, %v3844
  %v3851 = vsel %vm1513, %v3844, %v3846
  %v3858 = vsel %vm36, %v3834, 0
  %3860 = vmatprep.subr.mxu0 0.0
  %3861 = vmatpush1.msra.mxu0 0.0
  %3862 = vmatprep.subr.mxu0 0.0
  %3863 = vmatpush1.msra.mxu0 0.0
  %3864 = vmatprep.subr.mxu0 0.0
  %3865 = vmatpush1.msra.mxu0 0.0
  %3866 = vmatprep.subr.mxu0 0.0
  %3867 = vmatpush1.msra.mxu0 0.0
  %3868 = vmatprep.subr.mxu0 0.0
  %3869 = vmatpush1.msra.mxu0 0.0
  %3870 = vmatprep.subr.mxu0 0.0
  %3871 = vmatpush1.msra.mxu0 0.0
  %3872 = vmatprep.subr.mxu0 0.0
  %3873 = vmatpush1.msra.mxu0 0.0
  %3874 = vmatprep.subr.mxu0 0.0
  %3875 = vmatpush1.msra.mxu0 0.0
  %3876 = vmatprep.subr.mxu0 0.0
  %3877 = vmatpush1.msra.mxu0 0.0
  %3878 = vmatprep.subr.mxu0 0.0
  %3879 = vmatpush1.msra.mxu0 0.0
  %3880 = vmatprep.subr.mxu0 0.0
  %3881 = vmatpush1.msra.mxu0 0.0
  %3882 = vmatprep.subr.mxu0 0.0
  %3883 = vmatpush1.msra.mxu0 0.0
  %3884 = vmatprep.subr.mxu0 0.0
  %3885 = vmatpush1.msra.mxu0 0.0
  %3886 = vmatprep.subr.mxu0 0.0
  %3887 = vmatpush1.msra.mxu0 0.0
  %3888 = vmatprep.subr.mxu0 0.0
  %3889 = vmatpush1.msra.mxu0 0.0
  %3890 = vmatprep.subr.mxu0 %v3848
  %3891 = vmatpush1.msra.mxu0 %v3847
  %3892 = vmatprep.subr.mxu0 0.0
  %3893 = vmatpush2.msra.mxu0 0.0
  %3894 = vmatprep.subr.mxu0 0.0
  %3895 = vmatpush2.msra.mxu0 0.0
  %3896 = vmatprep.subr.mxu0 0.0
  %3897 = vmatpush2.msra.mxu0 0.0
  %3898 = vmatprep.subr.mxu0 0.0
  %3899 = vmatpush2.msra.mxu0 0.0
  %3900 = vmatprep.subr.mxu0 0.0
  %3901 = vmatpush2.msra.mxu0 0.0
  %3902 = vmatprep.subr.mxu0 0.0
  %3903 = vmatpush2.msra.mxu0 0.0
  %3904 = vmatprep.subr.mxu0 0.0
  %3905 = vmatpush2.msra.mxu0 0.0
  %3906 = vmatprep.subr.mxu0 0.0
  %3907 = vmatpush2.msra.mxu0 0.0
  %3908 = vmatprep.subr.mxu0 0.0
  %3909 = vmatpush2.msra.mxu0 0.0
  %3910 = vmatprep.subr.mxu0 0.0
  %3911 = vmatpush2.msra.mxu0 0.0
  %3912 = vmatprep.subr.mxu0 0.0
  %3913 = vmatpush2.msra.mxu0 0.0
  %3914 = vmatprep.subr.mxu0 0.0
  %3915 = vmatpush2.msra.mxu0 0.0
  %3916 = vmatprep.subr.mxu0 0.0
  %3917 = vmatpush2.msra.mxu0 0.0
  %3918 = vmatprep.subr.mxu0 0.0
  %3919 = vmatpush2.msra.mxu0 0.0
  %3920 = vmatprep.subr.mxu0 0.0
  %3921 = vmatpush2.msra.mxu0 0.0
  %3922 = vmatprep.subr.mxu0 0.0
  %3923 = vmatpush2.msra.mxu0 0.0
  %3924 = vmatprep.mubr.f32.mxu0 0.0
  %3925 = vmatmul.mubr.f32.gmra.mxu0 %v3858
  %v3926 = vpop.f32.mrf.mxu0
  %v3927 = vadd.f32 0.0, %v3926
  %v3928 = vpop.f32.mrf.mxu0
  %v3929 = vadd.f32 0.0, %v3928
  %3930 = vdwg.mxu0
  %3931 = vmatprep.subr.mxu0 0.0
  %3932 = vmatpush1.msra.mxu0 0.0
  %3933 = vmatprep.subr.mxu0 0.0
  %3934 = vmatpush1.msra.mxu0 0.0
  %3935 = vmatprep.subr.mxu0 0.0
  %3936 = vmatpush1.msra.mxu0 0.0
  %3937 = vmatprep.subr.mxu0 0.0
  %3938 = vmatpush1.msra.mxu0 0.0
  %3939 = vmatprep.subr.mxu0 0.0
  %3940 = vmatpush1.msra.mxu0 0.0
  %3941 = vmatprep.subr.mxu0 0.0
  %3942 = vmatpush1.msra.mxu0 0.0
  %3943 = vmatprep.subr.mxu0 0.0
  %3944 = vmatpush1.msra.mxu0 0.0
  %3945 = vmatprep.subr.mxu0 0.0
  %3946 = vmatpush1.msra.mxu0 0.0
  %3947 = vmatprep.subr.mxu0 0.0
  %3948 = vmatpush1.msra.mxu0 0.0
  %3949 = vmatprep.subr.mxu0 0.0
  %3950 = vmatpush1.msra.mxu0 0.0
  %3951 = vmatprep.subr.mxu0 0.0
  %3952 = vmatpush1.msra.mxu0 0.0
  %3953 = vmatprep.subr.mxu0 0.0
  %3954 = vmatpush1.msra.mxu0 0.0
  %3955 = vmatprep.subr.mxu0 0.0
  %3956 = vmatpush1.msra.mxu0 0.0
  %3957 = vmatprep.subr.mxu0 0.0
  %3958 = vmatpush1.msra.mxu0 0.0
  %3959 = vmatprep.subr.mxu0 0.0
  %3960 = vmatpush1.msra.mxu0 0.0
  %3961 = vmatprep.subr.mxu0 %v3850
  %3962 = vmatpush1.msra.mxu0 %v3849
  %3963 = vmatprep.subr.mxu0 0.0
  %3964 = vmatpush2.msra.mxu0 0.0
  %3965 = vmatprep.subr.mxu0 0.0
  %3966 = vmatpush2.msra.mxu0 0.0
  %3967 = vmatprep.subr.mxu0 0.0
  %3968 = vmatpush2.msra.mxu0 0.0
  %3969 = vmatprep.subr.mxu0 0.0
  %3970 = vmatpush2.msra.mxu0 0.0
  %3971 = vmatprep.subr.mxu0 0.0
  %3972 = vmatpush2.msra.mxu0 0.0
  %3973 = vmatprep.subr.mxu0 0.0
  %3974 = vmatpush2.msra.mxu0 0.0
  %3975 = vmatprep.subr.mxu0 0.0
  %3976 = vmatpush2.msra.mxu0 0.0
  %3977 = vmatprep.subr.mxu0 0.0
  %3978 = vmatpush2.msra.mxu0 0.0
  %3979 = vmatprep.subr.mxu0 0.0
  %3980 = vmatpush2.msra.mxu0 0.0
  %3981 = vmatprep.subr.mxu0 0.0
  %3982 = vmatpush2.msra.mxu0 0.0
  %3983 = vmatprep.subr.mxu0 0.0
  %3984 = vmatpush2.msra.mxu0 0.0
  %3985 = vmatprep.subr.mxu0 0.0
  %3986 = vmatpush2.msra.mxu0 0.0
  %3987 = vmatprep.subr.mxu0 0.0
  %3988 = vmatpush2.msra.mxu0 0.0
  %3989 = vmatprep.subr.mxu0 0.0
  %3990 = vmatpush2.msra.mxu0 0.0
  %3991 = vmatprep.subr.mxu0 0.0
  %3992 = vmatpush2.msra.mxu0 0.0
  %3993 = vmatprep.subr.mxu0 0.0
  %3994 = vmatpush2.msra.mxu0 0.0
  %3995 = vmatprep.mubr.f32.mxu0 0.0
  %3996 = vmatmul.mubr.f32.gmra.mxu0 %v3858
  %v3997 = vpop.f32.mrf.mxu0
  %v3998 = vadd.f32 0.0, %v3997
  %v3999 = vpop.f32.mrf.mxu0
  %v4000 = vadd.f32 0.0, %v3999
  %4001 = vdwg.mxu0
  %4002 = vmatprep.subr.mxu0 0.0
  %4003 = vmatpush1.msra.mxu0 0.0
  %4004 = vmatprep.subr.mxu0 0.0
  %4005 = vmatpush1.msra.mxu0 0.0
  %4006 = vmatprep.subr.mxu0 0.0
  %4007 = vmatpush1.msra.mxu0 0.0
  %4008 = vmatprep.subr.mxu0 0.0
  %4009 = vmatpush1.msra.mxu0 0.0
  %4010 = vmatprep.subr.mxu0 0.0
  %4011 = vmatpush1.msra.mxu0 0.0
  %4012 = vmatprep.subr.mxu0 0.0
  %4013 = vmatpush1.msra.mxu0 0.0
  %4014 = vmatprep.subr.mxu0 0.0
  %4015 = vmatpush1.msra.mxu0 0.0
  %4016 = vmatprep.subr.mxu0 0.0
  %4017 = vmatpush1.msra.mxu0 0.0
  %4018 = vmatprep.subr.mxu0 0.0
  %4019 = vmatpush1.msra.mxu0 0.0
  %4020 = vmatprep.subr.mxu0 0.0
  %4021 = vmatpush1.msra.mxu0 0.0
  %4022 = vmatprep.subr.mxu0 0.0
  %4023 = vmatpush1.msra.mxu0 0.0
  %4024 = vmatprep.subr.mxu0 0.0
  %4025 = vmatpush1.msra.mxu0 0.0
  %4026 = vmatprep.subr.mxu0 0.0
  %4027 = vmatpush1.msra.mxu0 0.0
  %4028 = vmatprep.subr.mxu0 0.0
  %4029 = vmatpush1.msra.mxu0 0.0
  %4030 = vmatprep.subr.mxu0 0.0
  %4031 = vmatpush1.msra.mxu0 0.0
  %4032 = vmatprep.subr.mxu0 %v3846
  %4033 = vmatpush1.msra.mxu0 %v3851
  %4034 = vmatprep.subr.mxu0 0.0
  %4035 = vmatpush2.msra.mxu0 0.0
  %4036 = vmatprep.subr.mxu0 0.0
  %4037 = vmatpush2.msra.mxu0 0.0
  %4038 = vmatprep.subr.mxu0 0.0
  %4039 = vmatpush2.msra.mxu0 0.0
  %4040 = vmatprep.subr.mxu0 0.0
  %4041 = vmatpush2.msra.mxu0 0.0
  %4042 = vmatprep.subr.mxu0 0.0
  %4043 = vmatpush2.msra.mxu0 0.0
  %4044 = vmatprep.subr.mxu0 0.0
  %4045 = vmatpush2.msra.mxu0 0.0
  %4046 = vmatprep.subr.mxu0 0.0
  %4047 = vmatpush2.msra.mxu0 0.0
  %4048 = vmatprep.subr.mxu0 0.0
  %4049 = vmatpush2.msra.mxu0 0.0
  %4050 = vmatprep.subr.mxu0 0.0
  %4051 = vmatpush2.msra.mxu0 0.0
  %4052 = vmatprep.subr.mxu0 0.0
  %4053 = vmatpush2.msra.mxu0 0.0
  %4054 = vmatprep.subr.mxu0 0.0
  %4055 = vmatpush2.msra.mxu0 0.0
  %4056 = vmatprep.subr.mxu0 0.0
  %4057 = vmatpush2.msra.mxu0 0.0
  %4058 = vmatprep.subr.mxu0 0.0
  %4059 = vmatpush2.msra.mxu0 0.0
  %4060 = vmatprep.subr.mxu0 0.0
  %4061 = vmatpush2.msra.mxu0 0.0
  %4062 = vmatprep.subr.mxu0 0.0
  %4063 = vmatpush2.msra.mxu0 0.0
  %4064 = vmatprep.subr.mxu0 0.0
  %4065 = vmatpush2.msra.mxu0 0.0
  %4066 = vmatprep.mubr.f32.mxu0 0.0
  %4067 = vmatmul.mubr.f32.gmra.mxu0 %v3858
  %v4068 = vpop.f32.mrf.mxu0
  %v4069 = vadd.f32 0.0, %v4068
  %v4070 = vpop.f32.mrf.mxu0
  %v4071 = vadd.f32 0.0, %v4070
  %4072 = vdwg.mxu0
  %v4073 = vadd.f32 %v3827, %v3927
  %v4074 = vadd.f32 %v3828, %v3929
  %v4075 = vadd.f32 %v3829, %v3998
  %v4076 = vadd.f32 %v3830, %v4000
  %v4077 = vadd.f32 %v3831, %v4069
  %v4078 = vadd.f32 %v3832, %v4071
  %4079 = vrot.lane.b32.xlu0 %v2615, 80
  %v4080 = vpop.permute.xlu0 %4079
  %4081 = vrot.lane.b32.xlu0 %v3348, 111
  %v4082 = vpop.permute.xlu0 %4081
  %4083 = vrot.lane.b32.xlu0 %v3349, 111
  %v4084 = vpop.permute.xlu0 %4083
  %4085 = vrot.lane.b32.xlu0 %v3350, 111
  %v4086 = vpop.permute.xlu0 %4085
  %4087 = vrot.lane.b32.xlu0 %v3351, 111
  %v4088 = vpop.permute.xlu0 %4087
  %4089 = vrot.lane.b32.xlu0 %v3352, 111
  %v4090 = vpop.permute.xlu0 %4089
  %4091 = vrot.lane.b32.xlu0 %v3353, 111
  %v4092 = vpop.permute.xlu0 %4091
  %v4093 = vsel %vm1760, %v4082, %v4084
  %v4094 = vsel %vm1760, %v4084, %v4086
  %v4095 = vsel %vm1760, %v4086, %v4088
  %v4096 = vsel %vm1760, %v4088, %v4090
  %v4097 = vsel %vm1760, %v4090, %v4092
  %v4104 = vsel %vm36, %v4080, 0
  %4106 = vmatprep.subr.mxu0 0.0
  %4107 = vmatpush1.msra.mxu0 0.0
  %4108 = vmatprep.subr.mxu0 0.0
  %4109 = vmatpush1.msra.mxu0 0.0
  %4110 = vmatprep.subr.mxu0 0.0
  %4111 = vmatpush1.msra.mxu0 0.0
  %4112 = vmatprep.subr.mxu0 0.0
  %4113 = vmatpush1.msra.mxu0 0.0
  %4114 = vmatprep.subr.mxu0 0.0
  %4115 = vmatpush1.msra.mxu0 0.0
  %4116 = vmatprep.subr.mxu0 0.0
  %4117 = vmatpush1.msra.mxu0 0.0
  %4118 = vmatprep.subr.mxu0 0.0
  %4119 = vmatpush1.msra.mxu0 0.0
  %4120 = vmatprep.subr.mxu0 0.0
  %4121 = vmatpush1.msra.mxu0 0.0
  %4122 = vmatprep.subr.mxu0 0.0
  %4123 = vmatpush1.msra.mxu0 0.0
  %4124 = vmatprep.subr.mxu0 0.0
  %4125 = vmatpush1.msra.mxu0 0.0
  %4126 = vmatprep.subr.mxu0 0.0
  %4127 = vmatpush1.msra.mxu0 0.0
  %4128 = vmatprep.subr.mxu0 0.0
  %4129 = vmatpush1.msra.mxu0 0.0
  %4130 = vmatprep.subr.mxu0 0.0
  %4131 = vmatpush1.msra.mxu0 0.0
  %4132 = vmatprep.subr.mxu0 0.0
  %4133 = vmatpush1.msra.mxu0 0.0
  %4134 = vmatprep.subr.mxu0 0.0
  %4135 = vmatpush1.msra.mxu0 0.0
  %4136 = vmatprep.subr.mxu0 %v4094
  %4137 = vmatpush1.msra.mxu0 %v4093
  %4138 = vmatprep.subr.mxu0 0.0
  %4139 = vmatpush2.msra.mxu0 0.0
  %4140 = vmatprep.subr.mxu0 0.0
  %4141 = vmatpush2.msra.mxu0 0.0
  %4142 = vmatprep.subr.mxu0 0.0
  %4143 = vmatpush2.msra.mxu0 0.0
  %4144 = vmatprep.subr.mxu0 0.0
  %4145 = vmatpush2.msra.mxu0 0.0
  %4146 = vmatprep.subr.mxu0 0.0
  %4147 = vmatpush2.msra.mxu0 0.0
  %4148 = vmatprep.subr.mxu0 0.0
  %4149 = vmatpush2.msra.mxu0 0.0
  %4150 = vmatprep.subr.mxu0 0.0
  %4151 = vmatpush2.msra.mxu0 0.0
  %4152 = vmatprep.subr.mxu0 0.0
  %4153 = vmatpush2.msra.mxu0 0.0
  %4154 = vmatprep.subr.mxu0 0.0
  %4155 = vmatpush2.msra.mxu0 0.0
  %4156 = vmatprep.subr.mxu0 0.0
  %4157 = vmatpush2.msra.mxu0 0.0
  %4158 = vmatprep.subr.mxu0 0.0
  %4159 = vmatpush2.msra.mxu0 0.0
  %4160 = vmatprep.subr.mxu0 0.0
  %4161 = vmatpush2.msra.mxu0 0.0
  %4162 = vmatprep.subr.mxu0 0.0
  %4163 = vmatpush2.msra.mxu0 0.0
  %4164 = vmatprep.subr.mxu0 0.0
  %4165 = vmatpush2.msra.mxu0 0.0
  %4166 = vmatprep.subr.mxu0 0.0
  %4167 = vmatpush2.msra.mxu0 0.0
  %4168 = vmatprep.subr.mxu0 0.0
  %4169 = vmatpush2.msra.mxu0 0.0
  %4170 = vmatprep.mubr.f32.mxu0 0.0
  %4171 = vmatmul.mubr.f32.gmra.mxu0 %v4104
  %v4172 = vpop.f32.mrf.mxu0
  %v4173 = vadd.f32 0.0, %v4172
  %v4174 = vpop.f32.mrf.mxu0
  %v4175 = vadd.f32 0.0, %v4174
  %4176 = vdwg.mxu0
  %4177 = vmatprep.subr.mxu0 0.0
  %4178 = vmatpush1.msra.mxu0 0.0
  %4179 = vmatprep.subr.mxu0 0.0
  %4180 = vmatpush1.msra.mxu0 0.0
  %4181 = vmatprep.subr.mxu0 0.0
  %4182 = vmatpush1.msra.mxu0 0.0
  %4183 = vmatprep.subr.mxu0 0.0
  %4184 = vmatpush1.msra.mxu0 0.0
  %4185 = vmatprep.subr.mxu0 0.0
  %4186 = vmatpush1.msra.mxu0 0.0
  %4187 = vmatprep.subr.mxu0 0.0
  %4188 = vmatpush1.msra.mxu0 0.0
  %4189 = vmatprep.subr.mxu0 0.0
  %4190 = vmatpush1.msra.mxu0 0.0
  %4191 = vmatprep.subr.mxu0 0.0
  %4192 = vmatpush1.msra.mxu0 0.0
  %4193 = vmatprep.subr.mxu0 0.0
  %4194 = vmatpush1.msra.mxu0 0.0
  %4195 = vmatprep.subr.mxu0 0.0
  %4196 = vmatpush1.msra.mxu0 0.0
  %4197 = vmatprep.subr.mxu0 0.0
  %4198 = vmatpush1.msra.mxu0 0.0
  %4199 = vmatprep.subr.mxu0 0.0
  %4200 = vmatpush1.msra.mxu0 0.0
  %4201 = vmatprep.subr.mxu0 0.0
  %4202 = vmatpush1.msra.mxu0 0.0
  %4203 = vmatprep.subr.mxu0 0.0
  %4204 = vmatpush1.msra.mxu0 0.0
  %4205 = vmatprep.subr.mxu0 0.0
  %4206 = vmatpush1.msra.mxu0 0.0
  %4207 = vmatprep.subr.mxu0 %v4096
  %4208 = vmatpush1.msra.mxu0 %v4095
  %4209 = vmatprep.subr.mxu0 0.0
  %4210 = vmatpush2.msra.mxu0 0.0
  %4211 = vmatprep.subr.mxu0 0.0
  %4212 = vmatpush2.msra.mxu0 0.0
  %4213 = vmatprep.subr.mxu0 0.0
  %4214 = vmatpush2.msra.mxu0 0.0
  %4215 = vmatprep.subr.mxu0 0.0
  %4216 = vmatpush2.msra.mxu0 0.0
  %4217 = vmatprep.subr.mxu0 0.0
  %4218 = vmatpush2.msra.mxu0 0.0
  %4219 = vmatprep.subr.mxu0 0.0
  %4220 = vmatpush2.msra.mxu0 0.0
  %4221 = vmatprep.subr.mxu0 0.0
  %4222 = vmatpush2.msra.mxu0 0.0
  %4223 = vmatprep.subr.mxu0 0.0
  %4224 = vmatpush2.msra.mxu0 0.0
  %4225 = vmatprep.subr.mxu0 0.0
  %4226 = vmatpush2.msra.mxu0 0.0
  %4227 = vmatprep.subr.mxu0 0.0
  %4228 = vmatpush2.msra.mxu0 0.0
  %4229 = vmatprep.subr.mxu0 0.0
  %4230 = vmatpush2.msra.mxu0 0.0
  %4231 = vmatprep.subr.mxu0 0.0
  %4232 = vmatpush2.msra.mxu0 0.0
  %4233 = vmatprep.subr.mxu0 0.0
  %4234 = vmatpush2.msra.mxu0 0.0
  %4235 = vmatprep.subr.mxu0 0.0
  %4236 = vmatpush2.msra.mxu0 0.0
  %4237 = vmatprep.subr.mxu0 0.0
  %4238 = vmatpush2.msra.mxu0 0.0
  %4239 = vmatprep.subr.mxu0 0.0
  %4240 = vmatpush2.msra.mxu0 0.0
  %4241 = vmatprep.mubr.f32.mxu0 0.0
  %4242 = vmatmul.mubr.f32.gmra.mxu0 %v4104
  %v4243 = vpop.f32.mrf.mxu0
  %v4244 = vadd.f32 0.0, %v4243
  %v4245 = vpop.f32.mrf.mxu0
  %v4246 = vadd.f32 0.0, %v4245
  %4247 = vdwg.mxu0
  %4248 = vmatprep.subr.mxu0 0.0
  %4249 = vmatpush1.msra.mxu0 0.0
  %4250 = vmatprep.subr.mxu0 0.0
  %4251 = vmatpush1.msra.mxu0 0.0
  %4252 = vmatprep.subr.mxu0 0.0
  %4253 = vmatpush1.msra.mxu0 0.0
  %4254 = vmatprep.subr.mxu0 0.0
  %4255 = vmatpush1.msra.mxu0 0.0
  %4256 = vmatprep.subr.mxu0 0.0
  %4257 = vmatpush1.msra.mxu0 0.0
  %4258 = vmatprep.subr.mxu0 0.0
  %4259 = vmatpush1.msra.mxu0 0.0
  %4260 = vmatprep.subr.mxu0 0.0
  %4261 = vmatpush1.msra.mxu0 0.0
  %4262 = vmatprep.subr.mxu0 0.0
  %4263 = vmatpush1.msra.mxu0 0.0
  %4264 = vmatprep.subr.mxu0 0.0
  %4265 = vmatpush1.msra.mxu0 0.0
  %4266 = vmatprep.subr.mxu0 0.0
  %4267 = vmatpush1.msra.mxu0 0.0
  %4268 = vmatprep.subr.mxu0 0.0
  %4269 = vmatpush1.msra.mxu0 0.0
  %4270 = vmatprep.subr.mxu0 0.0
  %4271 = vmatpush1.msra.mxu0 0.0
  %4272 = vmatprep.subr.mxu0 0.0
  %4273 = vmatpush1.msra.mxu0 0.0
  %4274 = vmatprep.subr.mxu0 0.0
  %4275 = vmatpush1.msra.mxu0 0.0
  %4276 = vmatprep.subr.mxu0 0.0
  %4277 = vmatpush1.msra.mxu0 0.0
  %4278 = vmatprep.subr.mxu0 %v4092
  %4279 = vmatpush1.msra.mxu0 %v4097
  %4280 = vmatprep.subr.mxu0 0.0
  %4281 = vmatpush2.msra.mxu0 0.0
  %4282 = vmatprep.subr.mxu0 0.0
  %4283 = vmatpush2.msra.mxu0 0.0
  %4284 = vmatprep.subr.mxu0 0.0
  %4285 = vmatpush2.msra.mxu0 0.0
  %4286 = vmatprep.subr.mxu0 0.0
  %4287 = vmatpush2.msra.mxu0 0.0
  %4288 = vmatprep.subr.mxu0 0.0
  %4289 = vmatpush2.msra.mxu0 0.0
  %4290 = vmatprep.subr.mxu0 0.0
  %4291 = vmatpush2.msra.mxu0 0.0
  %4292 = vmatprep.subr.mxu0 0.0
  %4293 = vmatpush2.msra.mxu0 0.0
  %4294 = vmatprep.subr.mxu0 0.0
  %4295 = vmatpush2.msra.mxu0 0.0
  %4296 = vmatprep.subr.mxu0 0.0
  %4297 = vmatpush2.msra.mxu0 0.0
  %4298 = vmatprep.subr.mxu0 0.0
  %4299 = vmatpush2.msra.mxu0 0.0
  %4300 = vmatprep.subr.mxu0 0.0
  %4301 = vmatpush2.msra.mxu0 0.0
  %4302 = vmatprep.subr.mxu0 0.0
  %4303 = vmatpush2.msra.mxu0 0.0
  %4304 = vmatprep.subr.mxu0 0.0
  %4305 = vmatpush2.msra.mxu0 0.0
  %4306 = vmatprep.subr.mxu0 0.0
  %4307 = vmatpush2.msra.mxu0 0.0
  %4308 = vmatprep.subr.mxu0 0.0
  %4309 = vmatpush2.msra.mxu0 0.0
  %4310 = vmatprep.subr.mxu0 0.0
  %4311 = vmatpush2.msra.mxu0 0.0
  %4312 = vmatprep.mubr.f32.mxu0 0.0
  %4313 = vmatmul.mubr.f32.gmra.mxu0 %v4104
  %v4314 = vpop.f32.mrf.mxu0
  %v4315 = vadd.f32 0.0, %v4314
  %v4316 = vpop.f32.mrf.mxu0
  %v4317 = vadd.f32 0.0, %v4316
  %4318 = vdwg.mxu0
  %v4319 = vadd.f32 %v4073, %v4173
  %v4320 = vadd.f32 %v4074, %v4175
  %v4321 = vadd.f32 %v4075, %v4244
  %v4322 = vadd.f32 %v4076, %v4246
  %v4323 = vadd.f32 %v4077, %v4315
  %v4324 = vadd.f32 %v4078, %v4317
  %4325 = vrot.lane.b32.xlu0 %v2615, 72
  %v4326 = vpop.permute.xlu0 %4325
  %4327 = vrot.lane.b32.xlu0 %v3348, 110
  %v4328 = vpop.permute.xlu0 %4327
  %4329 = vrot.lane.b32.xlu0 %v3349, 110
  %v4330 = vpop.permute.xlu0 %4329
  %4331 = vrot.lane.b32.xlu0 %v3350, 110
  %v4332 = vpop.permute.xlu0 %4331
  %4333 = vrot.lane.b32.xlu0 %v3351, 110
  %v4334 = vpop.permute.xlu0 %4333
  %4335 = vrot.lane.b32.xlu0 %v3352, 110
  %v4336 = vpop.permute.xlu0 %4335
  %4337 = vrot.lane.b32.xlu0 %v3353, 110
  %v4338 = vpop.permute.xlu0 %4337
  %v4339 = vsel %vm2007, %v4328, %v4330
  %v4340 = vsel %vm2007, %v4330, %v4332
  %v4341 = vsel %vm2007, %v4332, %v4334
  %v4342 = vsel %vm2007, %v4334, %v4336
  %v4343 = vsel %vm2007, %v4336, %v4338
  %v4350 = vsel %vm36, %v4326, 0
  %4352 = vmatprep.subr.mxu0 0.0
  %4353 = vmatpush1.msra.mxu0 0.0
  %4354 = vmatprep.subr.mxu0 0.0
  %4355 = vmatpush1.msra.mxu0 0.0
  %4356 = vmatprep.subr.mxu0 0.0
  %4357 = vmatpush1.msra.mxu0 0.0
  %4358 = vmatprep.subr.mxu0 0.0
  %4359 = vmatpush1.msra.mxu0 0.0
  %4360 = vmatprep.subr.mxu0 0.0
  %4361 = vmatpush1.msra.mxu0 0.0
  %4362 = vmatprep.subr.mxu0 0.0
  %4363 = vmatpush1.msra.mxu0 0.0
  %4364 = vmatprep.subr.mxu0 0.0
  %4365 = vmatpush1.msra.mxu0 0.0
  %4366 = vmatprep.subr.mxu0 0.0
  %4367 = vmatpush1.msra.mxu0 0.0
  %4368 = vmatprep.subr.mxu0 0.0
  %4369 = vmatpush1.msra.mxu0 0.0
  %4370 = vmatprep.subr.mxu0 0.0
  %4371 = vmatpush1.msra.mxu0 0.0
  %4372 = vmatprep.subr.mxu0 0.0
  %4373 = vmatpush1.msra.mxu0 0.0
  %4374 = vmatprep.subr.mxu0 0.0
  %4375 = vmatpush1.msra.mxu0 0.0
  %4376 = vmatprep.subr.mxu0 0.0
  %4377 = vmatpush1.msra.mxu0 0.0
  %4378 = vmatprep.subr.mxu0 0.0
  %4379 = vmatpush1.msra.mxu0 0.0
  %4380 = vmatprep.subr.mxu0 0.0
  %4381 = vmatpush1.msra.mxu0 0.0
  %4382 = vmatprep.subr.mxu0 %v4340
  %4383 = vmatpush1.msra.mxu0 %v4339
  %4384 = vmatprep.subr.mxu0 0.0
  %4385 = vmatpush2.msra.mxu0 0.0
  %4386 = vmatprep.subr.mxu0 0.0
  %4387 = vmatpush2.msra.mxu0 0.0
  %4388 = vmatprep.subr.mxu0 0.0
  %4389 = vmatpush2.msra.mxu0 0.0
  %4390 = vmatprep.subr.mxu0 0.0
  %4391 = vmatpush2.msra.mxu0 0.0
  %4392 = vmatprep.subr.mxu0 0.0
  %4393 = vmatpush2.msra.mxu0 0.0
  %4394 = vmatprep.subr.mxu0 0.0
  %4395 = vmatpush2.msra.mxu0 0.0
  %4396 = vmatprep.subr.mxu0 0.0
  %4397 = vmatpush2.msra.mxu0 0.0
  %4398 = vmatprep.subr.mxu0 0.0
  %4399 = vmatpush2.msra.mxu0 0.0
  %4400 = vmatprep.subr.mxu0 0.0
  %4401 = vmatpush2.msra.mxu0 0.0
  %4402 = vmatprep.subr.mxu0 0.0
  %4403 = vmatpush2.msra.mxu0 0.0
  %4404 = vmatprep.subr.mxu0 0.0
  %4405 = vmatpush2.msra.mxu0 0.0
  %4406 = vmatprep.subr.mxu0 0.0
  %4407 = vmatpush2.msra.mxu0 0.0
  %4408 = vmatprep.subr.mxu0 0.0
  %4409 = vmatpush2.msra.mxu0 0.0
  %4410 = vmatprep.subr.mxu0 0.0
  %4411 = vmatpush2.msra.mxu0 0.0
  %4412 = vmatprep.subr.mxu0 0.0
  %4413 = vmatpush2.msra.mxu0 0.0
  %4414 = vmatprep.subr.mxu0 0.0
  %4415 = vmatpush2.msra.mxu0 0.0
  %4416 = vmatprep.mubr.f32.mxu0 0.0
  %4417 = vmatmul.mubr.f32.gmra.mxu0 %v4350
  %v4418 = vpop.f32.mrf.mxu0
  %v4419 = vadd.f32 0.0, %v4418
  %v4420 = vpop.f32.mrf.mxu0
  %v4421 = vadd.f32 0.0, %v4420
  %4422 = vdwg.mxu0
  %4423 = vmatprep.subr.mxu0 0.0
  %4424 = vmatpush1.msra.mxu0 0.0
  %4425 = vmatprep.subr.mxu0 0.0
  %4426 = vmatpush1.msra.mxu0 0.0
  %4427 = vmatprep.subr.mxu0 0.0
  %4428 = vmatpush1.msra.mxu0 0.0
  %4429 = vmatprep.subr.mxu0 0.0
  %4430 = vmatpush1.msra.mxu0 0.0
  %4431 = vmatprep.subr.mxu0 0.0
  %4432 = vmatpush1.msra.mxu0 0.0
  %4433 = vmatprep.subr.mxu0 0.0
  %4434 = vmatpush1.msra.mxu0 0.0
  %4435 = vmatprep.subr.mxu0 0.0
  %4436 = vmatpush1.msra.mxu0 0.0
  %4437 = vmatprep.subr.mxu0 0.0
  %4438 = vmatpush1.msra.mxu0 0.0
  %4439 = vmatprep.subr.mxu0 0.0
  %4440 = vmatpush1.msra.mxu0 0.0
  %4441 = vmatprep.subr.mxu0 0.0
  %4442 = vmatpush1.msra.mxu0 0.0
  %4443 = vmatprep.subr.mxu0 0.0
  %4444 = vmatpush1.msra.mxu0 0.0
  %4445 = vmatprep.subr.mxu0 0.0
  %4446 = vmatpush1.msra.mxu0 0.0
  %4447 = vmatprep.subr.mxu0 0.0
  %4448 = vmatpush1.msra.mxu0 0.0
  %4449 = vmatprep.subr.mxu0 0.0
  %4450 = vmatpush1.msra.mxu0 0.0
  %4451 = vmatprep.subr.mxu0 0.0
  %4452 = vmatpush1.msra.mxu0 0.0
  %4453 = vmatprep.subr.mxu0 %v4342
  %4454 = vmatpush1.msra.mxu0 %v4341
  %4455 = vmatprep.subr.mxu0 0.0
  %4456 = vmatpush2.msra.mxu0 0.0
  %4457 = vmatprep.subr.mxu0 0.0
  %4458 = vmatpush2.msra.mxu0 0.0
  %4459 = vmatprep.subr.mxu0 0.0
  %4460 = vmatpush2.msra.mxu0 0.0
  %4461 = vmatprep.subr.mxu0 0.0
  %4462 = vmatpush2.msra.mxu0 0.0
  %4463 = vmatprep.subr.mxu0 0.0
  %4464 = vmatpush2.msra.mxu0 0.0
  %4465 = vmatprep.subr.mxu0 0.0
  %4466 = vmatpush2.msra.mxu0 0.0
  %4467 = vmatprep.subr.mxu0 0.0
  %4468 = vmatpush2.msra.mxu0 0.0
  %4469 = vmatprep.subr.mxu0 0.0
  %4470 = vmatpush2.msra.mxu0 0.0
  %4471 = vmatprep.subr.mxu0 0.0
  %4472 = vmatpush2.msra.mxu0 0.0
  %4473 = vmatprep.subr.mxu0 0.0
  %4474 = vmatpush2.msra.mxu0 0.0
  %4475 = vmatprep.subr.mxu0 0.0
  %4476 = vmatpush2.msra.mxu0 0.0
  %4477 = vmatprep.subr.mxu0 0.0
  %4478 = vmatpush2.msra.mxu0 0.0
  %4479 = vmatprep.subr.mxu0 0.0
  %4480 = vmatpush2.msra.mxu0 0.0
  %4481 = vmatprep.subr.mxu0 0.0
  %4482 = vmatpush2.msra.mxu0 0.0
  %4483 = vmatprep.subr.mxu0 0.0
  %4484 = vmatpush2.msra.mxu0 0.0
  %4485 = vmatprep.subr.mxu0 0.0
  %4486 = vmatpush2.msra.mxu0 0.0
  %4487 = vmatprep.mubr.f32.mxu0 0.0
  %4488 = vmatmul.mubr.f32.gmra.mxu0 %v4350
  %v4489 = vpop.f32.mrf.mxu0
  %v4490 = vadd.f32 0.0, %v4489
  %v4491 = vpop.f32.mrf.mxu0
  %v4492 = vadd.f32 0.0, %v4491
  %4493 = vdwg.mxu0
  %4494 = vmatprep.subr.mxu0 0.0
  %4495 = vmatpush1.msra.mxu0 0.0
  %4496 = vmatprep.subr.mxu0 0.0
  %4497 = vmatpush1.msra.mxu0 0.0
  %4498 = vmatprep.subr.mxu0 0.0
  %4499 = vmatpush1.msra.mxu0 0.0
  %4500 = vmatprep.subr.mxu0 0.0
  %4501 = vmatpush1.msra.mxu0 0.0
  %4502 = vmatprep.subr.mxu0 0.0
  %4503 = vmatpush1.msra.mxu0 0.0
  %4504 = vmatprep.subr.mxu0 0.0
  %4505 = vmatpush1.msra.mxu0 0.0
  %4506 = vmatprep.subr.mxu0 0.0
  %4507 = vmatpush1.msra.mxu0 0.0
  %4508 = vmatprep.subr.mxu0 0.0
  %4509 = vmatpush1.msra.mxu0 0.0
  %4510 = vmatprep.subr.mxu0 0.0
  %4511 = vmatpush1.msra.mxu0 0.0
  %4512 = vmatprep.subr.mxu0 0.0
  %4513 = vmatpush1.msra.mxu0 0.0
  %4514 = vmatprep.subr.mxu0 0.0
  %4515 = vmatpush1.msra.mxu0 0.0
  %4516 = vmatprep.subr.mxu0 0.0
  %4517 = vmatpush1.msra.mxu0 0.0
  %4518 = vmatprep.subr.mxu0 0.0
  %4519 = vmatpush1.msra.mxu0 0.0
  %4520 = vmatprep.subr.mxu0 0.0
  %4521 = vmatpush1.msra.mxu0 0.0
  %4522 = vmatprep.subr.mxu0 0.0
  %4523 = vmatpush1.msra.mxu0 0.0
  %4524 = vmatprep.subr.mxu0 %v4338
  %4525 = vmatpush1.msra.mxu0 %v4343
  %4526 = vmatprep.subr.mxu0 0.0
  %4527 = vmatpush2.msra.mxu0 0.0
  %4528 = vmatprep.subr.mxu0 0.0
  %4529 = vmatpush2.msra.mxu0 0.0
  %4530 = vmatprep.subr.mxu0 0.0
  %4531 = vmatpush2.msra.mxu0 0.0
  %4532 = vmatprep.subr.mxu0 0.0
  %4533 = vmatpush2.msra.mxu0 0.0
  %4534 = vmatprep.subr.mxu0 0.0
  %4535 = vmatpush2.msra.mxu0 0.0
  %4536 = vmatprep.subr.mxu0 0.0
  %4537 = vmatpush2.msra.mxu0 0.0
  %4538 = vmatprep.subr.mxu0 0.0
  %4539 = vmatpush2.msra.mxu0 0.0
  %4540 = vmatprep.subr.mxu0 0.0
  %4541 = vmatpush2.msra.mxu0 0.0
  %4542 = vmatprep.subr.mxu0 0.0
  %4543 = vmatpush2.msra.mxu0 0.0
  %4544 = vmatprep.subr.mxu0 0.0
  %4545 = vmatpush2.msra.mxu0 0.0
  %4546 = vmatprep.subr.mxu0 0.0
  %4547 = vmatpush2.msra.mxu0 0.0
  %4548 = vmatprep.subr.mxu0 0.0
  %4549 = vmatpush2.msra.mxu0 0.0
  %4550 = vmatprep.subr.mxu0 0.0
  %4551 = vmatpush2.msra.mxu0 0.0
  %4552 = vmatprep.subr.mxu0 0.0
  %4553 = vmatpush2.msra.mxu0 0.0
  %4554 = vmatprep.subr.mxu0 0.0
  %4555 = vmatpush2.msra.mxu0 0.0
  %4556 = vmatprep.subr.mxu0 0.0
  %4557 = vmatpush2.msra.mxu0 0.0
  %4558 = vmatprep.mubr.f32.mxu0 0.0
  %4559 = vmatmul.mubr.f32.gmra.mxu0 %v4350
  %v4560 = vpop.f32.mrf.mxu0
  %v4561 = vadd.f32 0.0, %v4560
  %v4562 = vpop.f32.mrf.mxu0
  %v4563 = vadd.f32 0.0, %v4562
  %4564 = vdwg.mxu0
  %v4565 = vadd.f32 %v4319, %v4419
  %v4566 = vadd.f32 %v4320, %v4421
  %v4567 = vadd.f32 %v4321, %v4490
  %v4568 = vadd.f32 %v4322, %v4492
  %v4569 = vadd.f32 %v4323, %v4561
  %v4570 = vadd.f32 %v4324, %v4563
  %4571 = vrot.lane.b32.xlu0 %v2615, 64
  %v4572 = vpop.permute.xlu0 %4571
  %4573 = vrot.lane.b32.xlu0 %v3348, 109
  %v4574 = vpop.permute.xlu0 %4573
  %4575 = vrot.lane.b32.xlu0 %v3349, 109
  %v4576 = vpop.permute.xlu0 %4575
  %4577 = vrot.lane.b32.xlu0 %v3350, 109
  %v4578 = vpop.permute.xlu0 %4577
  %4579 = vrot.lane.b32.xlu0 %v3351, 109
  %v4580 = vpop.permute.xlu0 %4579
  %4581 = vrot.lane.b32.xlu0 %v3352, 109
  %v4582 = vpop.permute.xlu0 %4581
  %4583 = vrot.lane.b32.xlu0 %v3353, 109
  %v4584 = vpop.permute.xlu0 %4583
  %v4585 = vsel %vm2254, %v4574, %v4576
  %v4586 = vsel %vm2254, %v4576, %v4578
  %v4587 = vsel %vm2254, %v4578, %v4580
  %v4588 = vsel %vm2254, %v4580, %v4582
  %v4589 = vsel %vm2254, %v4582, %v4584
  %v4596 = vsel %vm36, %v4572, 0
  %4598 = vmatprep.subr.mxu0 0.0
  %4599 = vmatpush1.msra.mxu0 0.0
  %4600 = vmatprep.subr.mxu0 0.0
  %4601 = vmatpush1.msra.mxu0 0.0
  %4602 = vmatprep.subr.mxu0 0.0
  %4603 = vmatpush1.msra.mxu0 0.0
  %4604 = vmatprep.subr.mxu0 0.0
  %4605 = vmatpush1.msra.mxu0 0.0
  %4606 = vmatprep.subr.mxu0 0.0
  %4607 = vmatpush1.msra.mxu0 0.0
  %4608 = vmatprep.subr.mxu0 0.0
  %4609 = vmatpush1.msra.mxu0 0.0
  %4610 = vmatprep.subr.mxu0 0.0
  %4611 = vmatpush1.msra.mxu0 0.0
  %4612 = vmatprep.subr.mxu0 0.0
  %4613 = vmatpush1.msra.mxu0 0.0
  %4614 = vmatprep.subr.mxu0 0.0
  %4615 = vmatpush1.msra.mxu0 0.0
  %4616 = vmatprep.subr.mxu0 0.0
  %4617 = vmatpush1.msra.mxu0 0.0
  %4618 = vmatprep.subr.mxu0 0.0
  %4619 = vmatpush1.msra.mxu0 0.0
  %4620 = vmatprep.subr.mxu0 0.0
  %4621 = vmatpush1.msra.mxu0 0.0
  %4622 = vmatprep.subr.mxu0 0.0
  %4623 = vmatpush1.msra.mxu0 0.0
  %4624 = vmatprep.subr.mxu0 0.0
  %4625 = vmatpush1.msra.mxu0 0.0
  %4626 = vmatprep.subr.mxu0 0.0
  %4627 = vmatpush1.msra.mxu0 0.0
  %4628 = vmatprep.subr.mxu0 %v4586
  %4629 = vmatpush1.msra.mxu0 %v4585
  %4630 = vmatprep.subr.mxu0 0.0
  %4631 = vmatpush2.msra.mxu0 0.0
  %4632 = vmatprep.subr.mxu0 0.0
  %4633 = vmatpush2.msra.mxu0 0.0
  %4634 = vmatprep.subr.mxu0 0.0
  %4635 = vmatpush2.msra.mxu0 0.0
  %4636 = vmatprep.subr.mxu0 0.0
  %4637 = vmatpush2.msra.mxu0 0.0
  %4638 = vmatprep.subr.mxu0 0.0
  %4639 = vmatpush2.msra.mxu0 0.0
  %4640 = vmatprep.subr.mxu0 0.0
  %4641 = vmatpush2.msra.mxu0 0.0
  %4642 = vmatprep.subr.mxu0 0.0
  %4643 = vmatpush2.msra.mxu0 0.0
  %4644 = vmatprep.subr.mxu0 0.0
  %4645 = vmatpush2.msra.mxu0 0.0
  %4646 = vmatprep.subr.mxu0 0.0
  %4647 = vmatpush2.msra.mxu0 0.0
  %4648 = vmatprep.subr.mxu0 0.0
  %4649 = vmatpush2.msra.mxu0 0.0
  %4650 = vmatprep.subr.mxu0 0.0
  %4651 = vmatpush2.msra.mxu0 0.0
  %4652 = vmatprep.subr.mxu0 0.0
  %4653 = vmatpush2.msra.mxu0 0.0
  %4654 = vmatprep.subr.mxu0 0.0
  %4655 = vmatpush2.msra.mxu0 0.0
  %4656 = vmatprep.subr.mxu0 0.0
  %4657 = vmatpush2.msra.mxu0 0.0
  %4658 = vmatprep.subr.mxu0 0.0
  %4659 = vmatpush2.msra.mxu0 0.0
  %4660 = vmatprep.subr.mxu0 0.0
  %4661 = vmatpush2.msra.mxu0 0.0
  %4662 = vmatprep.mubr.f32.mxu0 0.0
  %4663 = vmatmul.mubr.f32.gmra.mxu0 %v4596
  %v4664 = vpop.f32.mrf.mxu0
  %v4665 = vadd.f32 0.0, %v4664
  %v4666 = vpop.f32.mrf.mxu0
  %v4667 = vadd.f32 0.0, %v4666
  %4668 = vdwg.mxu0
  %4669 = vmatprep.subr.mxu0 0.0
  %4670 = vmatpush1.msra.mxu0 0.0
  %4671 = vmatprep.subr.mxu0 0.0
  %4672 = vmatpush1.msra.mxu0 0.0
  %4673 = vmatprep.subr.mxu0 0.0
  %4674 = vmatpush1.msra.mxu0 0.0
  %4675 = vmatprep.subr.mxu0 0.0
  %4676 = vmatpush1.msra.mxu0 0.0
  %4677 = vmatprep.subr.mxu0 0.0
  %4678 = vmatpush1.msra.mxu0 0.0
  %4679 = vmatprep.subr.mxu0 0.0
  %4680 = vmatpush1.msra.mxu0 0.0
  %4681 = vmatprep.subr.mxu0 0.0
  %4682 = vmatpush1.msra.mxu0 0.0
  %4683 = vmatprep.subr.mxu0 0.0
  %4684 = vmatpush1.msra.mxu0 0.0
  %4685 = vmatprep.subr.mxu0 0.0
  %4686 = vmatpush1.msra.mxu0 0.0
  %4687 = vmatprep.subr.mxu0 0.0
  %4688 = vmatpush1.msra.mxu0 0.0
  %4689 = vmatprep.subr.mxu0 0.0
  %4690 = vmatpush1.msra.mxu0 0.0
  %4691 = vmatprep.subr.mxu0 0.0
  %4692 = vmatpush1.msra.mxu0 0.0
  %4693 = vmatprep.subr.mxu0 0.0
  %4694 = vmatpush1.msra.mxu0 0.0
  %4695 = vmatprep.subr.mxu0 0.0
  %4696 = vmatpush1.msra.mxu0 0.0
  %4697 = vmatprep.subr.mxu0 0.0
  %4698 = vmatpush1.msra.mxu0 0.0
  %4699 = vmatprep.subr.mxu0 %v4588
  %4700 = vmatpush1.msra.mxu0 %v4587
  %4701 = vmatprep.subr.mxu0 0.0
  %4702 = vmatpush2.msra.mxu0 0.0
  %4703 = vmatprep.subr.mxu0 0.0
  %4704 = vmatpush2.msra.mxu0 0.0
  %4705 = vmatprep.subr.mxu0 0.0
  %4706 = vmatpush2.msra.mxu0 0.0
  %4707 = vmatprep.subr.mxu0 0.0
  %4708 = vmatpush2.msra.mxu0 0.0
  %4709 = vmatprep.subr.mxu0 0.0
  %4710 = vmatpush2.msra.mxu0 0.0
  %4711 = vmatprep.subr.mxu0 0.0
  %4712 = vmatpush2.msra.mxu0 0.0
  %4713 = vmatprep.subr.mxu0 0.0
  %4714 = vmatpush2.msra.mxu0 0.0
  %4715 = vmatprep.subr.mxu0 0.0
  %4716 = vmatpush2.msra.mxu0 0.0
  %4717 = vmatprep.subr.mxu0 0.0
  %4718 = vmatpush2.msra.mxu0 0.0
  %4719 = vmatprep.subr.mxu0 0.0
  %4720 = vmatpush2.msra.mxu0 0.0
  %4721 = vmatprep.subr.mxu0 0.0
  %4722 = vmatpush2.msra.mxu0 0.0
  %4723 = vmatprep.subr.mxu0 0.0
  %4724 = vmatpush2.msra.mxu0 0.0
  %4725 = vmatprep.subr.mxu0 0.0
  %4726 = vmatpush2.msra.mxu0 0.0
  %4727 = vmatprep.subr.mxu0 0.0
  %4728 = vmatpush2.msra.mxu0 0.0
  %4729 = vmatprep.subr.mxu0 0.0
  %4730 = vmatpush2.msra.mxu0 0.0
  %4731 = vmatprep.subr.mxu0 0.0
  %4732 = vmatpush2.msra.mxu0 0.0
  %4733 = vmatprep.mubr.f32.mxu0 0.0
  %4734 = vmatmul.mubr.f32.gmra.mxu0 %v4596
  %v4735 = vpop.f32.mrf.mxu0
  %v4736 = vadd.f32 0.0, %v4735
  %v4737 = vpop.f32.mrf.mxu0
  %v4738 = vadd.f32 0.0, %v4737
  %4739 = vdwg.mxu0
  %4740 = vmatprep.subr.mxu0 0.0
  %4741 = vmatpush1.msra.mxu0 0.0
  %4742 = vmatprep.subr.mxu0 0.0
  %4743 = vmatpush1.msra.mxu0 0.0
  %4744 = vmatprep.subr.mxu0 0.0
  %4745 = vmatpush1.msra.mxu0 0.0
  %4746 = vmatprep.subr.mxu0 0.0
  %4747 = vmatpush1.msra.mxu0 0.0
  %4748 = vmatprep.subr.mxu0 0.0
  %4749 = vmatpush1.msra.mxu0 0.0
  %4750 = vmatprep.subr.mxu0 0.0
  %4751 = vmatpush1.msra.mxu0 0.0
  %4752 = vmatprep.subr.mxu0 0.0
  %4753 = vmatpush1.msra.mxu0 0.0
  %4754 = vmatprep.subr.mxu0 0.0
  %4755 = vmatpush1.msra.mxu0 0.0
  %4756 = vmatprep.subr.mxu0 0.0
  %4757 = vmatpush1.msra.mxu0 0.0
  %4758 = vmatprep.subr.mxu0 0.0
  %4759 = vmatpush1.msra.mxu0 0.0
  %4760 = vmatprep.subr.mxu0 0.0
  %4761 = vmatpush1.msra.mxu0 0.0
  %4762 = vmatprep.subr.mxu0 0.0
  %4763 = vmatpush1.msra.mxu0 0.0
  %4764 = vmatprep.subr.mxu0 0.0
  %4765 = vmatpush1.msra.mxu0 0.0
  %4766 = vmatprep.subr.mxu0 0.0
  %4767 = vmatpush1.msra.mxu0 0.0
  %4768 = vmatprep.subr.mxu0 0.0
  %4769 = vmatpush1.msra.mxu0 0.0
  %4770 = vmatprep.subr.mxu0 %v4584
  %4771 = vmatpush1.msra.mxu0 %v4589
  %4772 = vmatprep.subr.mxu0 0.0
  %4773 = vmatpush2.msra.mxu0 0.0
  %4774 = vmatprep.subr.mxu0 0.0
  %4775 = vmatpush2.msra.mxu0 0.0
  %4776 = vmatprep.subr.mxu0 0.0
  %4777 = vmatpush2.msra.mxu0 0.0
  %4778 = vmatprep.subr.mxu0 0.0
  %4779 = vmatpush2.msra.mxu0 0.0
  %4780 = vmatprep.subr.mxu0 0.0
  %4781 = vmatpush2.msra.mxu0 0.0
  %4782 = vmatprep.subr.mxu0 0.0
  %4783 = vmatpush2.msra.mxu0 0.0
  %4784 = vmatprep.subr.mxu0 0.0
  %4785 = vmatpush2.msra.mxu0 0.0
  %4786 = vmatprep.subr.mxu0 0.0
  %4787 = vmatpush2.msra.mxu0 0.0
  %4788 = vmatprep.subr.mxu0 0.0
  %4789 = vmatpush2.msra.mxu0 0.0
  %4790 = vmatprep.subr.mxu0 0.0
  %4791 = vmatpush2.msra.mxu0 0.0
  %4792 = vmatprep.subr.mxu0 0.0
  %4793 = vmatpush2.msra.mxu0 0.0
  %4794 = vmatprep.subr.mxu0 0.0
  %4795 = vmatpush2.msra.mxu0 0.0
  %4796 = vmatprep.subr.mxu0 0.0
  %4797 = vmatpush2.msra.mxu0 0.0
  %4798 = vmatprep.subr.mxu0 0.0
  %4799 = vmatpush2.msra.mxu0 0.0
  %4800 = vmatprep.subr.mxu0 0.0
  %4801 = vmatpush2.msra.mxu0 0.0
  %4802 = vmatprep.subr.mxu0 0.0
  %4803 = vmatpush2.msra.mxu0 0.0
  %4804 = vmatprep.mubr.f32.mxu0 0.0
  %4805 = vmatmul.mubr.f32.gmra.mxu0 %v4596
  %v4806 = vpop.f32.mrf.mxu0
  %v4807 = vadd.f32 0.0, %v4806
  %v4808 = vpop.f32.mrf.mxu0
  %v4809 = vadd.f32 0.0, %v4808
  %4810 = vdwg.mxu0
  %v4811 = vadd.f32 %v4565, %v4665
  %v4812 = vadd.f32 %v4566, %v4667
  %v4813 = vadd.f32 %v4567, %v4736
  %v4814 = vadd.f32 %v4568, %v4738
  %v4815 = vadd.f32 %v4569, %v4807
  %v4816 = vadd.f32 %v4570, %v4809
  %v4817 = vmul.f32 %v4811, %v2491
  %v4818 = vmul.f32 %v4812, %v2495
  %v4819 = vmul.f32 %v4813, %v2499
  %v4820 = vmul.f32 %v4814, %v2503
  %v4821 = vmul.f32 %v4815, %v2507
  %v4822 = vmul.f32 %v4816, %v2511
  %v4823 = vadd.f32 %v4817, %v4818
  %v4824 = vadd.f32 %v4823, %v4819
  %v4825 = vadd.f32 %v4824, %v4820
  %v4826 = vadd.f32 %v4825, %v4821
  %v4827 = vsel %vm36, %v4822, 0.0
  %v4828 = vadd.f32 %v4826, %v4827
  %4829 = vadd.xlane.f32.xlu0 %v4828
  %v4830 = vpop.xlane.xlu0 %4829
  %v4831 = vmul.f32 %v4830, 0.001953125
  %v4832 = vsub.f32 %v4811, %v4831
  %v4833 = vsub.f32 %v4812, %v4831
  %v4834 = vsub.f32 %v4813, %v4831
  %v4835 = vsub.f32 %v4814, %v4831
  %v4836 = vsub.f32 %v4815, %v4831
  %v4837 = vsub.f32 %v4816, %v4831
  %v4838 = vmul.f32 %v4832, %v4832
  %v4839 = vmul.f32 %v4833, %v4833
  %v4840 = vmul.f32 %v4834, %v4834
  %v4841 = vmul.f32 %v4835, %v4835
  %v4842 = vmul.f32 %v4836, %v4836
  %v4843 = vmul.f32 %v4837, %v4837
  %v4844 = vmul.f32 %v4838, %v2491
  %v4845 = vmul.f32 %v4839, %v2495
  %v4846 = vmul.f32 %v4840, %v2499
  %v4847 = vmul.f32 %v4841, %v2503
  %v4848 = vmul.f32 %v4842, %v2507
  %v4849 = vmul.f32 %v4843, %v2511
  %v4850 = vadd.f32 %v4844, %v4845
  %v4851 = vadd.f32 %v4850, %v4846
  %v4852 = vadd.f32 %v4851, %v4847
  %v4853 = vadd.f32 %v4852, %v4848
  %v4854 = vsel %vm36, %v4849, 0.0
  %v4855 = vadd.f32 %v4853, %v4854
  %4856 = vadd.xlane.f32.xlu0 %v4855
  %v4857 = vpop.xlane.xlu0 %4856
  %v4858 = vmul.f32 %v4857, 0.001953125
  %v4859 = vld [vmem:[%s6] sm:$0xff]
  %v4860 = vadd.f32 %v4858, 1e-05
  %v4861 = vrsqrt.pop %v4860
  %v4862 = vmul.f32 %v4859, %v4861
  %4864 = vset.pattern.permute.xlu0 0
  %4865 = vperm.xlu0 %4864, %v4862
  %v4866 = vpop.permute.xlu0 %4865
  %v4868 = vmul.f32 %v4832, %v4866
  %v4869 = vmul.f32 %v4833, %v4866
  %v4870 = vmul.f32 %v4834, %v4866
  %v4871 = vmul.f32 %v4835, %v4866
  %v4872 = vmul.f32 %v4836, %v4866
  %v4873 = vmul.f32 %v4837, %v4866
  %v4874 = vld [vmem:[%s7] sm:$0xff]
  %4876 = vset.pattern.permute.xlu0 0
  %4877 = vperm.xlu0 %4876, %v4874
  %v4878 = vpop.permute.xlu0 %4877
  %v4880 = vadd.f32 %v4868, %v4878
  %v4881 = vadd.f32 %v4869, %v4878
  %v4882 = vadd.f32 %v4870, %v4878
  %v4883 = vadd.f32 %v4871, %v4878
  %v4884 = vadd.f32 %v4872, %v4878
  %v4885 = vadd.f32 %v4873, %v4878
  %v4886 = vld [vmem:[#allocation2 + $0x8] sm:$0xff]
  %v4887 = vld [vmem:[#allocation2 + $0x10] sm:$0xff]
  %v4888 = vld [vmem:[#allocation2 + $0x18] sm:$0xff]
  %v4889 = vld [vmem:[#allocation2 + $0x20] sm:$0xff]
  %v4890 = vld [vmem:[#allocation2 + $0x28] sm:$0xff]
  %v4891 = vld [vmem:[#allocation2 + $0x30] sm:$0xff]
  %v4892 = vadd.f32 %v4886, %v4880
  %v4893 = vadd.f32 %v4887, %v4881
  %v4894 = vadd.f32 %v4888, %v4882
  %v4895 = vadd.f32 %v4889, %v4883
  %v4896 = vadd.f32 %v4890, %v4884
  %v4897 = vadd.f32 %v4891, %v4885
  %v4898 = vmax.f32 %v4892, 0.0
  %v4899 = vmax.f32 %v4893, 0.0
  %v4900 = vmax.f32 %v4894, 0.0
  %v4901 = vmax.f32 %v4895, 0.0
  %v4902 = vmax.f32 %v4896, 0.0
  %v4903 = vmax.f32 %v4897, 0.0
  %4904 = vst [vmem:[%s8] sm:$0xff] %v4898
  %4905 = vst [vmem:[%s8 + $0x8] sm:$0xff] %v4899
  %4906 = vst [vmem:[%s8 + $0x10] sm:$0xff] %v4900
  %4907 = vst [vmem:[%s8 + $0x18] sm:$0xff] %v4901
  %4908 = vst [vmem:[%s8 + $0x20] sm:$0xff] %v4902
  %4909 = vst.msk [vmem:[%s8 + $0x28] sm:$0xff] %vm36, %v4903
  // Predicated region
  $region34: #{residual_block.1} parent=0 // pred_check
    _
  $region35: #{residual_block.1} parent=0 // pred_check_branch
    %4911 = sbr.rel (0) target = $region37
  $region36: #{residual_block.1} parent=0 // pred_region
    _
  $region37: #{residual_block.1} parent=0 // pred_fallthru
    _
  // Predicated region
  $region38: #{residual_block.1} parent=0 // pred_check
    _
  $region39: #{residual_block.1} parent=0 // pred_check_branch
    %4913 = sbr.rel (0) target = $region41
  $region40: #{residual_block.1} parent=0 // pred_region
    _
  $region41: #{residual_block.1} parent=0 // pred_fallthru
    _

</llo_original>
